<compile_context>
chip_gen: v7x
topology: tpu7x:2x2x1
jax: 0.10.0
libtpu: 0.0.40
codegen_flags: <defaults>
</compile_context>

<pallas_src>
import jax
import jax.numpy as jnp
from jax import lax
from jax.experimental import pallas as pl
from jax.experimental.pallas import tpu as pltpu

# ----------------------- small synthetic configuration -----------------------
B = 2                 # batch
C = 3                 # image channels (RGB, as CLIP expects)
IMG = 16              # image spatial size
PATCH = 8             # patch size
GRID = IMG // PATCH
NPATCH = GRID * GRID          # 4 patches
TOKENS = NPATCH + 1           # +1 class token = 5
T_PAD = 8                     # tokens padded to a sublane multiple
M_PAD = B * T_PAD             # 16 rows in the padded residual stream
WIDTH = 128                   # transformer width (lane-dense stand-in for 768/1024)
HEADS = 4
HEAD_DIM = WIDTH // HEADS     # 32
LAYERS = 2
MLP_HIDDEN = 4 * WIDTH        # 512
EMBED = 128                   # CLIP embed dim (stand-in for CHANNELS[name])
NUM_CLASSES = 256             # matches nn.Linear(..., num_classes=256)
CPP = C * PATCH * PATCH       # 192 = flattened patch length
CPP_PAD = 256                 # padded so the stem contraction is MXU-clean
ATTN_SCALE = 1.0 / (HEAD_DIM ** 0.5)
NEG_INF = -1e30

# -------------------------------- kernel helpers ------------------------------

def _layernorm(x, g, b):
    # f32 statistics (safe on v5e too)
    mu = jnp.mean(x, axis=-1, keepdims=True)
    xc = x - mu
    var = jnp.mean(xc * xc, axis=-1, keepdims=True)
    return xc * lax.rsqrt(var + 1e-5) * g + b


def _bf16(x):
    return x.astype(jnp.bfloat16)


def _dot(a, b):
    return jnp.dot(_bf16(a), b, preferred_element_type=jnp.float32)


# ------------------------------ fused Pallas kernel ----------------------------

def _clip_kernel(patches_ref, conv_w_ref, tok_bias_ref, kmask_ref,
                 lnp_g_ref, lnp_b_ref,
                 ln1_g_ref, ln1_b_ref, attn_w_ref, attn_b_ref,
                 out_w_ref, out_b_ref,
                 ln2_g_ref, ln2_b_ref, mlp_w1_ref, mlp_b1_ref,
                 mlp_w2_ref, mlp_b2_ref,
                 lnpost_g_ref, lnpost_b_ref, proj_ref, fcw_ref, fcb_ref,
                 feat_ref, out_ref,
                 h_ref):
    """One ResidualAttentionBlock per grid step; stem fused into l==0 and the
    classification head fused into l==LAYERS-1.  The residual stream h lives in
    a VMEM scratch across all layers and never touches HBM."""
    l = pl.program_id(0)

    # ---- layer 0: patch-embed matmul + class/pos bias + ln_pre (fused stem) ----
    @pl.when(l == 0)
    def _init():
        emb = jnp.dot(patches_ref[...], conv_w_ref[...],      # bf16 x bf16 -> f32
                      preferred_element_type=jnp.float32)
        tok = emb + tok_bias_ref[...]                          # class emb + pos emb
        h_ref[...] = _layernorm(tok, lnp_g_ref[...], lnp_b_ref[...])

    h = h_ref[...]                                             # (M_PAD, WIDTH) f32
    kmask = kmask_ref[...]                                     # (B, T_PAD, T_PAD), hoisted

    # ---- attention sub-block:  h += out_proj(MHA(ln1(h))) ----
    hn = _layernorm(h, ln1_g_ref[0], ln1_b_ref[0])
    qkv = _dot(hn, attn_w_ref[0]) + attn_b_ref[0]
    q = qkv[:, 0 * WIDTH:1 * WIDTH].reshape(B, T_PAD, WIDTH)
    k = qkv[:, 1 * WIDTH:2 * WIDTH].reshape(B, T_PAD, WIDTH)
    v = qkv[:, 2 * WIDTH:3 * WIDTH].reshape(B, T_PAD, WIDTH)

    # TODO(synk): at real sizes batch heads into the dot_general batch dims
    # ((B, HEADS)) instead of this 4-way static unroll.
    head_outs = []
    for hd in range(HEADS):
        sl = slice(hd * HEAD_DIM, (hd + 1) * HEAD_DIM)
        qh, kh, vh = q[:, :, sl], k[:, :, sl], v[:, :, sl]
        # batched dot, contraction on the last axis (no explicit k.T transpose)
        s = lax.dot_general(
            _bf16(qh), _bf16(kh), (((2,), (2,)), ((0,), (0,))),
            preferred_element_type=jnp.float32) * ATTN_SCALE + kmask
        m = jnp.max(s, axis=-1, keepdims=True)
        p = jnp.exp(s - m)
        p = p * pl.reciprocal(jnp.sum(p, axis=-1, keepdims=True), approx=True)
        head_outs.append(lax.dot_general(
            _bf16(p), _bf16(vh), (((2,), (1,)), ((0,), (0,))),
            preferred_element_type=jnp.float32))
    attn = jnp.concatenate(head_outs, axis=-1).reshape(M_PAD, WIDTH)

    # out-proj with fused residual add
    h = h + _dot(attn, out_w_ref[0]) + out_b_ref[0]

    # ---- MLP sub-block:  h += w2(QuickGELU(w1(ln2(h)))) ----
    hn = _layernorm(h, ln2_g_ref[0], ln2_b_ref[0])
    y = _dot(hn, mlp_w1_ref[0]) + mlp_b1_ref[0]
    y = y * jax.nn.sigmoid(1.702 * y)                          # QuickGELU (f32, CLIP)
    h = h + _dot(y, mlp_w2_ref[0]) + mlp_b2_ref[0]

    h_ref[...] = h

    # ---- last layer: fused head  (class token -> ln_post -> proj -> fc) ----
    @pl.when(l == LAYERS - 1)
    def _head():
        cls = h_ref[pl.ds(0, B, stride=T_PAD), :]              # class row of each batch
        xn = _layernorm(cls, lnpost_g_ref[...], lnpost_b_ref[...])
        feat = _dot(xn, proj_ref[...])                         # visual.proj (no bias)
        feat_ref[...] = feat
        out_ref[...] = _dot(feat, fcw_ref[...]) + fcb_ref[...]  # self.fc


# ------------------------------ kernel wrapper --------------------------------

def pallas_clip(patches, params):
    def shared(shape):    # constant block index -> loaded once, stays VMEM-resident
        return pl.BlockSpec(shape, lambda l: (0,) * len(shape))

    def stacked(shape):   # per-layer weight, streamed (double-buffered) along the grid
        return pl.BlockSpec((1,) + shape, lambda l: (l,) + (0,) * len(shape))

    return pl.pallas_call(
        _clip_kernel,
        out_shape=(jax.ShapeDtypeStruct((B, EMBED), jnp.float32),
                   jax.ShapeDtypeStruct((B, NUM_CLASSES), jnp.float32)),
        grid=(LAYERS,),
        in_specs=[
            shared((M_PAD, CPP_PAD)),                                 # patches (bf16)
            shared((CPP_PAD, WIDTH)),                                 # conv1 weight
            shared((M_PAD, WIDTH)),                                   # class+pos bias
            shared((B, T_PAD, T_PAD)),                                # key-pad mask
            shared((1, WIDTH)), shared((1, WIDTH)),                   # ln_pre g,b
            stacked((1, WIDTH)), stacked((1, WIDTH)),                 # ln1 g,b
            stacked((WIDTH, 3 * WIDTH)), stacked((1, 3 * WIDTH)),     # in_proj w,b
            stacked((WIDTH, WIDTH)), stacked((1, WIDTH)),             # out_proj w,b
            stacked((1, WIDTH)), stacked((1, WIDTH)),                 # ln2 g,b
            stacked((WIDTH, MLP_HIDDEN)), stacked((1, MLP_HIDDEN)),   # mlp w1,b1
            stacked((MLP_HIDDEN, WIDTH)), stacked((1, WIDTH)),        # mlp w2,b2
            shared((1, WIDTH)), shared((1, WIDTH)),                   # ln_post g,b
            shared((WIDTH, EMBED)),                                   # visual.proj
            shared((EMBED, NUM_CLASSES)), shared((1, NUM_CLASSES)),   # fc w,b
        ],
        out_specs=[pl.BlockSpec((B, EMBED), lambda l: (0, 0)),
                   pl.BlockSpec((B, NUM_CLASSES), lambda l: (0, 0))],
        scratch_shapes=[pltpu.VMEM((M_PAD, WIDTH), jnp.float32)],     # residual stream
        compiler_params=pltpu.CompilerParams(
            dimension_semantics=("arbitrary",)),   # sequential across layers
        # TODO(synk): at real CLIP sizes add a leading "parallel" batch/query-tile
        # axis (v7x 2 TCs), K-tile the MLP/attn weights and set vmem_limit_bytes.
    )(patches,
      params["conv_w"], params["tok_bias"], params["kmask"],
      params["ln_pre_g"], params["ln_pre_b"],
      params["ln1_g"], params["ln1_b"],
      params["attn_w"], params["attn_b"],
      params["out_w"], params["out_b"],
      params["ln2_g"], params["ln2_b"],
      params["mlp_w1"], params["mlp_b1"],
      params["mlp_w2"], params["mlp_b2"],
      params["ln_post_g"], params["ln_post_b"],
      params["proj"], params["fc_w"], params["fc_b"])


# ------------------------------ parameter init ---------------------------------

def init_params(key):
    ks = iter(jax.random.split(key, 16))

    def nrm(shape, dtype=jnp.bfloat16, scale=0.02):
        return (scale * jax.random.normal(next(ks), shape,
                                          dtype=jnp.float32)).astype(dtype)

    # conv1 weight pre-flattened to (C*P*P, WIDTH), K padded 192 -> 256 with zeros
    conv_w = jnp.zeros((CPP_PAD, WIDTH), jnp.bfloat16).at[:CPP].set(nrm((CPP, WIDTH)))

    # class embedding + positional embedding folded into one token-bias slab
    # (row 0 of each batch = class emb + pos[0], rows 1..NPATCH = pos, pad rows = 0)
    class_emb = nrm((WIDTH,), dtype=jnp.float32)
    pos_emb = nrm((TOKENS, WIDTH), dtype=jnp.float32)
    tb = (jnp.zeros((T_PAD, WIDTH), jnp.float32)
          .at[:TOKENS].set(pos_emb)
          .at[0].add(class_emb))
    tok_bias = jnp.tile(tb, (B, 1))                            # (M_PAD, WIDTH)

    # additive key-padding mask, hoisted out of the per-layer body
    kmask = jnp.where(jnp.arange(T_PAD) < TOKENS, 0.0, NEG_INF).astype(jnp.float32)
    kmask = jnp.tile(kmask[None, None, :], (B, T_PAD, 1))      # (B, T_PAD, T_PAD)

    return {
        "conv_w": conv_w,
        "tok_bias": tok_bias,
        "kmask": kmask,
        "ln_pre_g": jnp.ones((1, WIDTH), jnp.float32),
        "ln_pre_b": jnp.zeros((1, WIDTH), jnp.float32),
        "ln_post_g": jnp.ones((1, WIDTH), jnp.float32),
        "ln_post_b": jnp.zeros((1, WIDTH), jnp.float32),
        "proj": nrm((WIDTH, EMBED)),                           # visual.proj (no bias)
        "fc_w": nrm((EMBED, NUM_CLASSES)),                     # self.fc
        "fc_b": jnp.zeros((1, NUM_CLASSES), jnp.float32),
        # per-layer weights stacked on a leading LAYERS axis (kernel grid axis)
        "ln1_g": jnp.ones((LAYERS, 1, WIDTH), jnp.float32),
        "ln1_b": jnp.zeros((LAYERS, 1, WIDTH), jnp.float32),
        "attn_w": nrm((LAYERS, WIDTH, 3 * WIDTH)),
        "attn_b": jnp.zeros((LAYERS, 1, 3 * WIDTH), jnp.float32),
        "out_w": nrm((LAYERS, WIDTH, WIDTH)),
        "out_b": jnp.zeros((LAYERS, 1, WIDTH), jnp.float32),
        "ln2_g": jnp.ones((LAYERS, 1, WIDTH), jnp.float32),
        "ln2_b": jnp.zeros((LAYERS, 1, WIDTH), jnp.float32),
        "mlp_w1": nrm((LAYERS, WIDTH, MLP_HIDDEN)),
        "mlp_b1": jnp.zeros((LAYERS, 1, MLP_HIDDEN), jnp.float32),
        "mlp_w2": nrm((LAYERS, MLP_HIDDEN, WIDTH)),
        "mlp_b2": jnp.zeros((LAYERS, 1, WIDTH), jnp.float32),
    }


# -------------------------------- forward pass ----------------------------------

def clip_model_forward(params, x, return_feature=False):
    """x: (B, C, IMG, IMG) NCHW float32, matching the PyTorch module."""
    # layout plumbing only: non-overlapping patches -> token-row layout
    p = x.reshape(B, C, GRID, PATCH, GRID, PATCH)
    p = p.transpose(0, 2, 4, 1, 3, 5).reshape(B, NPATCH, CPP)
    # rows laid out as (class, patch_0..patch_3, pad, pad, pad) per batch;
    # K padded 192 -> 256; cast to bf16 on the host (halves stem input DMA)
    p = jnp.pad(p, ((0, 0), (1, T_PAD - TOKENS), (0, CPP_PAD - CPP)))
    patches = p.reshape(M_PAD, CPP_PAD).astype(jnp.bfloat16)

    # whole model (stem + transformer + ln_post + proj + fc) — ONE Pallas kernel
    features, out = pallas_clip(patches, params)
    if return_feature:
        return features
    return out


# ------------------------------------ main --------------------------------------

if __name__ == "__main__":
    key = jax.random.PRNGKey(0)
    k_param, k_x = jax.random.split(key)
    params = init_params(k_param)
    # TODO(synk): CLIP's pretrained weights and torchvision-style preprocessing
    # (resize / center-crop / normalize) have no Pallas equivalent; synthetic
    # weights and raw tensors are used instead.
    x = jax.random.normal(k_x, (B, C, IMG, IMG), dtype=jnp.float32)

    fwd = jax.jit(clip_model_forward)
    out = jax.block_until_ready(fwd(params, x))
    assert out.shape == (B, NUM_CLASSES), out.shape
    assert bool(jnp.all(jnp.isfinite(out)))
    print("KERNEL_OK")
</pallas_src>

<mosaic_0001>
module attributes {stable_mosaic.version = 11 : i64} {
  func.func @_clip_kernel(%arg0: i32, %arg1: memref<16x256xbf16, #tpu.memory_space<vmem>>, %arg2: memref<256x128xbf16, #tpu.memory_space<vmem>>, %arg3: memref<16x128xf32, #tpu.memory_space<vmem>>, %arg4: memref<2x8x8xf32, #tpu.memory_space<vmem>>, %arg5: memref<1x128xf32, #tpu.memory_space<vmem>>, %arg6: memref<1x128xf32, #tpu.memory_space<vmem>>, %arg7: memref<1x1x128xf32, #tpu.memory_space<vmem>>, %arg8: memref<1x1x128xf32, #tpu.memory_space<vmem>>, %arg9: memref<1x128x384xbf16, #tpu.memory_space<vmem>>, %arg10: memref<1x1x384xf32, #tpu.memory_space<vmem>>, %arg11: memref<1x128x128xbf16, #tpu.memory_space<vmem>>, %arg12: memref<1x1x128xf32, #tpu.memory_space<vmem>>, %arg13: memref<1x1x128xf32, #tpu.memory_space<vmem>>, %arg14: memref<1x1x128xf32, #tpu.memory_space<vmem>>, %arg15: memref<1x128x512xbf16, #tpu.memory_space<vmem>>, %arg16: memref<1x1x512xf32, #tpu.memory_space<vmem>>, %arg17: memref<1x512x128xbf16, #tpu.memory_space<vmem>>, %arg18: memref<1x1x128xf32, #tpu.memory_space<vmem>>, %arg19: memref<1x128xf32, #tpu.memory_space<vmem>>, %arg20: memref<1x128xf32, #tpu.memory_space<vmem>>, %arg21: memref<128x128xbf16, #tpu.memory_space<vmem>>, %arg22: memref<128x256xbf16, #tpu.memory_space<vmem>>, %arg23: memref<1x256xf32, #tpu.memory_space<vmem>>, %arg24: memref<2x128xf32, #tpu.memory_space<vmem>>, %arg25: memref<2x256xf32, #tpu.memory_space<vmem>>, %arg26: memref<16x128xf32, #tpu.memory_space<vmem>>) attributes {dimension_semantics = [#tpu.dimension_semantics<arbitrary>], iteration_bounds = array<i64: 2>, scalar_prefetch = 0 : i64, scratch_operands = 1 : i64, tpu.core_type = #tpu.core_type<tc>, window_params = [{pipeline_mode = #tpu.pipeline_mode<synchronous>, transform_indices = @transform_0, window_bounds = array<i64: 16, 256>}, {pipeline_mode = #tpu.pipeline_mode<synchronous>, transform_indices = @transform_1, window_bounds = array<i64: 256, 128>}, {pipeline_mode = #tpu.pipeline_mode<synchronous>, transform_indices = @transform_2, window_bounds = array<i64: 16, 128>}, {pipeline_mode = #tpu.pipeline_mode<synchronous>, transform_indices = @transform_3, window_bounds = array<i64: 2, 8, 8>}, {pipeline_mode = #tpu.pipeline_mode<synchronous>, transform_indices = @transform_4, window_bounds = array<i64: 1, 128>}, {pipeline_mode = #tpu.pipeline_mode<synchronous>, transform_indices = @transform_5, window_bounds = array<i64: 1, 128>}, {transform_indices = @transform_6, window_bounds = array<i64: 1, 1, 128>}, {transform_indices = @transform_7, window_bounds = array<i64: 1, 1, 128>}, {transform_indices = @transform_8, window_bounds = array<i64: 1, 128, 384>}, {transform_indices = @transform_9, window_bounds = array<i64: 1, 1, 384>}, {transform_indices = @transform_10, window_bounds = array<i64: 1, 128, 128>}, {transform_indices = @transform_11, window_bounds = array<i64: 1, 1, 128>}, {transform_indices = @transform_12, window_bounds = array<i64: 1, 1, 128>}, {transform_indices = @transform_13, window_bounds = array<i64: 1, 1, 128>}, {transform_indices = @transform_14, window_bounds = array<i64: 1, 128, 512>}, {transform_indices = @transform_15, window_bounds = array<i64: 1, 1, 512>}, {transform_indices = @transform_16, window_bounds = array<i64: 1, 512, 128>}, {transform_indices = @transform_17, window_bounds = array<i64: 1, 1, 128>}, {pipeline_mode = #tpu.pipeline_mode<synchronous>, transform_indices = @transform_18, window_bounds = array<i64: 1, 128>}, {pipeline_mode = #tpu.pipeline_mode<synchronous>, transform_indices = @transform_19, window_bounds = array<i64: 1, 128>}, {pipeline_mode = #tpu.pipeline_mode<synchronous>, transform_indices = @transform_20, window_bounds = array<i64: 128, 128>}, {pipeline_mode = #tpu.pipeline_mode<synchronous>, transform_indices = @transform_21, window_bounds = array<i64: 128, 256>}, {pipeline_mode = #tpu.pipeline_mode<synchronous>, transform_indices = @transform_22, window_bounds = array<i64: 1, 256>}, {pipeline_mode = #tpu.pipeline_mode<synchronous>, transform_indices = @transform_23, window_bounds = array<i64: 2, 128>}, {pipeline_mode = #tpu.pipeline_mode<synchronous>, transform_indices = @transform_24, window_bounds = array<i64: 2, 256>}]} {
    %c0_i32 = arith.constant 0 : i32
    %0 = arith.cmpi eq, %arg0, %c0_i32 : i32
    %1 = arith.extui %0 : i1 to i32
    %c0_i32_0 = arith.constant 0 : i32
    %2 = arith.cmpi ne, %1, %c0_i32_0 : i32
    scf.if %2 {
      %c0_79 = arith.constant 0 : index
      %c0_80 = arith.constant 0 : index
      %195 = vector.load %arg1[%c0_79, %c0_80] : memref<16x256xbf16, #tpu.memory_space<vmem>>, vector<16x256xbf16>
      %c0_81 = arith.constant 0 : index
      %c0_82 = arith.constant 0 : index
      %196 = vector.load %arg2[%c0_81, %c0_82] : memref<256x128xbf16, #tpu.memory_space<vmem>>, vector<256x128xbf16>
      %cst_83 = arith.constant dense<0.000000e+00> : vector<16x128xf32>
      %197 = tpu.matmul %195, %196, %cst_83 {dimension_numbers = #tpu.dot_dimension_numbers<[1], [0], [0], [1], [0, 0, 1, 1], [], []>} : vector<16x256xbf16>, vector<256x128xbf16>, vector<16x128xf32> -> vector<16x128xf32>
      %c0_84 = arith.constant 0 : index
      %c0_85 = arith.constant 0 : index
      %198 = vector.load %arg3[%c0_84, %c0_85] : memref<16x128xf32, #tpu.memory_space<vmem>>, vector<16x128xf32>
      %199 = arith.addf %197, %198 : vector<16x128xf32>
      %c0_86 = arith.constant 0 : index
      %c0_87 = arith.constant 0 : index
      %200 = vector.load %arg5[%c0_86, %c0_87] : memref<1x128xf32, #tpu.memory_space<vmem>>, vector<1x128xf32>
      %c0_88 = arith.constant 0 : index
      %c0_89 = arith.constant 0 : index
      %201 = vector.load %arg6[%c0_88, %c0_89] : memref<1x128xf32, #tpu.memory_space<vmem>>, vector<1x128xf32>
      %cst_90 = arith.constant dense<0.000000e+00> : vector<16xf32>
      %202 = vector.multi_reduction <add>, %199, %cst_90 [1] : vector<16x128xf32> to vector<16xf32>
      %203 = vector.shape_cast %202 : vector<16xf32> to vector<16x1xf32>
      %cst_91 = arith.constant 1.280000e+02 : f32
      %204 = vector.broadcast %cst_91 : f32 to vector<16x1xf32>
      %205 = arith.divf %203, %204 : vector<16x1xf32>
      %206 = vector.broadcast %205 : vector<16x1xf32> to vector<16x128xf32>
      %207 = arith.subf %199, %206 : vector<16x128xf32>
      %208 = arith.mulf %207, %207 : vector<16x128xf32>
      %cst_92 = arith.constant dense<0.000000e+00> : vector<16xf32>
      %209 = vector.multi_reduction <add>, %208, %cst_92 [1] : vector<16x128xf32> to vector<16xf32>
      %210 = vector.shape_cast %209 : vector<16xf32> to vector<16x1xf32>
      %cst_93 = arith.constant 1.280000e+02 : f32
      %211 = vector.broadcast %cst_93 : f32 to vector<16x1xf32>
      %212 = arith.divf %210, %211 : vector<16x1xf32>
      %cst_94 = arith.constant 9.99999974E-6 : f32
      %213 = vector.broadcast %cst_94 : f32 to vector<16x1xf32>
      %214 = arith.addf %212, %213 : vector<16x1xf32>
      %215 = math.rsqrt %214 : vector<16x1xf32>
      %216 = vector.broadcast %215 : vector<16x1xf32> to vector<16x128xf32>
      %217 = arith.mulf %207, %216 : vector<16x128xf32>
      %218 = vector.broadcast %200 : vector<1x128xf32> to vector<16x128xf32>
      %219 = arith.mulf %217, %218 : vector<16x128xf32>
      %220 = vector.broadcast %201 : vector<1x128xf32> to vector<16x128xf32>
      %221 = arith.addf %219, %220 : vector<16x128xf32>
      %c0_95 = arith.constant 0 : index
      %c0_96 = arith.constant 0 : index
      %222 = vector.load %arg26[%c0_95, %c0_96] : memref<16x128xf32, #tpu.memory_space<vmem>>, vector<16x128xf32>
      tpu.vector_store %arg26[%c0_95, %c0_96], %221 {strides = array<i32>} : memref<16x128xf32, #tpu.memory_space<vmem>>, vector<16x128xf32>,
    } else {
    }
    %c0 = arith.constant 0 : index
    %c0_1 = arith.constant 0 : index
    %3 = vector.load %arg26[%c0, %c0_1] : memref<16x128xf32, #tpu.memory_space<vmem>>, vector<16x128xf32>
    %c0_2 = arith.constant 0 : index
    %c0_3 = arith.constant 0 : index
    %c0_4 = arith.constant 0 : index
    %4 = vector.load %arg4[%c0_2, %c0_3, %c0_4] : memref<2x8x8xf32, #tpu.memory_space<vmem>>, vector<2x8x8xf32>
    %c0_5 = arith.constant 0 : index
    %c0_6 = arith.constant 0 : index
    %c0_7 = arith.constant 0 : index
    %5 = vector.load %arg7[%c0_5, %c0_6, %c0_7] : memref<1x1x128xf32, #tpu.memory_space<vmem>>, vector<1x1x128xf32>
    %6 = vector.shape_cast %5 : vector<1x1x128xf32> to vector<1x128xf32>
    %c0_8 = arith.constant 0 : index
    %c0_9 = arith.constant 0 : index
    %c0_10 = arith.constant 0 : index
    %7 = vector.load %arg8[%c0_8, %c0_9, %c0_10] : memref<1x1x128xf32, #tpu.memory_space<vmem>>, vector<1x1x128xf32>
    %8 = vector.shape_cast %7 : vector<1x1x128xf32> to vector<1x128xf32>
    %cst = arith.constant dense<0.000000e+00> : vector<16xf32>
    %9 = vector.multi_reduction <add>, %3, %cst [1] : vector<16x128xf32> to vector<16xf32>
    %10 = vector.shape_cast %9 : vector<16xf32> to vector<16x1xf32>
    %cst_11 = arith.constant 1.280000e+02 : f32
    %11 = vector.broadcast %cst_11 : f32 to vector<16x1xf32>
    %12 = arith.divf %10, %11 : vector<16x1xf32>
    %13 = vector.broadcast %12 : vector<16x1xf32> to vector<16x128xf32>
    %14 = arith.subf %3, %13 : vector<16x128xf32>
    %15 = arith.mulf %14, %14 : vector<16x128xf32>
    %cst_12 = arith.constant dense<0.000000e+00> : vector<16xf32>
    %16 = vector.multi_reduction <add>, %15, %cst_12 [1] : vector<16x128xf32> to vector<16xf32>
    %17 = vector.shape_cast %16 : vector<16xf32> to vector<16x1xf32>
    %cst_13 = arith.constant 1.280000e+02 : f32
    %18 = vector.broadcast %cst_13 : f32 to vector<16x1xf32>
    %19 = arith.divf %17, %18 : vector<16x1xf32>
    %cst_14 = arith.constant 9.99999974E-6 : f32
    %20 = vector.broadcast %cst_14 : f32 to vector<16x1xf32>
    %21 = arith.addf %19, %20 : vector<16x1xf32>
    %22 = math.rsqrt %21 : vector<16x1xf32>
    %23 = vector.broadcast %22 : vector<16x1xf32> to vector<16x128xf32>
    %24 = arith.mulf %14, %23 : vector<16x128xf32>
    %25 = vector.broadcast %6 : vector<1x128xf32> to vector<16x128xf32>
    %26 = arith.mulf %24, %25 : vector<16x128xf32>
    %27 = vector.broadcast %8 : vector<1x128xf32> to vector<16x128xf32>
    %28 = arith.addf %26, %27 : vector<16x128xf32>
    %c0_15 = arith.constant 0 : index
    %c0_16 = arith.constant 0 : index
    %c0_17 = arith.constant 0 : index
    %29 = vector.load %arg9[%c0_15, %c0_16, %c0_17] : memref<1x128x384xbf16, #tpu.memory_space<vmem>>, vector<1x128x384xbf16>
    %30 = vector.shape_cast %29 : vector<1x128x384xbf16> to vector<128x384xbf16>
    %31 = arith.truncf %28 : vector<16x128xf32> to vector<16x128xbf16>
    %cst_18 = arith.constant dense<0.000000e+00> : vector<16x384xf32>
    %32 = tpu.matmul %31, %30, %cst_18 {dimension_numbers = #tpu.dot_dimension_numbers<[1], [0], [0], [1], [0, 0, 1, 1], [], []>} : vector<16x128xbf16>, vector<128x384xbf16>, vector<16x384xf32> -> vector<16x384xf32>
    %c0_19 = arith.constant 0 : index
    %c0_20 = arith.constant 0 : index
    %c0_21 = arith.constant 0 : index
    %33 = vector.load %arg10[%c0_19, %c0_20, %c0_21] : memref<1x1x384xf32, #tpu.memory_space<vmem>>, vector<1x1x384xf32>
    %34 = vector.shape_cast %33 : vector<1x1x384xf32> to vector<1x384xf32>
    %35 = vector.broadcast %34 : vector<1x384xf32> to vector<16x384xf32>
    %36 = arith.addf %32, %35 : vector<16x384xf32>
    %37 = vector.extract_strided_slice %36 {offsets = [0, 0], sizes = [16, 128], strides = [1, 1]} : vector<16x384xf32> to vector<16x128xf32>
    %38 = vector.shape_cast %37 : vector<16x128xf32> to vector<2x8x128xf32>
    %39 = vector.extract_strided_slice %36 {offsets = [0, 128], sizes = [16, 128], strides = [1, 1]} : vector<16x384xf32> to vector<16x128xf32>
    %40 = vector.shape_cast %39 : vector<16x128xf32> to vector<2x8x128xf32>
    %41 = vector.extract_strided_slice %36 {offsets = [0, 256], sizes = [16, 128], strides = [1, 1]} : vector<16x384xf32> to vector<16x128xf32>
    %42 = vector.shape_cast %41 : vector<16x128xf32> to vector<2x8x128xf32>
    %43 = vector.extract_strided_slice %38 {offsets = [0, 0, 0], sizes = [2, 8, 32], strides = [1, 1, 1]} : vector<2x8x128xf32> to vector<2x8x32xf32>
    %44 = vector.extract_strided_slice %40 {offsets = [0, 0, 0], sizes = [2, 8, 32], strides = [1, 1, 1]} : vector<2x8x128xf32> to vector<2x8x32xf32>
    %45 = vector.extract_strided_slice %42 {offsets = [0, 0, 0], sizes = [2, 8, 32], strides = [1, 1, 1]} : vector<2x8x128xf32> to vector<2x8x32xf32>
    %46 = arith.truncf %43 : vector<2x8x32xf32> to vector<2x8x32xbf16>
    %47 = arith.truncf %44 : vector<2x8x32xf32> to vector<2x8x32xbf16>
    %cst_22 = arith.constant dense<0.000000e+00> : vector<2x8x8xf32>
    %48 = tpu.matmul %46, %47, %cst_22 {dimension_numbers = #tpu.dot_dimension_numbers<[2], [2], [1], [1], [0, 0, 0, 1, 1, 1], [0], [0]>} : vector<2x8x32xbf16>, vector<2x8x32xbf16>, vector<2x8x8xf32> -> vector<2x8x8xf32>
    %cst_23 = arith.constant 0.176776692 : f32
    %49 = vector.broadcast %cst_23 : f32 to vector<2x8x8xf32>
    %50 = arith.mulf %48, %49 : vector<2x8x8xf32>
    %51 = arith.addf %50, %4 : vector<2x8x8xf32>
    %cst_24 = arith.constant dense<0xFF800000> : vector<2x8xf32>
    %52 = vector.multi_reduction <maximumf>, %51, %cst_24 [2] : vector<2x8x8xf32> to vector<2x8xf32>
    %53 = vector.shape_cast %52 : vector<2x8xf32> to vector<2x8x1xf32>
    %54 = vector.broadcast %53 : vector<2x8x1xf32> to vector<2x8x8xf32>
    %55 = arith.subf %51, %54 : vector<2x8x8xf32>
    %56 = math.exp %55 : vector<2x8x8xf32>
    %cst_25 = arith.constant dense<0.000000e+00> : vector<2x8xf32>
    %57 = vector.multi_reduction <add>, %56, %cst_25 [2] : vector<2x8x8xf32> to vector<2x8xf32>
    %58 = vector.shape_cast %57 : vector<2x8xf32> to vector<2x8x1xf32>
    %59 = tpu.reciprocal %58 {approx = true} : vector<2x8x1xf32> -> vector<2x8x1xf32>
    %60 = vector.broadcast %59 : vector<2x8x1xf32> to vector<2x8x8xf32>
    %61 = arith.mulf %56, %60 : vector<2x8x8xf32>
    %62 = arith.truncf %61 : vector<2x8x8xf32> to vector<2x8x8xbf16>
    %63 = arith.truncf %45 : vector<2x8x32xf32> to vector<2x8x32xbf16>
    %cst_26 = arith.constant dense<0.000000e+00> : vector<2x8x32xf32>
    %64 = tpu.matmul %62, %63, %cst_26 {dimension_numbers = #tpu.dot_dimension_numbers<[2], [1], [1], [2], [0, 0, 0, 1, 1, 2], [0], [0]>} : vector<2x8x8xbf16>, vector<2x8x32xbf16>, vector<2x8x32xf32> -> vector<2x8x32xf32>
    %65 = vector.extract_strided_slice %38 {offsets = [0, 0, 32], sizes = [2, 8, 32], strides = [1, 1, 1]} : vector<2x8x128xf32> to vector<2x8x32xf32>
    %66 = vector.extract_strided_slice %40 {offsets = [0, 0, 32], sizes = [2, 8, 32], strides = [1, 1, 1]} : vector<2x8x128xf32> to vector<2x8x32xf32>
    %67 = vector.extract_strided_slice %42 {offsets = [0, 0, 32], sizes = [2, 8, 32], strides = [1, 1, 1]} : vector<2x8x128xf32> to vector<2x8x32xf32>
    %68 = arith.truncf %65 : vector<2x8x32xf32> to vector<2x8x32xbf16>
    %69 = arith.truncf %66 : vector<2x8x32xf32> to vector<2x8x32xbf16>
    %cst_27 = arith.constant dense<0.000000e+00> : vector<2x8x8xf32>
    %70 = tpu.matmul %68, %69, %cst_27 {dimension_numbers = #tpu.dot_dimension_numbers<[2], [2], [1], [1], [0, 0, 0, 1, 1, 1], [0], [0]>} : vector<2x8x32xbf16>, vector<2x8x32xbf16>, vector<2x8x8xf32> -> vector<2x8x8xf32>
    %cst_28 = arith.constant 0.176776692 : f32
    %71 = vector.broadcast %cst_28 : f32 to vector<2x8x8xf32>
    %72 = arith.mulf %70, %71 : vector<2x8x8xf32>
    %73 = arith.addf %72, %4 : vector<2x8x8xf32>
    %cst_29 = arith.constant dense<0xFF800000> : vector<2x8xf32>
    %74 = vector.multi_reduction <maximumf>, %73, %cst_29 [2] : vector<2x8x8xf32> to vector<2x8xf32>
    %75 = vector.shape_cast %74 : vector<2x8xf32> to vector<2x8x1xf32>
    %76 = vector.broadcast %75 : vector<2x8x1xf32> to vector<2x8x8xf32>
    %77 = arith.subf %73, %76 : vector<2x8x8xf32>
    %78 = math.exp %77 : vector<2x8x8xf32>
    %cst_30 = arith.constant dense<0.000000e+00> : vector<2x8xf32>
    %79 = vector.multi_reduction <add>, %78, %cst_30 [2] : vector<2x8x8xf32> to vector<2x8xf32>
    %80 = vector.shape_cast %79 : vector<2x8xf32> to vector<2x8x1xf32>
    %81 = tpu.reciprocal %80 {approx = true} : vector<2x8x1xf32> -> vector<2x8x1xf32>
    %82 = vector.broadcast %81 : vector<2x8x1xf32> to vector<2x8x8xf32>
    %83 = arith.mulf %78, %82 : vector<2x8x8xf32>
    %84 = arith.truncf %83 : vector<2x8x8xf32> to vector<2x8x8xbf16>
    %85 = arith.truncf %67 : vector<2x8x32xf32> to vector<2x8x32xbf16>
    %cst_31 = arith.constant dense<0.000000e+00> : vector<2x8x32xf32>
    %86 = tpu.matmul %84, %85, %cst_31 {dimension_numbers = #tpu.dot_dimension_numbers<[2], [1], [1], [2], [0, 0, 0, 1, 1, 2], [0], [0]>} : vector<2x8x8xbf16>, vector<2x8x32xbf16>, vector<2x8x32xf32> -> vector<2x8x32xf32>
    %87 = vector.extract_strided_slice %38 {offsets = [0, 0, 64], sizes = [2, 8, 32], strides = [1, 1, 1]} : vector<2x8x128xf32> to vector<2x8x32xf32>
    %88 = vector.extract_strided_slice %40 {offsets = [0, 0, 64], sizes = [2, 8, 32], strides = [1, 1, 1]} : vector<2x8x128xf32> to vector<2x8x32xf32>
    %89 = vector.extract_strided_slice %42 {offsets = [0, 0, 64], sizes = [2, 8, 32], strides = [1, 1, 1]} : vector<2x8x128xf32> to vector<2x8x32xf32>
    %90 = arith.truncf %87 : vector<2x8x32xf32> to vector<2x8x32xbf16>
    %91 = arith.truncf %88 : vector<2x8x32xf32> to vector<2x8x32xbf16>
    %cst_32 = arith.constant dense<0.000000e+00> : vector<2x8x8xf32>
    %92 = tpu.matmul %90, %91, %cst_32 {dimension_numbers = #tpu.dot_dimension_numbers<[2], [2], [1], [1], [0, 0, 0, 1, 1, 1], [0], [0]>} : vector<2x8x32xbf16>, vector<2x8x32xbf16>, vector<2x8x8xf32> -> vector<2x8x8xf32>
    %cst_33 = arith.constant 0.176776692 : f32
    %93 = vector.broadcast %cst_33 : f32 to vector<2x8x8xf32>
    %94 = arith.mulf %92, %93 : vector<2x8x8xf32>
    %95 = arith.addf %94, %4 : vector<2x8x8xf32>
    %cst_34 = arith.constant dense<0xFF800000> : vector<2x8xf32>
    %96 = vector.multi_reduction <maximumf>, %95, %cst_34 [2] : vector<2x8x8xf32> to vector<2x8xf32>
    %97 = vector.shape_cast %96 : vector<2x8xf32> to vector<2x8x1xf32>
    %98 = vector.broadcast %97 : vector<2x8x1xf32> to vector<2x8x8xf32>
    %99 = arith.subf %95, %98 : vector<2x8x8xf32>
    %100 = math.exp %99 : vector<2x8x8xf32>
    %cst_35 = arith.constant dense<0.000000e+00> : vector<2x8xf32>
    %101 = vector.multi_reduction <add>, %100, %cst_35 [2] : vector<2x8x8xf32> to vector<2x8xf32>
    %102 = vector.shape_cast %101 : vector<2x8xf32> to vector<2x8x1xf32>
    %103 = tpu.reciprocal %102 {approx = true} : vector<2x8x1xf32> -> vector<2x8x1xf32>
    %104 = vector.broadcast %103 : vector<2x8x1xf32> to vector<2x8x8xf32>
    %105 = arith.mulf %100, %104 : vector<2x8x8xf32>
    %106 = arith.truncf %105 : vector<2x8x8xf32> to vector<2x8x8xbf16>
    %107 = arith.truncf %89 : vector<2x8x32xf32> to vector<2x8x32xbf16>
    %cst_36 = arith.constant dense<0.000000e+00> : vector<2x8x32xf32>
    %108 = tpu.matmul %106, %107, %cst_36 {dimension_numbers = #tpu.dot_dimension_numbers<[2], [1], [1], [2], [0, 0, 0, 1, 1, 2], [0], [0]>} : vector<2x8x8xbf16>, vector<2x8x32xbf16>, vector<2x8x32xf32> -> vector<2x8x32xf32>
    %109 = vector.extract_strided_slice %38 {offsets = [0, 0, 96], sizes = [2, 8, 32], strides = [1, 1, 1]} : vector<2x8x128xf32> to vector<2x8x32xf32>
    %110 = vector.extract_strided_slice %40 {offsets = [0, 0, 96], sizes = [2, 8, 32], strides = [1, 1, 1]} : vector<2x8x128xf32> to vector<2x8x32xf32>
    %111 = vector.extract_strided_slice %42 {offsets = [0, 0, 96], sizes = [2, 8, 32], strides = [1, 1, 1]} : vector<2x8x128xf32> to vector<2x8x32xf32>
    %112 = arith.truncf %109 : vector<2x8x32xf32> to vector<2x8x32xbf16>
    %113 = arith.truncf %110 : vector<2x8x32xf32> to vector<2x8x32xbf16>
    %cst_37 = arith.constant dense<0.000000e+00> : vector<2x8x8xf32>
    %114 = tpu.matmul %112, %113, %cst_37 {dimension_numbers = #tpu.dot_dimension_numbers<[2], [2], [1], [1], [0, 0, 0, 1, 1, 1], [0], [0]>} : vector<2x8x32xbf16>, vector<2x8x32xbf16>, vector<2x8x8xf32> -> vector<2x8x8xf32>
    %cst_38 = arith.constant 0.176776692 : f32
    %115 = vector.broadcast %cst_38 : f32 to vector<2x8x8xf32>
    %116 = arith.mulf %114, %115 : vector<2x8x8xf32>
    %117 = arith.addf %116, %4 : vector<2x8x8xf32>
    %cst_39 = arith.constant dense<0xFF800000> : vector<2x8xf32>
    %118 = vector.multi_reduction <maximumf>, %117, %cst_39 [2] : vector<2x8x8xf32> to vector<2x8xf32>
    %119 = vector.shape_cast %118 : vector<2x8xf32> to vector<2x8x1xf32>
    %120 = vector.broadcast %119 : vector<2x8x1xf32> to vector<2x8x8xf32>
    %121 = arith.subf %117, %120 : vector<2x8x8xf32>
    %122 = math.exp %121 : vector<2x8x8xf32>
    %cst_40 = arith.constant dense<0.000000e+00> : vector<2x8xf32>
    %123 = vector.multi_reduction <add>, %122, %cst_40 [2] : vector<2x8x8xf32> to vector<2x8xf32>
    %124 = vector.shape_cast %123 : vector<2x8xf32> to vector<2x8x1xf32>
    %125 = tpu.reciprocal %124 {approx = true} : vector<2x8x1xf32> -> vector<2x8x1xf32>
    %126 = vector.broadcast %125 : vector<2x8x1xf32> to vector<2x8x8xf32>
    %127 = arith.mulf %122, %126 : vector<2x8x8xf32>
    %128 = arith.truncf %127 : vector<2x8x8xf32> to vector<2x8x8xbf16>
    %129 = arith.truncf %111 : vector<2x8x32xf32> to vector<2x8x32xbf16>
    %cst_41 = arith.constant dense<0.000000e+00> : vector<2x8x32xf32>
    %130 = tpu.matmul %128, %129, %cst_41 {dimension_numbers = #tpu.dot_dimension_numbers<[2], [1], [1], [2], [0, 0, 0, 1, 1, 2], [0], [0]>} : vector<2x8x8xbf16>, vector<2x8x32xbf16>, vector<2x8x32xf32> -> vector<2x8x32xf32>
    %131 = tpu.concatenate %64, %86, %108, %130 in 2 : vector<2x8x32xf32>, vector<2x8x32xf32>, vector<2x8x32xf32>, vector<2x8x32xf32> -> vector<2x8x128xf32>
    %132 = vector.shape_cast %131 : vector<2x8x128xf32> to vector<16x128xf32>
    %c0_42 = arith.constant 0 : index
    %c0_43 = arith.constant 0 : index
    %c0_44 = arith.constant 0 : index
    %133 = vector.load %arg11[%c0_42, %c0_43, %c0_44] : memref<1x128x128xbf16, #tpu.memory_space<vmem>>, vector<1x128x128xbf16>
    %134 = vector.shape_cast %133 : vector<1x128x128xbf16> to vector<128x128xbf16>
    %135 = arith.truncf %132 : vector<16x128xf32> to vector<16x128xbf16>
    %cst_45 = arith.constant dense<0.000000e+00> : vector<16x128xf32>
    %136 = tpu.matmul %135, %134, %cst_45 {dimension_numbers = #tpu.dot_dimension_numbers<[1], [0], [0], [1], [0, 0, 1, 1], [], []>} : vector<16x128xbf16>, vector<128x128xbf16>, vector<16x128xf32> -> vector<16x128xf32>
    %137 = arith.addf %3, %136 : vector<16x128xf32>
    %c0_46 = arith.constant 0 : index
    %c0_47 = arith.constant 0 : index
    %c0_48 = arith.constant 0 : index
    %138 = vector.load %arg12[%c0_46, %c0_47, %c0_48] : memref<1x1x128xf32, #tpu.memory_space<vmem>>, vector<1x1x128xf32>
    %139 = vector.shape_cast %138 : vector<1x1x128xf32> to vector<1x128xf32>
    %140 = vector.broadcast %139 : vector<1x128xf32> to vector<16x128xf32>
    %141 = arith.addf %137, %140 : vector<16x128xf32>
    %c0_49 = arith.constant 0 : index
    %c0_50 = arith.constant 0 : index
    %c0_51 = arith.constant 0 : index
    %142 = vector.load %arg13[%c0_49, %c0_50, %c0_51] : memref<1x1x128xf32, #tpu.memory_space<vmem>>, vector<1x1x128xf32>
    %143 = vector.shape_cast %142 : vector<1x1x128xf32> to vector<1x128xf32>
    %c0_52 = arith.constant 0 : index
    %c0_53 = arith.constant 0 : index
    %c0_54 = arith.constant 0 : index
    %144 = vector.load %arg14[%c0_52, %c0_53, %c0_54] : memref<1x1x128xf32, #tpu.memory_space<vmem>>, vector<1x1x128xf32>
    %145 = vector.shape_cast %144 : vector<1x1x128xf32> to vector<1x128xf32>
    %cst_55 = arith.constant dense<0.000000e+00> : vector<16xf32>
    %146 = vector.multi_reduction <add>, %141, %cst_55 [1] : vector<16x128xf32> to vector<16xf32>
    %147 = vector.shape_cast %146 : vector<16xf32> to vector<16x1xf32>
    %cst_56 = arith.constant 1.280000e+02 : f32
    %148 = vector.broadcast %cst_56 : f32 to vector<16x1xf32>
    %149 = arith.divf %147, %148 : vector<16x1xf32>
    %150 = vector.broadcast %149 : vector<16x1xf32> to vector<16x128xf32>
    %151 = arith.subf %141, %150 : vector<16x128xf32>
    %152 = arith.mulf %151, %151 : vector<16x128xf32>
    %cst_57 = arith.constant dense<0.000000e+00> : vector<16xf32>
    %153 = vector.multi_reduction <add>, %152, %cst_57 [1] : vector<16x128xf32> to vector<16xf32>
    %154 = vector.shape_cast %153 : vector<16xf32> to vector<16x1xf32>
    %cst_58 = arith.constant 1.280000e+02 : f32
    %155 = vector.broadcast %cst_58 : f32 to vector<16x1xf32>
    %156 = arith.divf %154, %155 : vector<16x1xf32>
    %cst_59 = arith.constant 9.99999974E-6 : f32
    %157 = vector.broadcast %cst_59 : f32 to vector<16x1xf32>
    %158 = arith.addf %156, %157 : vector<16x1xf32>
    %159 = math.rsqrt %158 : vector<16x1xf32>
    %160 = vector.broadcast %159 : vector<16x1xf32> to vector<16x128xf32>
    %161 = arith.mulf %151, %160 : vector<16x128xf32>
    %162 = vector.broadcast %143 : vector<1x128xf32> to vector<16x128xf32>
    %163 = arith.mulf %161, %162 : vector<16x128xf32>
    %164 = vector.broadcast %145 : vector<1x128xf32> to vector<16x128xf32>
    %165 = arith.addf %163, %164 : vector<16x128xf32>
    %c0_60 = arith.constant 0 : index
    %c0_61 = arith.constant 0 : index
    %c0_62 = arith.constant 0 : index
    %166 = vector.load %arg15[%c0_60, %c0_61, %c0_62] : memref<1x128x512xbf16, #tpu.memory_space<vmem>>, vector<1x128x512xbf16>
    %167 = vector.shape_cast %166 : vector<1x128x512xbf16> to vector<128x512xbf16>
    %168 = arith.truncf %165 : vector<16x128xf32> to vector<16x128xbf16>
    %cst_63 = arith.constant dense<0.000000e+00> : vector<16x512xf32>
    %169 = tpu.matmul %168, %167, %cst_63 {dimension_numbers = #tpu.dot_dimension_numbers<[1], [0], [0], [1], [0, 0, 1, 1], [], []>} : vector<16x128xbf16>, vector<128x512xbf16>, vector<16x512xf32> -> vector<16x512xf32>
    %c0_64 = arith.constant 0 : index
    %c0_65 = arith.constant 0 : index
    %c0_66 = arith.constant 0 : index
    %170 = vector.load %arg16[%c0_64, %c0_65, %c0_66] : memref<1x1x512xf32, #tpu.memory_space<vmem>>, vector<1x1x512xf32>
    %171 = vector.shape_cast %170 : vector<1x1x512xf32> to vector<1x512xf32>
    %172 = vector.broadcast %171 : vector<1x512xf32> to vector<16x512xf32>
    %173 = arith.addf %169, %172 : vector<16x512xf32>
    %cst_67 = arith.constant 1.702000e+00 : f32
    %174 = vector.broadcast %cst_67 : f32 to vector<16x512xf32>
    %175 = arith.mulf %174, %173 : vector<16x512xf32>
    %176 = arith.negf %175 : vector<16x512xf32>
    %177 = math.exp %176 : vector<16x512xf32>
    %cst_68 = arith.constant 1.000000e+00 : f32
    %178 = vector.broadcast %cst_68 : f32 to vector<16x512xf32>
    %179 = arith.addf %178, %177 : vector<16x512xf32>
    %180 = arith.divf %178, %179 : vector<16x512xf32>
    %181 = arith.mulf %173, %180 : vector<16x512xf32>
    %c0_69 = arith.constant 0 : index
    %c0_70 = arith.constant 0 : index
    %c0_71 = arith.constant 0 : index
    %182 = vector.load %arg17[%c0_69, %c0_70, %c0_71] : memref<1x512x128xbf16, #tpu.memory_space<vmem>>, vector<1x512x128xbf16>
    %183 = vector.shape_cast %182 : vector<1x512x128xbf16> to vector<512x128xbf16>
    %184 = arith.truncf %181 : vector<16x512xf32> to vector<16x512xbf16>
    %cst_72 = arith.constant dense<0.000000e+00> : vector<16x128xf32>
    %185 = tpu.matmul %184, %183, %cst_72 {dimension_numbers = #tpu.dot_dimension_numbers<[1], [0], [0], [1], [0, 0, 1, 1], [], []>} : vector<16x512xbf16>, vector<512x128xbf16>, vector<16x128xf32> -> vector<16x128xf32>
    %186 = arith.addf %141, %185 : vector<16x128xf32>
    %c0_73 = arith.constant 0 : index
    %c0_74 = arith.constant 0 : index
    %c0_75 = arith.constant 0 : index
    %187 = vector.load %arg18[%c0_73, %c0_74, %c0_75] : memref<1x1x128xf32, #tpu.memory_space<vmem>>, vector<1x1x128xf32>
    %188 = vector.shape_cast %187 : vector<1x1x128xf32> to vector<1x128xf32>
    %189 = vector.broadcast %188 : vector<1x128xf32> to vector<16x128xf32>
    %190 = arith.addf %186, %189 : vector<16x128xf32>
    %c0_76 = arith.constant 0 : index
    %c0_77 = arith.constant 0 : index
    %191 = vector.load %arg26[%c0_76, %c0_77] : memref<16x128xf32, #tpu.memory_space<vmem>>, vector<16x128xf32>
    tpu.vector_store %arg26[%c0_76, %c0_77], %190 {strides = array<i32>} : memref<16x128xf32, #tpu.memory_space<vmem>>, vector<16x128xf32>,
    %c1_i32 = arith.constant 1 : i32
    %192 = arith.cmpi eq, %arg0, %c1_i32 : i32
    %193 = arith.extui %192 : i1 to i32
    %c0_i32_78 = arith.constant 0 : i32
    %194 = arith.cmpi ne, %193, %c0_i32_78 : i32
    scf.if %194 {
      %c0_79 = arith.constant 0 : index
      %c0_80 = arith.constant 0 : index
      %195 = tpu.strided_load %arg26[%c0_79, %c0_80] {strides = array<i32: 8, 1>} : memref<16x128xf32, #tpu.memory_space<vmem>>, vector<2x128xf32>
      %c0_81 = arith.constant 0 : index
      %c0_82 = arith.constant 0 : index
      %196 = vector.load %arg19[%c0_81, %c0_82] : memref<1x128xf32, #tpu.memory_space<vmem>>, vector<1x128xf32>
      %c0_83 = arith.constant 0 : index
      %c0_84 = arith.constant 0 : index
      %197 = vector.load %arg20[%c0_83, %c0_84] : memref<1x128xf32, #tpu.memory_space<vmem>>, vector<1x128xf32>
      %cst_85 = arith.constant dense<0.000000e+00> : vector<2xf32>
      %198 = vector.multi_reduction <add>, %195, %cst_85 [1] : vector<2x128xf32> to vector<2xf32>
      %199 = vector.shape_cast %198 : vector<2xf32> to vector<2x1xf32>
      %cst_86 = arith.constant 1.280000e+02 : f32
      %200 = vector.broadcast %cst_86 : f32 to vector<2x1xf32>
      %201 = arith.divf %199, %200 : vector<2x1xf32>
      %202 = vector.broadcast %201 : vector<2x1xf32> to vector<2x128xf32>
      %203 = arith.subf %195, %202 : vector<2x128xf32>
      %204 = arith.mulf %203, %203 : vector<2x128xf32>
      %cst_87 = arith.constant dense<0.000000e+00> : vector<2xf32>
      %205 = vector.multi_reduction <add>, %204, %cst_87 [1] : vector<2x128xf32> to vector<2xf32>
      %206 = vector.shape_cast %205 : vector<2xf32> to vector<2x1xf32>
      %cst_88 = arith.constant 1.280000e+02 : f32
      %207 = vector.broadcast %cst_88 : f32 to vector<2x1xf32>
      %208 = arith.divf %206, %207 : vector<2x1xf32>
      %cst_89 = arith.constant 9.99999974E-6 : f32
      %209 = vector.broadcast %cst_89 : f32 to vector<2x1xf32>
      %210 = arith.addf %208, %209 : vector<2x1xf32>
      %211 = math.rsqrt %210 : vector<2x1xf32>
      %212 = vector.broadcast %211 : vector<2x1xf32> to vector<2x128xf32>
      %213 = arith.mulf %203, %212 : vector<2x128xf32>
      %214 = vector.broadcast %196 : vector<1x128xf32> to vector<2x128xf32>
      %215 = arith.mulf %213, %214 : vector<2x128xf32>
      %216 = vector.broadcast %197 : vector<1x128xf32> to vector<2x128xf32>
      %217 = arith.addf %215, %216 : vector<2x128xf32>
      %c0_90 = arith.constant 0 : index
      %c0_91 = arith.constant 0 : index
      %218 = vector.load %arg21[%c0_90, %c0_91] : memref<128x128xbf16, #tpu.memory_space<vmem>>, vector<128x128xbf16>
      %219 = arith.truncf %217 : vector<2x128xf32> to vector<2x128xbf16>
      %cst_92 = arith.constant dense<0.000000e+00> : vector<2x128xf32>
      %220 = tpu.matmul %219, %218, %cst_92 {dimension_numbers = #tpu.dot_dimension_numbers<[1], [0], [0], [1], [0, 0, 1, 1], [], []>} : vector<2x128xbf16>, vector<128x128xbf16>, vector<2x128xf32> -> vector<2x128xf32>
      %c0_93 = arith.constant 0 : index
      %c0_94 = arith.constant 0 : index
      %221 = vector.load %arg24[%c0_93, %c0_94] : memref<2x128xf32, #tpu.memory_space<vmem>>, vector<2x128xf32>
      tpu.vector_store %arg24[%c0_93, %c0_94], %220 {strides = array<i32>} : memref<2x128xf32, #tpu.memory_space<vmem>>, vector<2x128xf32>,
      %c0_95 = arith.constant 0 : index
      %c0_96 = arith.constant 0 : index
      %222 = vector.load %arg22[%c0_95, %c0_96] : memref<128x256xbf16, #tpu.memory_space<vmem>>, vector<128x256xbf16>
      %223 = arith.truncf %220 : vector<2x128xf32> to vector<2x128xbf16>
      %cst_97 = arith.constant dense<0.000000e+00> : vector<2x256xf32>
      %224 = tpu.matmul %223, %222, %cst_97 {dimension_numbers = #tpu.dot_dimension_numbers<[1], [0], [0], [1], [0, 0, 1, 1], [], []>} : vector<2x128xbf16>, vector<128x256xbf16>, vector<2x256xf32> -> vector<2x256xf32>
      %c0_98 = arith.constant 0 : index
      %c0_99 = arith.constant 0 : index
      %225 = vector.load %arg23[%c0_98, %c0_99] : memref<1x256xf32, #tpu.memory_space<vmem>>, vector<1x256xf32>
      %226 = vector.broadcast %225 : vector<1x256xf32> to vector<2x256xf32>
      %227 = arith.addf %224, %226 : vector<2x256xf32>
      %c0_100 = arith.constant 0 : index
      %c0_101 = arith.constant 0 : index
      %228 = vector.load %arg25[%c0_100, %c0_101] : memref<2x256xf32, #tpu.memory_space<vmem>>, vector<2x256xf32>
      tpu.vector_store %arg25[%c0_100, %c0_101], %227 {strides = array<i32>} : memref<2x256xf32, #tpu.memory_space<vmem>>, vector<2x256xf32>,
    } else {
    }
    return
  }
  func.func @transform_0(%arg0: i32) -> (i32, i32) {
    %c0_i32 = arith.constant 0 : i32
    %c0_i32_0 = arith.constant 0 : i32
    %c0_i32_1 = arith.constant 0 : i32
    return %c0_i32, %c0_i32_0 : i32, i32
  }
  func.func @transform_1(%arg0: i32) -> (i32, i32) {
    %c0_i32 = arith.constant 0 : i32
    %c0_i32_0 = arith.constant 0 : i32
    %c0_i32_1 = arith.constant 0 : i32
    return %c0_i32, %c0_i32_0 : i32, i32
  }
  func.func @transform_2(%arg0: i32) -> (i32, i32) {
    %c0_i32 = arith.constant 0 : i32
    %c0_i32_0 = arith.constant 0 : i32
    %c0_i32_1 = arith.constant 0 : i32
    return %c0_i32, %c0_i32_0 : i32, i32
  }
  func.func @transform_3(%arg0: i32) -> (i32, i32, i32) {
    %c0_i32 = arith.constant 0 : i32
    %c0_i32_0 = arith.constant 0 : i32
    %c0_i32_1 = arith.constant 0 : i32
    %c0_i32_2 = arith.constant 0 : i32
    return %c0_i32, %c0_i32_0, %c0_i32_1 : i32, i32, i32
  }
  func.func @transform_4(%arg0: i32) -> (i32, i32) {
    %c0_i32 = arith.constant 0 : i32
    %c0_i32_0 = arith.constant 0 : i32
    %c0_i32_1 = arith.constant 0 : i32
    return %c0_i32, %c0_i32_0 : i32, i32
  }
  func.func @transform_5(%arg0: i32) -> (i32, i32) {
    %c0_i32 = arith.constant 0 : i32
    %c0_i32_0 = arith.constant 0 : i32
    %c0_i32_1 = arith.constant 0 : i32
    return %c0_i32, %c0_i32_0 : i32, i32
  }
  func.func @transform_6(%arg0: i32) -> (i32, i32, i32) {
    %c0_i32 = arith.constant 0 : i32
    %c0_i32_0 = arith.constant 0 : i32
    %c0_i32_1 = arith.constant 0 : i32
    return %arg0, %c0_i32, %c0_i32_0 : i32, i32, i32
  }
  func.func @transform_7(%arg0: i32) -> (i32, i32, i32) {
    %c0_i32 = arith.constant 0 : i32
    %c0_i32_0 = arith.constant 0 : i32
    %c0_i32_1 = arith.constant 0 : i32
    return %arg0, %c0_i32, %c0_i32_0 : i32, i32, i32
  }
  func.func @transform_8(%arg0: i32) -> (i32, i32, i32) {
    %c0_i32 = arith.constant 0 : i32
    %c0_i32_0 = arith.constant 0 : i32
    %c0_i32_1 = arith.constant 0 : i32
    return %arg0, %c0_i32, %c0_i32_0 : i32, i32, i32
  }
  func.func @transform_9(%arg0: i32) -> (i32, i32, i32) {
    %c0_i32 = arith.constant 0 : i32
    %c0_i32_0 = arith.constant 0 : i32
    %c0_i32_1 = arith.constant 0 : i32
    return %arg0, %c0_i32, %c0_i32_0 : i32, i32, i32
  }
  func.func @transform_10(%arg0: i32) -> (i32, i32, i32) {
    %c0_i32 = arith.constant 0 : i32
    %c0_i32_0 = arith.constant 0 : i32
    %c0_i32_1 = arith.constant 0 : i32
    return %arg0, %c0_i32, %c0_i32_0 : i32, i32, i32
  }
  func.func @transform_11(%arg0: i32) -> (i32, i32, i32) {
    %c0_i32 = arith.constant 0 : i32
    %c0_i32_0 = arith.constant 0 : i32
    %c0_i32_1 = arith.constant 0 : i32
    return %arg0, %c0_i32, %c0_i32_0 : i32, i32, i32
  }
  func.func @transform_12(%arg0: i32) -> (i32, i32, i32) {
    %c0_i32 = arith.constant 0 : i32
    %c0_i32_0 = arith.constant 0 : i32
    %c0_i32_1 = arith.constant 0 : i32
    return %arg0, %c0_i32, %c0_i32_0 : i32, i32, i32
  }
  func.func @transform_13(%arg0: i32) -> (i32, i32, i32) {
    %c0_i32 = arith.constant 0 : i32
    %c0_i32_0 = arith.constant 0 : i32
    %c0_i32_1 = arith.constant 0 : i32
    return %arg0, %c0_i32, %c0_i32_0 : i32, i32, i32
  }
  func.func @transform_14(%arg0: i32) -> (i32, i32, i32) {
    %c0_i32 = arith.constant 0 : i32
    %c0_i32_0 = arith.constant 0 : i32
    %c0_i32_1 = arith.constant 0 : i32
    return %arg0, %c0_i32, %c0_i32_0 : i32, i32, i32
  }
  func.func @transform_15(%arg0: i32) -> (i32, i32, i32) {
    %c0_i32 = arith.constant 0 : i32
    %c0_i32_0 = arith.constant 0 : i32
    %c0_i32_1 = arith.constant 0 : i32
    return %arg0, %c0_i32, %c0_i32_0 : i32, i32, i32
  }
  func.func @transform_16(%arg0: i32) -> (i32, i32, i32) {
    %c0_i32 = arith.constant 0 : i32
    %c0_i32_0 = arith.constant 0 : i32
    %c0_i32_1 = arith.constant 0 : i32
    return %arg0, %c0_i32, %c0_i32_0 : i32, i32, i32
  }
  func.func @transform_17(%arg0: i32) -> (i32, i32, i32) {
    %c0_i32 = arith.constant 0 : i32
    %c0_i32_0 = arith.constant 0 : i32
    %c0_i32_1 = arith.constant 0 : i32
    return %arg0, %c0_i32, %c0_i32_0 : i32, i32, i32
  }
  func.func @transform_18(%arg0: i32) -> (i32, i32) {
    %c0_i32 = arith.constant 0 : i32
    %c0_i32_0 = arith.constant 0 : i32
    %c0_i32_1 = arith.constant 0 : i32
    return %c0_i32, %c0_i32_0 : i32, i32
  }
  func.func @transform_19(%arg0: i32) -> (i32, i32) {
    %c0_i32 = arith.constant 0 : i32
    %c0_i32_0 = arith.constant 0 : i32
    %c0_i32_1 = arith.constant 0 : i32
    return %c0_i32, %c0_i32_0 : i32, i32
  }
  func.func @transform_20(%arg0: i32) -> (i32, i32) {
    %c0_i32 = arith.constant 0 : i32
    %c0_i32_0 = arith.constant 0 : i32
    %c0_i32_1 = arith.constant 0 : i32
    return %c0_i32, %c0_i32_0 : i32, i32
  }
  func.func @transform_21(%arg0: i32) -> (i32, i32) {
    %c0_i32 = arith.constant 0 : i32
    %c0_i32_0 = arith.constant 0 : i32
    %c0_i32_1 = arith.constant 0 : i32
    return %c0_i32, %c0_i32_0 : i32, i32
  }
  func.func @transform_22(%arg0: i32) -> (i32, i32) {
    %c0_i32 = arith.constant 0 : i32
    %c0_i32_0 = arith.constant 0 : i32
    %c0_i32_1 = arith.constant 0 : i32
    return %c0_i32, %c0_i32_0 : i32, i32
  }
  func.func @transform_23(%arg0: i32) -> (i32, i32) {
    %c0_i32 = arith.constant 0 : i32
    %c0_i32_0 = arith.constant 0 : i32
    %c0_i32_1 = arith.constant 0 : i32
    return %c0_i32, %c0_i32_0 : i32, i32
  }
  func.func @transform_24(%arg0: i32) -> (i32, i32) {
    %c0_i32 = arith.constant 0 : i32
    %c0_i32_0 = arith.constant 0 : i32
    %c0_i32_1 = arith.constant 0 : i32
    return %c0_i32, %c0_i32_0 : i32, i32
  }
}

</mosaic_0001>

<llo_original>
// kernel: clip_model_forward.1
$region0: #{clip_model_forward.1}
  #allocation0 [shape = 'u32[]', space=smem, size = 0x4, offset = 0x4, fixed_abs, tag = 'smem constant byte address 0x4 - core index']
  #allocation1 [shape = 'u32[144,128]{1,0:T(1,128)}', space=vmem, size = 0x12000, scoped, tag = 'internal scratch']
  #allocation2 [shape = 'f32[16,128]{1,0:T(8,128)}', space=vmem, size = 0x2000, scoped, tag = 'scratch operand']
  %s0 = inlined_call_operand.vmem [shape: bf16[16,256], index: 0, kind: input, shape index: {}]
  %s1 = inlined_call_operand.vmem [shape: bf16[256,128], index: 1, kind: input, shape index: {}]
  %s2 = inlined_call_operand.vmem [shape: f32[16,128], index: 2, kind: input, shape index: {}]
  %s3 = inlined_call_operand.vmem [shape: f32[2,8,8], index: 3, kind: input, shape index: {}]
  %s4 = inlined_call_operand.hbm [shape: f32[1,128], index: 4, kind: input, shape index: {}]
  %s5 = inlined_call_operand.hbm [shape: f32[1,128], index: 5, kind: input, shape index: {}]
  %s6 = inlined_call_operand.hbm [shape: f32[2,1,128], index: 6, kind: input, shape index: {}]
  %s7 = inlined_call_operand.hbm [shape: f32[2,1,128], index: 7, kind: input, shape index: {}]
  %s8 = inlined_call_operand.hbm [shape: bf16[2,128,384], index: 8, kind: input, shape index: {}]
  %s9 = inlined_call_operand.hbm [shape: f32[2,1,384], index: 9, kind: input, shape index: {}]
  %s10 = inlined_call_operand.hbm [shape: bf16[2,128,128], index: 10, kind: input, shape index: {}]
  %s11 = inlined_call_operand.vmem [shape: f32[2,1,128], index: 11, kind: input, shape index: {}]
  %s12 = inlined_call_operand.hbm [shape: f32[2,1,128], index: 12, kind: input, shape index: {}]
  %s13 = inlined_call_operand.hbm [shape: f32[2,1,128], index: 13, kind: input, shape index: {}]
  %s14 = inlined_call_operand.vmem [shape: bf16[2,128,512], index: 14, kind: input, shape index: {}]
  %s15 = inlined_call_operand.hbm [shape: f32[2,1,512], index: 15, kind: input, shape index: {}]
  %s16 = inlined_call_operand.hbm [shape: bf16[2,512,128], index: 16, kind: input, shape index: {}]
  %s17 = inlined_call_operand.hbm [shape: f32[2,1,128], index: 17, kind: input, shape index: {}]
  %s18 = inlined_call_operand.hbm [shape: f32[1,128], index: 18, kind: input, shape index: {}]
  %s19 = inlined_call_operand.hbm [shape: f32[1,128], index: 19, kind: input, shape index: {}]
  %s20 = inlined_call_operand.hbm [shape: bf16[128,128], index: 20, kind: input, shape index: {}]
  %s21 = inlined_call_operand.hbm [shape: bf16[128,256], index: 21, kind: input, shape index: {}]
  %s22 = inlined_call_operand.hbm [shape: f32[1,256], index: 22, kind: input, shape index: {}]
  %s23 = inlined_call_operand.hbm [shape: f32[2,128], index: 23, kind: output, shape index: {0}]
  %s24 = inlined_call_operand.hbm [shape: f32[2,256], index: 24, kind: output, shape index: {1}]
  %25 = xla_tuple %s23, %s24
  %s26 = sld [smem:[#allocation0]]
  $region209: #{clip_model_forward.1} parent=0
    _
  %s28 = ssub.s32 1, %s26
  %s29 = scalar_select 0, %s28, %s26
  $region1: #{clip_model_forward.1} parent=0
    #allocation3 [shape = 'u8[512]{0}', space=vmem, size = 0x400, scoped, tag = 'input window, operand 4, single buffered']
    #allocation4 [shape = 's32[2]{0}', space=sflag, size = 0x8, scoped, tag = 'scoped memory for clip_model_forward.1']
    #allocation5 [shape = 's32[2]{0}', space=sflag, size = 0x8, scoped, tag = 'scoped memory for clip_model_forward.1']
    #allocation6 [shape = 'u8[512]{0}', space=vmem, size = 0x400, scoped, tag = 'input window, operand 5, single buffered']
    #allocation7 [shape = 's32[1]{0}', space=sflag, size = 0x4, scoped, tag = 'scoped memory for clip_model_forward.1']
    #allocation8 [shape = 'u8[1024]{0}', space=vmem, size = 0x400, scoped, tag = 'input window, operand 6']
    #allocation9 [shape = 'u8[1024]{0}', space=vmem, size = 0x400, scoped, tag = 'input window, operand 7']
    #allocation10 [shape = 'u8[196608]{0}', space=vmem, size = 0x30000, scoped, tag = 'input window, operand 8']
    #allocation11 [shape = 'u8[3072]{0}', space=vmem, size = 0xc00, scoped, tag = 'input window, operand 9']
    #allocation12 [shape = 'u8[65536]{0}', space=vmem, size = 0x10000, scoped, tag = 'input window, operand 10']
    #allocation13 [shape = 'u8[1024]{0}', space=vmem, size = 0x400, scoped, tag = 'input window, operand 12']
    #allocation14 [shape = 'u8[1024]{0}', space=vmem, size = 0x400, scoped, tag = 'input window, operand 13']
    #allocation15 [shape = 'u8[4096]{0}', space=vmem, size = 0x1000, scoped, tag = 'input window, operand 15']
    #allocation16 [shape = 'u8[262144]{0}', space=vmem, size = 0x40000, scoped, tag = 'input window, operand 16']
    #allocation17 [shape = 'u8[1024]{0}', space=vmem, size = 0x400, scoped, tag = 'input window, operand 17']
    #allocation18 [shape = 'u8[512]{0}', space=vmem, size = 0x400, scoped, tag = 'input window, operand 18, single buffered']
    #allocation19 [shape = 'u8[512]{0}', space=vmem, size = 0x400, scoped, tag = 'input window, operand 19, single buffered']
    #allocation20 [shape = 's32[1]{0}', space=sflag, size = 0x4, scoped, tag = 'scoped memory for clip_model_forward.1']
    #allocation21 [shape = 'u8[32768]{0}', space=vmem, size = 0x8000, scoped, tag = 'input window, operand 20, single buffered']
    #allocation22 [shape = 'u8[65536]{0}', space=vmem, size = 0x10000, scoped, tag = 'input window, operand 21, single buffered']
    #allocation23 [shape = 's32[1]{0}', space=sflag, size = 0x4, scoped, tag = 'scoped memory for clip_model_forward.1']
    #allocation24 [shape = 'u8[1024]{0}', space=vmem, size = 0x400, scoped, tag = 'input window, operand 22, single buffered']
    #allocation25 [shape = 'u8[1024]{0}', space=vmem, size = 0x400, scoped, tag = 'output window, operand 0, single buffered']
    #allocation26 [shape = 'u8[2048]{0}', space=vmem, size = 0x800, scoped, tag = 'output window, operand 1, single buffered']
    #allocation27 [shape = 's32[1]{0}', space=sflag, size = 0x4, scoped, tag = 'scoped memory for clip_model_forward.1']
    %30 = vsyncpa [#allocation4], 0
    %31 = vsyncpa [#allocation7], 0
    %32 = vsyncpa [#allocation20], 0
    %33 = vsyncpa [#allocation23], 0
    %34 = vsyncpa [#allocation5], 0
    %35 = vsyncpa [#allocation27], 0
    loop: start=0, step=1, limit=4
    $region2: #{clip_model_forward.1} parent=1 // loop_pre_header
      _
    $region3: #{clip_model_forward.1} parent=1 // loop_header
      %s37 = sphi 0, %s41
      %p38 = scmp.ge.s32.totalorder %s37, 4
      %s45 = sphi 0, %s45
      %s47 = sphi 0, %s45
      %s48 = sphi 0, %s47
      %s62 = sphi 0, %s48
      %s66 = sphi 0, %s66
      %s68 = sphi 0, %s66
      %s69 = sphi 0, %s68
      %s83 = sphi 0, %s69
      %s87 = sphi 0, %s87
      %s89 = sphi 0, %s87
      %s90 = sphi 0, %s89
      %s104 = sphi 0, %s90
      %s108 = sphi 0, %s108
      %s110 = sphi 0, %s108
      %s111 = sphi 0, %s110
      %s125 = sphi 0, %s111
      %s129 = sphi 0, %s129
      %s131 = sphi 0, %s129
      %s132 = sphi 0, %s131
      %s146 = sphi 0, %s132
      %s150 = sphi 0, %s150
      %s152 = sphi 0, %s150
      %s153 = sphi 0, %s152
      %s167 = sphi 0, %s153
      %s173 = sphi 0, %s175
      %s176 = sphi 0, %s173
      %s177 = sphi 0, %s176
      %s193 = sphi 0, %s177
      %s199 = sphi 0, %s201
      %s202 = sphi 0, %s199
      %s203 = sphi 0, %s202
      %s219 = sphi 0, %s203
      %s225 = sphi 0, %s227
      %s228 = sphi 0, %s225
      %s229 = sphi 0, %s228
      %s245 = sphi 0, %s229
      %s251 = sphi 0, %s253
      %s254 = sphi 0, %s251
      %s255 = sphi 0, %s254
      %s271 = sphi 0, %s255
      %s277 = sphi 0, %s279
      %s280 = sphi 0, %s277
      %s281 = sphi 0, %s280
      %s297 = sphi 0, %s281
      %s303 = sphi 0, %s305
      %s306 = sphi 0, %s303
      %s307 = sphi 0, %s306
      %s323 = sphi 0, %s307
      %s329 = sphi 0, %s331
      %s332 = sphi 0, %s329
      %s333 = sphi 0, %s332
      %s349 = sphi 0, %s333
      %s355 = sphi 0, %s357
      %s358 = sphi 0, %s355
      %s359 = sphi 0, %s358
      %s375 = sphi 0, %s359
      %s381 = sphi 0, %s383
      %s384 = sphi 0, %s381
      %s385 = sphi 0, %s384
      %s401 = sphi 0, %s385
      %s407 = sphi 0, %s409
      %s410 = sphi 0, %s407
      %s411 = sphi 0, %s410
      %s427 = sphi 0, %s411
      %s433 = sphi 0, %s435
      %s436 = sphi 0, %s433
      %s437 = sphi 0, %s436
      %s453 = sphi 0, %s437
      %s459 = sphi 0, %s461
      %s462 = sphi 0, %s459
      %s463 = sphi 0, %s462
      %s479 = sphi 0, %s463
      %s483 = sphi 0, %s483
      %s485 = sphi 0, %s483
      %s486 = sphi 0, %s485
      %s500 = sphi 0, %s486
      %s504 = sphi 0, %s504
      %s506 = sphi 0, %s504
      %s507 = sphi 0, %s506
      %s521 = sphi 0, %s507
      %s525 = sphi 0, %s525
      %s527 = sphi 0, %s525
      %s528 = sphi 0, %s527
      %s542 = sphi 0, %s528
      %s546 = sphi 0, %s546
      %s548 = sphi 0, %s546
      %s549 = sphi 0, %s548
      %s563 = sphi 0, %s549
      %s567 = sphi 0, %s567
      %s569 = sphi 0, %s567
      %s570 = sphi 0, %s569
      %s584 = sphi 0, %s570
      %s588 = sphi 0, %s588
      %s590 = sphi 0, %s588
      %s591 = sphi 0, %s590
      %s605 = sphi 0, %s591
      %s609 = sphi 0, %s609
      %s611 = sphi 0, %s609
      %s612 = sphi 0, %s611
      %s626 = sphi 0, %s612
    $region4: #{clip_model_forward.1} parent=1 // loop_header_branch
      %40 = sbr.rel (%p38) target = $region8
    $region5: #{clip_model_forward.1} parent=1 // loop_body
      %s42 = ssub.s32 %s37, 1
      %s43 = ssub.s32 %s37, 2
      %s44 = sadd.s32 %s37, 1
      %s46 = sadd.s32 %s45, 1
      %p49 = scmp.eq.s32.totalorder %s37, 1
      %p50 = scmp.ne.s32.totalorder %s45, %s47
      %p51 = scmp.eq.s32.totalorder %s37, 0
      %p52 = por %p50, %p51
      %p53 = scmp.ne.s32.totalorder %s45, %s47
      %p54 = scmp.eq.s32.totalorder %s42, 1
      %p55 = por %p53, %p54
      %p56 = scmp.ne.s32.totalorder %s47, %s48
      %p57 = scmp.eq.s32.totalorder %s42, 0
      %p58 = por %p56, %p57
      %p59 = scmp.ne.s32.totalorder %s47, %s48
      %p60 = scmp.eq.s32.totalorder %s43, 1
      %p61 = por %p59, %p60
      %p63 = scmp.ne.s32.totalorder %s48, %s62
      %p64 = scmp.eq.s32.totalorder %s43, 0
      %p65 = por %p63, %p64
      %s67 = sadd.s32 %s66, 1
      %p70 = scmp.eq.s32.totalorder %s37, 1
      %p71 = scmp.ne.s32.totalorder %s66, %s68
      %p72 = scmp.eq.s32.totalorder %s37, 0
      %p73 = por %p71, %p72
      %p74 = scmp.ne.s32.totalorder %s66, %s68
      %p75 = scmp.eq.s32.totalorder %s42, 1
      %p76 = por %p74, %p75
      %p77 = scmp.ne.s32.totalorder %s68, %s69
      %p78 = scmp.eq.s32.totalorder %s42, 0
      %p79 = por %p77, %p78
      %p80 = scmp.ne.s32.totalorder %s68, %s69
      %p81 = scmp.eq.s32.totalorder %s43, 1
      %p82 = por %p80, %p81
      %p84 = scmp.ne.s32.totalorder %s69, %s83
      %p85 = scmp.eq.s32.totalorder %s43, 0
      %p86 = por %p84, %p85
      %s88 = sadd.s32 %s87, 1
      %p91 = scmp.eq.s32.totalorder %s37, 1
      %p92 = scmp.ne.s32.totalorder %s87, %s89
      %p93 = scmp.eq.s32.totalorder %s37, 0
      %p94 = por %p92, %p93
      %p95 = scmp.ne.s32.totalorder %s87, %s89
      %p96 = scmp.eq.s32.totalorder %s42, 1
      %p97 = por %p95, %p96
      %p98 = scmp.ne.s32.totalorder %s89, %s90
      %p99 = scmp.eq.s32.totalorder %s42, 0
      %p100 = por %p98, %p99
      %p101 = scmp.ne.s32.totalorder %s89, %s90
      %p102 = scmp.eq.s32.totalorder %s43, 1
      %p103 = por %p101, %p102
      %p105 = scmp.ne.s32.totalorder %s90, %s104
      %p106 = scmp.eq.s32.totalorder %s43, 0
      %p107 = por %p105, %p106
      %s109 = sadd.s32 %s108, 1
      %p112 = scmp.eq.s32.totalorder %s37, 1
      %p113 = scmp.ne.s32.totalorder %s108, %s110
      %p114 = scmp.eq.s32.totalorder %s37, 0
      %p115 = por %p113, %p114
      %p116 = scmp.ne.s32.totalorder %s108, %s110
      %p117 = scmp.eq.s32.totalorder %s42, 1
      %p118 = por %p116, %p117
      %p119 = scmp.ne.s32.totalorder %s110, %s111
      %p120 = scmp.eq.s32.totalorder %s42, 0
      %p121 = por %p119, %p120
      %p122 = scmp.ne.s32.totalorder %s110, %s111
      %p123 = scmp.eq.s32.totalorder %s43, 1
      %p124 = por %p122, %p123
      %p126 = scmp.ne.s32.totalorder %s111, %s125
      %p127 = scmp.eq.s32.totalorder %s43, 0
      %p128 = por %p126, %p127
      %s130 = sadd.s32 %s129, 1
      %p133 = scmp.eq.s32.totalorder %s37, 1
      %p134 = scmp.ne.s32.totalorder %s129, %s131
      %p135 = scmp.eq.s32.totalorder %s37, 0
      %p136 = por %p134, %p135
      %p137 = scmp.ne.s32.totalorder %s129, %s131
      %p138 = scmp.eq.s32.totalorder %s42, 1
      %p139 = por %p137, %p138
      %p140 = scmp.ne.s32.totalorder %s131, %s132
      %p141 = scmp.eq.s32.totalorder %s42, 0
      %p142 = por %p140, %p141
      %p143 = scmp.ne.s32.totalorder %s131, %s132
      %p144 = scmp.eq.s32.totalorder %s43, 1
      %p145 = por %p143, %p144
      %p147 = scmp.ne.s32.totalorder %s132, %s146
      %p148 = scmp.eq.s32.totalorder %s43, 0
      %p149 = por %p147, %p148
      %s151 = sadd.s32 %s150, 1
      %p154 = scmp.eq.s32.totalorder %s37, 1
      %p155 = scmp.ne.s32.totalorder %s150, %s152
      %p156 = scmp.eq.s32.totalorder %s37, 0
      %p157 = por %p155, %p156
      %p158 = scmp.ne.s32.totalorder %s150, %s152
      %p159 = scmp.eq.s32.totalorder %s42, 1
      %p160 = por %p158, %p159
      %p161 = scmp.ne.s32.totalorder %s152, %s153
      %p162 = scmp.eq.s32.totalorder %s42, 0
      %p163 = por %p161, %p162
      %p164 = scmp.ne.s32.totalorder %s152, %s153
      %p165 = scmp.eq.s32.totalorder %s43, 1
      %p166 = por %p164, %p165
      %p168 = scmp.ne.s32.totalorder %s153, %s167
      %p169 = scmp.eq.s32.totalorder %s43, 0
      %p170 = por %p168, %p169
      %s171 = ssub.s32 %s37, %s44
      %p172 = scmp.eq.s32.totalorder %s171, 0
      %s174 = sadd.s32 %s173, 1
      %s175 = scalar_select %p172, %s173, %s174
      %p178 = pneg %p172
      %p179 = scmp.eq.s32.totalorder %s37, 1
      %p180 = por %p178, %p179
      %p181 = scmp.ne.s32.totalorder %s173, %s176
      %p182 = scmp.eq.s32.totalorder %s37, 0
      %p183 = por %p181, %p182
      %p184 = scmp.ne.s32.totalorder %s173, %s176
      %p185 = scmp.eq.s32.totalorder %s42, 1
      %p186 = por %p184, %p185
      %p187 = scmp.ne.s32.totalorder %s176, %s177
      %p188 = scmp.eq.s32.totalorder %s42, 0
      %p189 = por %p187, %p188
      %p190 = scmp.ne.s32.totalorder %s176, %s177
      %p191 = scmp.eq.s32.totalorder %s43, 1
      %p192 = por %p190, %p191
      %p194 = scmp.ne.s32.totalorder %s177, %s193
      %p195 = scmp.eq.s32.totalorder %s43, 0
      %p196 = por %p194, %p195
      %s197 = ssub.s32 %s37, %s44
      %p198 = scmp.eq.s32.totalorder %s197, 0
      %s200 = sadd.s32 %s199, 1
      %s201 = scalar_select %p198, %s199, %s200
      %p204 = pneg %p198
      %p205 = scmp.eq.s32.totalorder %s37, 1
      %p206 = por %p204, %p205
      %p207 = scmp.ne.s32.totalorder %s199, %s202
      %p208 = scmp.eq.s32.totalorder %s37, 0
      %p209 = por %p207, %p208
      %p210 = scmp.ne.s32.totalorder %s199, %s202
      %p211 = scmp.eq.s32.totalorder %s42, 1
      %p212 = por %p210, %p211
      %p213 = scmp.ne.s32.totalorder %s202, %s203
      %p214 = scmp.eq.s32.totalorder %s42, 0
      %p215 = por %p213, %p214
      %p216 = scmp.ne.s32.totalorder %s202, %s203
      %p217 = scmp.eq.s32.totalorder %s43, 1
      %p218 = por %p216, %p217
      %p220 = scmp.ne.s32.totalorder %s203, %s219
      %p221 = scmp.eq.s32.totalorder %s43, 0
      %p222 = por %p220, %p221
      %s223 = ssub.s32 %s37, %s44
      %p224 = scmp.eq.s32.totalorder %s223, 0
      %s226 = sadd.s32 %s225, 1
      %s227 = scalar_select %p224, %s225, %s226
      %p230 = pneg %p224
      %p231 = scmp.eq.s32.totalorder %s37, 1
      %p232 = por %p230, %p231
      %p233 = scmp.ne.s32.totalorder %s225, %s228
      %p234 = scmp.eq.s32.totalorder %s37, 0
      %p235 = por %p233, %p234
      %p236 = scmp.ne.s32.totalorder %s225, %s228
      %p237 = scmp.eq.s32.totalorder %s42, 1
      %p238 = por %p236, %p237
      %p239 = scmp.ne.s32.totalorder %s228, %s229
      %p240 = scmp.eq.s32.totalorder %s42, 0
      %p241 = por %p239, %p240
      %p242 = scmp.ne.s32.totalorder %s228, %s229
      %p243 = scmp.eq.s32.totalorder %s43, 1
      %p244 = por %p242, %p243
      %p246 = scmp.ne.s32.totalorder %s229, %s245
      %p247 = scmp.eq.s32.totalorder %s43, 0
      %p248 = por %p246, %p247
      %s249 = ssub.s32 %s37, %s44
      %p250 = scmp.eq.s32.totalorder %s249, 0
      %s252 = sadd.s32 %s251, 1
      %s253 = scalar_select %p250, %s251, %s252
      %p256 = pneg %p250
      %p257 = scmp.eq.s32.totalorder %s37, 1
      %p258 = por %p256, %p257
      %p259 = scmp.ne.s32.totalorder %s251, %s254
      %p260 = scmp.eq.s32.totalorder %s37, 0
      %p261 = por %p259, %p260
      %p262 = scmp.ne.s32.totalorder %s251, %s254
      %p263 = scmp.eq.s32.totalorder %s42, 1
      %p264 = por %p262, %p263
      %p265 = scmp.ne.s32.totalorder %s254, %s255
      %p266 = scmp.eq.s32.totalorder %s42, 0
      %p267 = por %p265, %p266
      %p268 = scmp.ne.s32.totalorder %s254, %s255
      %p269 = scmp.eq.s32.totalorder %s43, 1
      %p270 = por %p268, %p269
      %p272 = scmp.ne.s32.totalorder %s255, %s271
      %p273 = scmp.eq.s32.totalorder %s43, 0
      %p274 = por %p272, %p273
      %s275 = ssub.s32 %s37, %s44
      %p276 = scmp.eq.s32.totalorder %s275, 0
      %s278 = sadd.s32 %s277, 1
      %s279 = scalar_select %p276, %s277, %s278
      %p282 = pneg %p276
      %p283 = scmp.eq.s32.totalorder %s37, 1
      %p284 = por %p282, %p283
      %p285 = scmp.ne.s32.totalorder %s277, %s280
      %p286 = scmp.eq.s32.totalorder %s37, 0
      %p287 = por %p285, %p286
      %p288 = scmp.ne.s32.totalorder %s277, %s280
      %p289 = scmp.eq.s32.totalorder %s42, 1
      %p290 = por %p288, %p289
      %p291 = scmp.ne.s32.totalorder %s280, %s281
      %p292 = scmp.eq.s32.totalorder %s42, 0
      %p293 = por %p291, %p292
      %p294 = scmp.ne.s32.totalorder %s280, %s281
      %p295 = scmp.eq.s32.totalorder %s43, 1
      %p296 = por %p294, %p295
      %p298 = scmp.ne.s32.totalorder %s281, %s297
      %p299 = scmp.eq.s32.totalorder %s43, 0
      %p300 = por %p298, %p299
      %s301 = ssub.s32 %s37, %s44
      %p302 = scmp.eq.s32.totalorder %s301, 0
      %s304 = sadd.s32 %s303, 1
      %s305 = scalar_select %p302, %s303, %s304
      %p308 = pneg %p302
      %p309 = scmp.eq.s32.totalorder %s37, 1
      %p310 = por %p308, %p309
      %p311 = scmp.ne.s32.totalorder %s303, %s306
      %p312 = scmp.eq.s32.totalorder %s37, 0
      %p313 = por %p311, %p312
      %p314 = scmp.ne.s32.totalorder %s303, %s306
      %p315 = scmp.eq.s32.totalorder %s42, 1
      %p316 = por %p314, %p315
      %p317 = scmp.ne.s32.totalorder %s306, %s307
      %p318 = scmp.eq.s32.totalorder %s42, 0
      %p319 = por %p317, %p318
      %p320 = scmp.ne.s32.totalorder %s306, %s307
      %p321 = scmp.eq.s32.totalorder %s43, 1
      %p322 = por %p320, %p321
      %p324 = scmp.ne.s32.totalorder %s307, %s323
      %p325 = scmp.eq.s32.totalorder %s43, 0
      %p326 = por %p324, %p325
      %s327 = ssub.s32 %s37, %s44
      %p328 = scmp.eq.s32.totalorder %s327, 0
      %s330 = sadd.s32 %s329, 1
      %s331 = scalar_select %p328, %s329, %s330
      %p334 = pneg %p328
      %p335 = scmp.eq.s32.totalorder %s37, 1
      %p336 = por %p334, %p335
      %p337 = scmp.ne.s32.totalorder %s329, %s332
      %p338 = scmp.eq.s32.totalorder %s37, 0
      %p339 = por %p337, %p338
      %p340 = scmp.ne.s32.totalorder %s329, %s332
      %p341 = scmp.eq.s32.totalorder %s42, 1
      %p342 = por %p340, %p341
      %p343 = scmp.ne.s32.totalorder %s332, %s333
      %p344 = scmp.eq.s32.totalorder %s42, 0
      %p345 = por %p343, %p344
      %p346 = scmp.ne.s32.totalorder %s332, %s333
      %p347 = scmp.eq.s32.totalorder %s43, 1
      %p348 = por %p346, %p347
      %p350 = scmp.ne.s32.totalorder %s333, %s349
      %p351 = scmp.eq.s32.totalorder %s43, 0
      %p352 = por %p350, %p351
      %s353 = ssub.s32 %s37, %s44
      %p354 = scmp.eq.s32.totalorder %s353, 0
      %s356 = sadd.s32 %s355, 1
      %s357 = scalar_select %p354, %s355, %s356
      %p360 = pneg %p354
      %p361 = scmp.eq.s32.totalorder %s37, 1
      %p362 = por %p360, %p361
      %p363 = scmp.ne.s32.totalorder %s355, %s358
      %p364 = scmp.eq.s32.totalorder %s37, 0
      %p365 = por %p363, %p364
      %p366 = scmp.ne.s32.totalorder %s355, %s358
      %p367 = scmp.eq.s32.totalorder %s42, 1
      %p368 = por %p366, %p367
      %p369 = scmp.ne.s32.totalorder %s358, %s359
      %p370 = scmp.eq.s32.totalorder %s42, 0
      %p371 = por %p369, %p370
      %p372 = scmp.ne.s32.totalorder %s358, %s359
      %p373 = scmp.eq.s32.totalorder %s43, 1
      %p374 = por %p372, %p373
      %p376 = scmp.ne.s32.totalorder %s359, %s375
      %p377 = scmp.eq.s32.totalorder %s43, 0
      %p378 = por %p376, %p377
      %s379 = ssub.s32 %s37, %s44
      %p380 = scmp.eq.s32.totalorder %s379, 0
      %s382 = sadd.s32 %s381, 1
      %s383 = scalar_select %p380, %s381, %s382
      %p386 = pneg %p380
      %p387 = scmp.eq.s32.totalorder %s37, 1
      %p388 = por %p386, %p387
      %p389 = scmp.ne.s32.totalorder %s381, %s384
      %p390 = scmp.eq.s32.totalorder %s37, 0
      %p391 = por %p389, %p390
      %p392 = scmp.ne.s32.totalorder %s381, %s384
      %p393 = scmp.eq.s32.totalorder %s42, 1
      %p394 = por %p392, %p393
      %p395 = scmp.ne.s32.totalorder %s384, %s385
      %p396 = scmp.eq.s32.totalorder %s42, 0
      %p397 = por %p395, %p396
      %p398 = scmp.ne.s32.totalorder %s384, %s385
      %p399 = scmp.eq.s32.totalorder %s43, 1
      %p400 = por %p398, %p399
      %p402 = scmp.ne.s32.totalorder %s385, %s401
      %p403 = scmp.eq.s32.totalorder %s43, 0
      %p404 = por %p402, %p403
      %s405 = ssub.s32 %s37, %s44
      %p406 = scmp.eq.s32.totalorder %s405, 0
      %s408 = sadd.s32 %s407, 1
      %s409 = scalar_select %p406, %s407, %s408
      %p412 = pneg %p406
      %p413 = scmp.eq.s32.totalorder %s37, 1
      %p414 = por %p412, %p413
      %p415 = scmp.ne.s32.totalorder %s407, %s410
      %p416 = scmp.eq.s32.totalorder %s37, 0
      %p417 = por %p415, %p416
      %p418 = scmp.ne.s32.totalorder %s407, %s410
      %p419 = scmp.eq.s32.totalorder %s42, 1
      %p420 = por %p418, %p419
      %p421 = scmp.ne.s32.totalorder %s410, %s411
      %p422 = scmp.eq.s32.totalorder %s42, 0
      %p423 = por %p421, %p422
      %p424 = scmp.ne.s32.totalorder %s410, %s411
      %p425 = scmp.eq.s32.totalorder %s43, 1
      %p426 = por %p424, %p425
      %p428 = scmp.ne.s32.totalorder %s411, %s427
      %p429 = scmp.eq.s32.totalorder %s43, 0
      %p430 = por %p428, %p429
      %s431 = ssub.s32 %s37, %s44
      %p432 = scmp.eq.s32.totalorder %s431, 0
      %s434 = sadd.s32 %s433, 1
      %s435 = scalar_select %p432, %s433, %s434
      %p438 = pneg %p432
      %p439 = scmp.eq.s32.totalorder %s37, 1
      %p440 = por %p438, %p439
      %p441 = scmp.ne.s32.totalorder %s433, %s436
      %p442 = scmp.eq.s32.totalorder %s37, 0
      %p443 = por %p441, %p442
      %p444 = scmp.ne.s32.totalorder %s433, %s436
      %p445 = scmp.eq.s32.totalorder %s42, 1
      %p446 = por %p444, %p445
      %p447 = scmp.ne.s32.totalorder %s436, %s437
      %p448 = scmp.eq.s32.totalorder %s42, 0
      %p449 = por %p447, %p448
      %p450 = scmp.ne.s32.totalorder %s436, %s437
      %p451 = scmp.eq.s32.totalorder %s43, 1
      %p452 = por %p450, %p451
      %p454 = scmp.ne.s32.totalorder %s437, %s453
      %p455 = scmp.eq.s32.totalorder %s43, 0
      %p456 = por %p454, %p455
      %s457 = ssub.s32 %s37, %s44
      %p458 = scmp.eq.s32.totalorder %s457, 0
      %s460 = sadd.s32 %s459, 1
      %s461 = scalar_select %p458, %s459, %s460
      %p464 = pneg %p458
      %p465 = scmp.eq.s32.totalorder %s37, 1
      %p466 = por %p464, %p465
      %p467 = scmp.ne.s32.totalorder %s459, %s462
      %p468 = scmp.eq.s32.totalorder %s37, 0
      %p469 = por %p467, %p468
      %p470 = scmp.ne.s32.totalorder %s459, %s462
      %p471 = scmp.eq.s32.totalorder %s42, 1
      %p472 = por %p470, %p471
      %p473 = scmp.ne.s32.totalorder %s462, %s463
      %p474 = scmp.eq.s32.totalorder %s42, 0
      %p475 = por %p473, %p474
      %p476 = scmp.ne.s32.totalorder %s462, %s463
      %p477 = scmp.eq.s32.totalorder %s43, 1
      %p478 = por %p476, %p477
      %p480 = scmp.ne.s32.totalorder %s463, %s479
      %p481 = scmp.eq.s32.totalorder %s43, 0
      %p482 = por %p480, %p481
      %s484 = sadd.s32 %s483, 1
      %p487 = scmp.eq.s32.totalorder %s37, 1
      %p488 = scmp.ne.s32.totalorder %s483, %s485
      %p489 = scmp.eq.s32.totalorder %s37, 0
      %p490 = por %p488, %p489
      %p491 = scmp.ne.s32.totalorder %s483, %s485
      %p492 = scmp.eq.s32.totalorder %s42, 1
      %p493 = por %p491, %p492
      %p494 = scmp.ne.s32.totalorder %s485, %s486
      %p495 = scmp.eq.s32.totalorder %s42, 0
      %p496 = por %p494, %p495
      %p497 = scmp.ne.s32.totalorder %s485, %s486
      %p498 = scmp.eq.s32.totalorder %s43, 1
      %p499 = por %p497, %p498
      %p501 = scmp.ne.s32.totalorder %s486, %s500
      %p502 = scmp.eq.s32.totalorder %s43, 0
      %p503 = por %p501, %p502
      %s505 = sadd.s32 %s504, 1
      %p508 = scmp.eq.s32.totalorder %s37, 1
      %p509 = scmp.ne.s32.totalorder %s504, %s506
      %p510 = scmp.eq.s32.totalorder %s37, 0
      %p511 = por %p509, %p510
      %p512 = scmp.ne.s32.totalorder %s504, %s506
      %p513 = scmp.eq.s32.totalorder %s42, 1
      %p514 = por %p512, %p513
      %p515 = scmp.ne.s32.totalorder %s506, %s507
      %p516 = scmp.eq.s32.totalorder %s42, 0
      %p517 = por %p515, %p516
      %p518 = scmp.ne.s32.totalorder %s506, %s507
      %p519 = scmp.eq.s32.totalorder %s43, 1
      %p520 = por %p518, %p519
      %p522 = scmp.ne.s32.totalorder %s507, %s521
      %p523 = scmp.eq.s32.totalorder %s43, 0
      %p524 = por %p522, %p523
      %s526 = sadd.s32 %s525, 1
      %p529 = scmp.eq.s32.totalorder %s37, 1
      %p530 = scmp.ne.s32.totalorder %s525, %s527
      %p531 = scmp.eq.s32.totalorder %s37, 0
      %p532 = por %p530, %p531
      %p533 = scmp.ne.s32.totalorder %s525, %s527
      %p534 = scmp.eq.s32.totalorder %s42, 1
      %p535 = por %p533, %p534
      %p536 = scmp.ne.s32.totalorder %s527, %s528
      %p537 = scmp.eq.s32.totalorder %s42, 0
      %p538 = por %p536, %p537
      %p539 = scmp.ne.s32.totalorder %s527, %s528
      %p540 = scmp.eq.s32.totalorder %s43, 1
      %p541 = por %p539, %p540
      %p543 = scmp.ne.s32.totalorder %s528, %s542
      %p544 = scmp.eq.s32.totalorder %s43, 0
      %p545 = por %p543, %p544
      %s547 = sadd.s32 %s546, 1
      %p550 = scmp.eq.s32.totalorder %s37, 1
      %p551 = scmp.ne.s32.totalorder %s546, %s548
      %p552 = scmp.eq.s32.totalorder %s37, 0
      %p553 = por %p551, %p552
      %p554 = scmp.ne.s32.totalorder %s546, %s548
      %p555 = scmp.eq.s32.totalorder %s42, 1
      %p556 = por %p554, %p555
      %p557 = scmp.ne.s32.totalorder %s548, %s549
      %p558 = scmp.eq.s32.totalorder %s42, 0
      %p559 = por %p557, %p558
      %p560 = scmp.ne.s32.totalorder %s548, %s549
      %p561 = scmp.eq.s32.totalorder %s43, 1
      %p562 = por %p560, %p561
      %p564 = scmp.ne.s32.totalorder %s549, %s563
      %p565 = scmp.eq.s32.totalorder %s43, 0
      %p566 = por %p564, %p565
      %s568 = sadd.s32 %s567, 1
      %p571 = scmp.eq.s32.totalorder %s37, 1
      %p572 = scmp.ne.s32.totalorder %s567, %s569
      %p573 = scmp.eq.s32.totalorder %s37, 0
      %p574 = por %p572, %p573
      %p575 = scmp.ne.s32.totalorder %s567, %s569
      %p576 = scmp.eq.s32.totalorder %s42, 1
      %p577 = por %p575, %p576
      %p578 = scmp.ne.s32.totalorder %s569, %s570
      %p579 = scmp.eq.s32.totalorder %s42, 0
      %p580 = por %p578, %p579
      %p581 = scmp.ne.s32.totalorder %s569, %s570
      %p582 = scmp.eq.s32.totalorder %s43, 1
      %p583 = por %p581, %p582
      %p585 = scmp.ne.s32.totalorder %s570, %s584
      %p586 = scmp.eq.s32.totalorder %s43, 0
      %p587 = por %p585, %p586
      %s589 = sadd.s32 %s588, 1
      %p592 = scmp.eq.s32.totalorder %s37, 1
      %p593 = scmp.ne.s32.totalorder %s588, %s590
      %p594 = scmp.eq.s32.totalorder %s37, 0
      %p595 = por %p593, %p594
      %p596 = scmp.ne.s32.totalorder %s588, %s590
      %p597 = scmp.eq.s32.totalorder %s42, 1
      %p598 = por %p596, %p597
      %p599 = scmp.ne.s32.totalorder %s590, %s591
      %p600 = scmp.eq.s32.totalorder %s42, 0
      %p601 = por %p599, %p600
      %p602 = scmp.ne.s32.totalorder %s590, %s591
      %p603 = scmp.eq.s32.totalorder %s43, 1
      %p604 = por %p602, %p603
      %p606 = scmp.ne.s32.totalorder %s591, %s605
      %p607 = scmp.eq.s32.totalorder %s43, 0
      %p608 = por %p606, %p607
      %s610 = sadd.s32 %s609, 1
      %p613 = scmp.eq.s32.totalorder %s37, 1
      %p614 = scmp.ne.s32.totalorder %s609, %s611
      %p615 = scmp.eq.s32.totalorder %s37, 0
      %p616 = por %p614, %p615
      %p617 = scmp.ne.s32.totalorder %s609, %s611
      %p618 = scmp.eq.s32.totalorder %s42, 1
      %p619 = por %p617, %p618
      %p620 = scmp.ne.s32.totalorder %s611, %s612
      %p621 = scmp.eq.s32.totalorder %s42, 0
      %p622 = por %p620, %p621
      %p623 = scmp.ne.s32.totalorder %s611, %s612
      %p624 = scmp.eq.s32.totalorder %s43, 1
      %p625 = por %p623, %p624
      %p627 = scmp.ne.s32.totalorder %s612, %s626
      %p628 = scmp.eq.s32.totalorder %s43, 0
      %p629 = por %p627, %p628
      %p630 = scmp.le.s32.totalorder 1, %s37
      %p631 = scmp.lt.s32.totalorder %s37, 3
      %p632 = pnand %p630, %p631
      %p633 = pneg %p632
      // Predicated region
      $region9: #{clip_model_forward.1} parent=5 // pred_check
        _
      $region10: #{clip_model_forward.1} parent=5 // pred_check_branch
        %635 = sbr.rel (%p632) target = $region12
      $region11: #{clip_model_forward.1} parent=5 // pred_region
        %s636 = ssub.s32 %s37, 1
        // Predicated region
        $region13: #{clip_model_forward.1} parent=11 // pred_check
          %p637 = pneg %p58
        $region14: #{clip_model_forward.1} parent=11 // pred_check_branch
          %639 = sbr.rel (%p637) target = $region16
        $region15: #{clip_model_forward.1} parent=11 // pred_region
          _
        $region16: #{clip_model_forward.1} parent=11 // pred_fallthru
          _
        // Predicated region
        $region17: #{clip_model_forward.1} parent=11 // pred_check
          %p640 = pneg %p79
        $region18: #{clip_model_forward.1} parent=11 // pred_check_branch
          %642 = sbr.rel (%p640) target = $region20
        $region19: #{clip_model_forward.1} parent=11 // pred_region
          _
        $region20: #{clip_model_forward.1} parent=11 // pred_fallthru
          _
        // Predicated region
        $region21: #{clip_model_forward.1} parent=11 // pred_check
          %p643 = pneg %p100
        $region22: #{clip_model_forward.1} parent=11 // pred_check_branch
          %645 = sbr.rel (%p643) target = $region24
        $region23: #{clip_model_forward.1} parent=11 // pred_region
          _
        $region24: #{clip_model_forward.1} parent=11 // pred_fallthru
          _
        // Predicated region
        $region25: #{clip_model_forward.1} parent=11 // pred_check
          %p646 = pneg %p121
        $region26: #{clip_model_forward.1} parent=11 // pred_check_branch
          %648 = sbr.rel (%p646) target = $region28
        $region27: #{clip_model_forward.1} parent=11 // pred_region
          _
        $region28: #{clip_model_forward.1} parent=11 // pred_fallthru
          _
        // Predicated region
        $region29: #{clip_model_forward.1} parent=11 // pred_check
          %p649 = pneg %p142
        $region30: #{clip_model_forward.1} parent=11 // pred_check_branch
          %651 = sbr.rel (%p649) target = $region32
        $region31: #{clip_model_forward.1} parent=11 // pred_region
          %s653 = ssub.s32 16, 16
          %654 = vsyncadd [#allocation4], %s653
          %s656 = sshll.u32 [#allocation3], 4
          %s657 = int_to_ptr.vmem [resolvable:$true] %s656
          %659 = dma.hbm_to_vmem [thread:$0]  %s4, 16, %s657, [#allocation4]
        $region32: #{clip_model_forward.1} parent=11 // pred_fallthru
          _
        // Predicated region
        $region33: #{clip_model_forward.1} parent=11 // pred_check
          %p660 = pneg %p163
        $region34: #{clip_model_forward.1} parent=11 // pred_check_branch
          %662 = sbr.rel (%p660) target = $region36
        $region35: #{clip_model_forward.1} parent=11 // pred_region
          %s664 = ssub.s32 16, 16
          %665 = vsyncadd [#allocation7], %s664
          %s667 = sshll.u32 [#allocation6], 4
          %s668 = int_to_ptr.vmem [resolvable:$true] %s667
          %670 = dma.hbm_to_vmem [thread:$0]  %s5, 16, %s668, [#allocation7]
        $region36: #{clip_model_forward.1} parent=11 // pred_fallthru
          _
        // Predicated region
        $region37: #{clip_model_forward.1} parent=11 // pred_check
          %p671 = pneg %p496
        $region38: #{clip_model_forward.1} parent=11 // pred_check_branch
          %673 = sbr.rel (%p671) target = $region40
        $region39: #{clip_model_forward.1} parent=11 // pred_region
          %s675 = ssub.s32 16, 16
          %676 = vsyncadd [#allocation7], %s675
          %s678 = sshll.u32 [#allocation18], 4
          %s679 = int_to_ptr.vmem [resolvable:$true] %s678
          %681 = dma.hbm_to_vmem [thread:$0]  %s18, 16, %s679, [#allocation7]
        $region40: #{clip_model_forward.1} parent=11 // pred_fallthru
          _
        // Predicated region
        $region41: #{clip_model_forward.1} parent=11 // pred_check
          %p682 = pneg %p517
        $region42: #{clip_model_forward.1} parent=11 // pred_check_branch
          %684 = sbr.rel (%p682) target = $region44
        $region43: #{clip_model_forward.1} parent=11 // pred_region
          %s686 = ssub.s32 16, 16
          %687 = vsyncadd [#allocation20], %s686
          %s689 = sshll.u32 [#allocation19], 4
          %s690 = int_to_ptr.vmem [resolvable:$true] %s689
          %692 = dma.hbm_to_vmem [thread:$0]  %s19, 16, %s690, [#allocation20]
        $region44: #{clip_model_forward.1} parent=11 // pred_fallthru
          _
        // Predicated region
        $region45: #{clip_model_forward.1} parent=11 // pred_check
          %p693 = pneg %p538
        $region46: #{clip_model_forward.1} parent=11 // pred_check_branch
          %695 = sbr.rel (%p693) target = $region48
        $region47: #{clip_model_forward.1} parent=11 // pred_region
          %s697 = ssub.s32 1024, 1024
          %698 = vsyncadd [#allocation20], %s697
          %s699 = sshll.u32 [#allocation21], 4
          %s700 = int_to_ptr.vmem [resolvable:$true] %s699
          %705 = dma.hbm_to_vmem [thread:$0]  %s20, 1024, %s700, [#allocation20], 64, 64, 4
        $region48: #{clip_model_forward.1} parent=11 // pred_fallthru
          _
        // Predicated region
        $region49: #{clip_model_forward.1} parent=11 // pred_check
          %p706 = pneg %p559
        $region50: #{clip_model_forward.1} parent=11 // pred_check_branch
          %708 = sbr.rel (%p706) target = $region52
        $region51: #{clip_model_forward.1} parent=11 // pred_region
          %s710 = ssub.s32 2048, 2048
          %711 = vsyncadd [#allocation23], %s710
          %s712 = sshll.u32 [#allocation22], 4
          %s713 = int_to_ptr.vmem [resolvable:$true] %s712
          %718 = dma.hbm_to_vmem [thread:$0]  %s21, 2048, %s713, [#allocation23], 128, 128, 8
        $region52: #{clip_model_forward.1} parent=11 // pred_fallthru
          _
        // Predicated region
        $region53: #{clip_model_forward.1} parent=11 // pred_check
          %p719 = pneg %p580
        $region54: #{clip_model_forward.1} parent=11 // pred_check_branch
          %721 = sbr.rel (%p719) target = $region56
        $region55: #{clip_model_forward.1} parent=11 // pred_region
          %s723 = ssub.s32 32, 32
          %724 = vsyncadd [#allocation23], %s723
          %s726 = sshll.u32 [#allocation24], 4
          %s727 = int_to_ptr.vmem [resolvable:$true] %s726
          %729 = dma.hbm_to_vmem [thread:$0]  %s22, 32, %s727, [#allocation23]
        $region56: #{clip_model_forward.1} parent=11 // pred_fallthru
          _
      $region12: #{clip_model_forward.1} parent=5 // pred_fallthru
        _
      %p730 = scmp.lt.s32.totalorder %s37, 2
      // Predicated region
      $region57: #{clip_model_forward.1} parent=5 // pred_check
        %p731 = pneg %p730
      $region58: #{clip_model_forward.1} parent=5 // pred_check_branch
        %733 = sbr.rel (%p731) target = $region60
      $region59: #{clip_model_forward.1} parent=5 // pred_region
        // Predicated region
        $region61: #{clip_model_forward.1} parent=59 // pred_check
          %p734 = pneg %p183
        $region62: #{clip_model_forward.1} parent=59 // pred_check_branch
          %736 = sbr.rel (%p734) target = $region64
        $region63: #{clip_model_forward.1} parent=59 // pred_region
          %s737 = sand.u32 %s37, 1
          %s738 = scalar_lea.sflag [#allocation4], %s737
          %s739 = sand.u32 %s173, 1
          %s740 = scalar_lea.vmem [#allocation8], %s739
          %s742 = ssub.s32 16, 16
          %743 = vsyncadd %s738, %s742
          %s744 = smul.addr %s37, 16
          %s745 = scalar_lea.hbm %s6, %s744
          %s747 = sshll.u32 %s740, 4
          %s748 = int_to_ptr.vmem [resolvable:$true] %s747
          %750 = dma.hbm_to_vmem [thread:$0]  %s745, 16, %s748, %s738
        $region64: #{clip_model_forward.1} parent=59 // pred_fallthru
          _
        // Predicated region
        $region65: #{clip_model_forward.1} parent=59 // pred_check
          %p751 = pneg %p209
        $region66: #{clip_model_forward.1} parent=59 // pred_check_branch
          %753 = sbr.rel (%p751) target = $region68
        $region67: #{clip_model_forward.1} parent=59 // pred_region
          %s754 = sand.u32 %s37, 1
          %s755 = scalar_lea.sflag [#allocation4], %s754
          %s756 = sand.u32 %s199, 1
          %s757 = scalar_lea.vmem [#allocation9], %s756
          %s759 = ssub.s32 16, 16
          %760 = vsyncadd %s755, %s759
          %s761 = smul.addr %s37, 16
          %s762 = scalar_lea.hbm %s7, %s761
          %s764 = sshll.u32 %s757, 4
          %s765 = int_to_ptr.vmem [resolvable:$true] %s764
          %767 = dma.hbm_to_vmem [thread:$0]  %s762, 16, %s765, %s755
        $region68: #{clip_model_forward.1} parent=59 // pred_fallthru
          _
        // Predicated region
        $region69: #{clip_model_forward.1} parent=59 // pred_check
          %p768 = pneg %p235
        $region70: #{clip_model_forward.1} parent=59 // pred_check_branch
          %770 = sbr.rel (%p768) target = $region72
        $region71: #{clip_model_forward.1} parent=59 // pred_region
          %s771 = sand.u32 %s37, 1
          %s772 = scalar_lea.sflag [#allocation4], %s771
          %s773 = sand.u32 %s225, 1
          %s774 = smul.addr %s773, 192
          %s775 = scalar_lea.vmem [#allocation10], %s774
          %s777 = ssub.s32 3072, 3072
          %778 = vsyncadd %s772, %s777
          %s779 = smul.addr %s37, 48
          %s780 = smul.addr %s779, 64
          %s781 = scalar_lea.hbm %s8, %s780
          %s782 = sshll.u32 %s775, 4
          %s783 = int_to_ptr.vmem [resolvable:$true] %s782
          %788 = dma.hbm_to_vmem [thread:$0]  %s781, 3072, %s783, %s772, 192, 192, 12
        $region72: #{clip_model_forward.1} parent=59 // pred_fallthru
          _
        // Predicated region
        $region73: #{clip_model_forward.1} parent=59 // pred_check
          %p789 = pneg %p261
        $region74: #{clip_model_forward.1} parent=59 // pred_check_branch
          %791 = sbr.rel (%p789) target = $region76
        $region75: #{clip_model_forward.1} parent=59 // pred_region
          %s792 = sand.u32 %s37, 1
          %s793 = scalar_lea.sflag [#allocation4], %s792
          %s794 = sand.u32 %s251, 1
          %s795 = smul.addr %s794, 3
          %s796 = scalar_lea.vmem [#allocation11], %s795
          %s798 = ssub.s32 48, 48
          %799 = vsyncadd %s793, %s798
          %s800 = smul.addr %s37, 3
          %s801 = smul.addr %s800, 16
          %s802 = scalar_lea.hbm %s9, %s801
          %s804 = sshll.u32 %s796, 4
          %s805 = int_to_ptr.vmem [resolvable:$true] %s804
          %807 = dma.hbm_to_vmem [thread:$0]  %s802, 48, %s805, %s793
        $region76: #{clip_model_forward.1} parent=59 // pred_fallthru
          _
        // Predicated region
        $region77: #{clip_model_forward.1} parent=59 // pred_check
          %p808 = pneg %p287
        $region78: #{clip_model_forward.1} parent=59 // pred_check_branch
          %810 = sbr.rel (%p808) target = $region80
        $region79: #{clip_model_forward.1} parent=59 // pred_region
          %s811 = sand.u32 %s37, 1
          %s812 = scalar_lea.sflag [#allocation4], %s811
          %s813 = sand.u32 %s277, 1
          %s814 = smul.addr %s813, 64
          %s815 = scalar_lea.vmem [#allocation12], %s814
          %s817 = ssub.s32 1024, 1024
          %818 = vsyncadd %s812, %s817
          %s819 = smul.addr %s37, 16
          %s820 = smul.addr %s819, 64
          %s821 = scalar_lea.hbm %s10, %s820
          %s822 = sshll.u32 %s815, 4
          %s823 = int_to_ptr.vmem [resolvable:$true] %s822
          %828 = dma.hbm_to_vmem [thread:$0]  %s821, 1024, %s823, %s812, 64, 64, 4
        $region80: #{clip_model_forward.1} parent=59 // pred_fallthru
          _
        // Predicated region
        $region81: #{clip_model_forward.1} parent=59 // pred_check
          %p829 = pneg %p313
        $region82: #{clip_model_forward.1} parent=59 // pred_check_branch
          %831 = sbr.rel (%p829) target = $region84
        $region83: #{clip_model_forward.1} parent=59 // pred_region
          %p832 = scmp.lt.s32.totalorder %s37, 1
          %s833 = scalar_select %p832, %s37, 1
          %s834 = scalar_lea.vmem %s11, %s833
        $region84: #{clip_model_forward.1} parent=59 // pred_fallthru
          _
        // Predicated region
        $region85: #{clip_model_forward.1} parent=59 // pred_check
          %p835 = pneg %p339
        $region86: #{clip_model_forward.1} parent=59 // pred_check_branch
          %837 = sbr.rel (%p835) target = $region88
        $region87: #{clip_model_forward.1} parent=59 // pred_region
          %s838 = sand.u32 %s37, 1
          %s839 = scalar_lea.sflag [#allocation4], %s838
          %s840 = sand.u32 %s329, 1
          %s841 = scalar_lea.vmem [#allocation13], %s840
          %s843 = ssub.s32 16, 16
          %844 = vsyncadd %s839, %s843
          %s845 = smul.addr %s37, 16
          %s846 = scalar_lea.hbm %s12, %s845
          %s848 = sshll.u32 %s841, 4
          %s849 = int_to_ptr.vmem [resolvable:$true] %s848
          %851 = dma.hbm_to_vmem [thread:$0]  %s846, 16, %s849, %s839
        $region88: #{clip_model_forward.1} parent=59 // pred_fallthru
          _
        // Predicated region
        $region89: #{clip_model_forward.1} parent=59 // pred_check
          %p852 = pneg %p365
        $region90: #{clip_model_forward.1} parent=59 // pred_check_branch
          %854 = sbr.rel (%p852) target = $region92
        $region91: #{clip_model_forward.1} parent=59 // pred_region
          %s855 = sand.u32 %s37, 1
          %s856 = scalar_lea.sflag [#allocation4], %s855
          %s857 = sand.u32 %s355, 1
          %s858 = scalar_lea.vmem [#allocation14], %s857
          %s860 = ssub.s32 16, 16
          %861 = vsyncadd %s856, %s860
          %s862 = smul.addr %s37, 16
          %s863 = scalar_lea.hbm %s13, %s862
          %s865 = sshll.u32 %s858, 4
          %s866 = int_to_ptr.vmem [resolvable:$true] %s865
          %868 = dma.hbm_to_vmem [thread:$0]  %s863, 16, %s866, %s856
        $region92: #{clip_model_forward.1} parent=59 // pred_fallthru
          _
        // Predicated region
        $region93: #{clip_model_forward.1} parent=59 // pred_check
          %p869 = pneg %p391
        $region94: #{clip_model_forward.1} parent=59 // pred_check_branch
          %871 = sbr.rel (%p869) target = $region96
        $region95: #{clip_model_forward.1} parent=59 // pred_region
          %p872 = scmp.lt.s32.totalorder %s37, 1
          %s873 = scalar_select %p872, %s37, 1
          %s874 = smul.addr %s873, 64
          %s875 = smul.addr %s874, 4
          %s876 = scalar_lea.vmem %s14, %s875
        $region96: #{clip_model_forward.1} parent=59 // pred_fallthru
          _
        // Predicated region
        $region97: #{clip_model_forward.1} parent=59 // pred_check
          %p877 = pneg %p417
        $region98: #{clip_model_forward.1} parent=59 // pred_check_branch
          %879 = sbr.rel (%p877) target = $region100
        $region99: #{clip_model_forward.1} parent=59 // pred_region
          %s880 = sand.u32 %s37, 1
          %s881 = scalar_lea.sflag [#allocation4], %s880
          %s882 = sand.u32 %s407, 1
          %s883 = smul.addr %s882, 4
          %s884 = scalar_lea.vmem [#allocation15], %s883
          %s886 = ssub.s32 64, 64
          %887 = vsyncadd %s881, %s886
          %s888 = smul.addr %s37, 4
          %s889 = smul.addr %s888, 16
          %s890 = scalar_lea.hbm %s15, %s889
          %s892 = sshll.u32 %s884, 4
          %s893 = int_to_ptr.vmem [resolvable:$true] %s892
          %895 = dma.hbm_to_vmem [thread:$0]  %s890, 64, %s893, %s881
        $region100: #{clip_model_forward.1} parent=59 // pred_fallthru
          _
        // Predicated region
        $region101: #{clip_model_forward.1} parent=59 // pred_check
          %p896 = pneg %p443
        $region102: #{clip_model_forward.1} parent=59 // pred_check_branch
          %898 = sbr.rel (%p896) target = $region104
        $region103: #{clip_model_forward.1} parent=59 // pred_region
          %s899 = sand.u32 %s37, 1
          %s900 = scalar_lea.sflag [#allocation4], %s899
          %s901 = sand.u32 %s433, 1
          %s902 = smul.addr %s901, 256
          %s903 = scalar_lea.vmem [#allocation16], %s902
          %s905 = ssub.s32 4096, 4096
          %906 = vsyncadd %s900, %s905
          %s907 = smul.addr %s37, 64
          %s908 = smul.addr %s907, 64
          %s909 = scalar_lea.hbm %s16, %s908
          %s910 = sshll.u32 %s903, 4
          %s911 = int_to_ptr.vmem [resolvable:$true] %s910
          %916 = dma.hbm_to_vmem [thread:$0]  %s909, 4096, %s911, %s900, 64, 64, 4
        $region104: #{clip_model_forward.1} parent=59 // pred_fallthru
          _
        // Predicated region
        $region105: #{clip_model_forward.1} parent=59 // pred_check
          %p917 = pneg %p469
        $region106: #{clip_model_forward.1} parent=59 // pred_check_branch
          %919 = sbr.rel (%p917) target = $region108
        $region107: #{clip_model_forward.1} parent=59 // pred_region
          %s920 = sand.u32 %s37, 1
          %s921 = scalar_lea.sflag [#allocation4], %s920
          %s922 = sand.u32 %s459, 1
          %s923 = scalar_lea.vmem [#allocation17], %s922
          %s925 = ssub.s32 16, 16
          %926 = vsyncadd %s921, %s925
          %s927 = smul.addr %s37, 16
          %s928 = scalar_lea.hbm %s17, %s927
          %s930 = sshll.u32 %s923, 4
          %s931 = int_to_ptr.vmem [resolvable:$true] %s930
          %933 = dma.hbm_to_vmem [thread:$0]  %s928, 16, %s931, %s921
        $region108: #{clip_model_forward.1} parent=59 // pred_fallthru
          _
      $region60: #{clip_model_forward.1} parent=5 // pred_fallthru
        _
      %p934 = scmp.le.s32.totalorder 1, %s37
      %p935 = scmp.lt.s32.totalorder %s37, 3
      %p936 = pnand %p934, %p935
      %p937 = pneg %p936
      // Predicated region
      $region109: #{clip_model_forward.1} parent=5 // pred_check
        _
      $region110: #{clip_model_forward.1} parent=5 // pred_check_branch
        %939 = sbr.rel (%p936) target = $region112
      $region111: #{clip_model_forward.1} parent=5 // pred_region
        %s940 = ssub.s32 %s37, 1
        // Predicated region
        $region113: #{clip_model_forward.1} parent=111 // pred_check
          %p941 = pneg %p142
        $region114: #{clip_model_forward.1} parent=111 // pred_check_branch
          %943 = sbr.rel (%p941) target = $region116
        $region115: #{clip_model_forward.1} parent=111 // pred_region
          %944 = dma.done [#allocation4], 16
        $region116: #{clip_model_forward.1} parent=111 // pred_fallthru
          _
        // Predicated region
        $region117: #{clip_model_forward.1} parent=111 // pred_check
          %p945 = pneg %p163
        $region118: #{clip_model_forward.1} parent=111 // pred_check_branch
          %947 = sbr.rel (%p945) target = $region120
        $region119: #{clip_model_forward.1} parent=111 // pred_region
          %948 = dma.done [#allocation7], 16
        $region120: #{clip_model_forward.1} parent=111 // pred_fallthru
          _
        %s949 = sand.u32 %s42, 1
        %s950 = scalar_lea.sflag [#allocation4], %s949
        %s951 = sand.u32 %s176, 1
        %s952 = scalar_lea.vmem [#allocation8], %s951
        // Predicated region
        $region121: #{clip_model_forward.1} parent=111 // pred_check
          %p953 = pneg %p189
        $region122: #{clip_model_forward.1} parent=111 // pred_check_branch
          %955 = sbr.rel (%p953) target = $region124
        $region123: #{clip_model_forward.1} parent=111 // pred_region
          %956 = dma.done %s950, 16
        $region124: #{clip_model_forward.1} parent=111 // pred_fallthru
          _
        %s957 = sand.u32 %s42, 1
        %s958 = scalar_lea.sflag [#allocation4], %s957
        %s959 = sand.u32 %s202, 1
        %s960 = scalar_lea.vmem [#allocation9], %s959
        // Predicated region
        $region125: #{clip_model_forward.1} parent=111 // pred_check
          %p961 = pneg %p215
        $region126: #{clip_model_forward.1} parent=111 // pred_check_branch
          %963 = sbr.rel (%p961) target = $region128
        $region127: #{clip_model_forward.1} parent=111 // pred_region
          %964 = dma.done %s958, 16
        $region128: #{clip_model_forward.1} parent=111 // pred_fallthru
          _
        %s965 = sand.u32 %s42, 1
        %s966 = scalar_lea.sflag [#allocation4], %s965
        %s967 = sand.u32 %s228, 1
        %s968 = smul.addr %s967, 192
        %s969 = scalar_lea.vmem [#allocation10], %s968
        // Predicated region
        $region129: #{clip_model_forward.1} parent=111 // pred_check
          %p970 = pneg %p241
        $region130: #{clip_model_forward.1} parent=111 // pred_check_branch
          %972 = sbr.rel (%p970) target = $region132
        $region131: #{clip_model_forward.1} parent=111 // pred_region
          %973 = dma.done %s966, 3072
        $region132: #{clip_model_forward.1} parent=111 // pred_fallthru
          _
        %s974 = sand.u32 %s42, 1
        %s975 = scalar_lea.sflag [#allocation4], %s974
        %s976 = sand.u32 %s254, 1
        %s977 = smul.addr %s976, 3
        %s978 = scalar_lea.vmem [#allocation11], %s977
        // Predicated region
        $region133: #{clip_model_forward.1} parent=111 // pred_check
          %p979 = pneg %p267
        $region134: #{clip_model_forward.1} parent=111 // pred_check_branch
          %981 = sbr.rel (%p979) target = $region136
        $region135: #{clip_model_forward.1} parent=111 // pred_region
          %982 = dma.done %s975, 48
        $region136: #{clip_model_forward.1} parent=111 // pred_fallthru
          _
        %s983 = sand.u32 %s42, 1
        %s984 = scalar_lea.sflag [#allocation4], %s983
        %s985 = sand.u32 %s280, 1
        %s986 = smul.addr %s985, 64
        %s987 = scalar_lea.vmem [#allocation12], %s986
        // Predicated region
        $region137: #{clip_model_forward.1} parent=111 // pred_check
          %p988 = pneg %p293
        $region138: #{clip_model_forward.1} parent=111 // pred_check_branch
          %990 = sbr.rel (%p988) target = $region140
        $region139: #{clip_model_forward.1} parent=111 // pred_region
          %991 = dma.done %s984, 1024
        $region140: #{clip_model_forward.1} parent=111 // pred_fallthru
          _
        %s992 = sand.u32 %s42, 1
        %s993 = scalar_lea.sflag [#allocation4], %s992
        %s994 = sand.u32 %s332, 1
        %s995 = scalar_lea.vmem [#allocation13], %s994
        // Predicated region
        $region141: #{clip_model_forward.1} parent=111 // pred_check
          %p996 = pneg %p345
        $region142: #{clip_model_forward.1} parent=111 // pred_check_branch
          %998 = sbr.rel (%p996) target = $region144
        $region143: #{clip_model_forward.1} parent=111 // pred_region
          %999 = dma.done %s993, 16
        $region144: #{clip_model_forward.1} parent=111 // pred_fallthru
          _
        %s1000 = sand.u32 %s42, 1
        %s1001 = scalar_lea.sflag [#allocation4], %s1000
        %s1002 = sand.u32 %s358, 1
        %s1003 = scalar_lea.vmem [#allocation14], %s1002
        // Predicated region
        $region145: #{clip_model_forward.1} parent=111 // pred_check
          %p1004 = pneg %p371
        $region146: #{clip_model_forward.1} parent=111 // pred_check_branch
          %1006 = sbr.rel (%p1004) target = $region148
        $region147: #{clip_model_forward.1} parent=111 // pred_region
          %1007 = dma.done %s1001, 16
        $region148: #{clip_model_forward.1} parent=111 // pred_fallthru
          _
        %s1008 = sand.u32 %s42, 1
        %s1009 = scalar_lea.sflag [#allocation4], %s1008
        %s1010 = sand.u32 %s410, 1
        %s1011 = smul.addr %s1010, 4
        %s1012 = scalar_lea.vmem [#allocation15], %s1011
        // Predicated region
        $region149: #{clip_model_forward.1} parent=111 // pred_check
          %p1013 = pneg %p423
        $region150: #{clip_model_forward.1} parent=111 // pred_check_branch
          %1015 = sbr.rel (%p1013) target = $region152
        $region151: #{clip_model_forward.1} parent=111 // pred_region
          %1016 = dma.done %s1009, 64
        $region152: #{clip_model_forward.1} parent=111 // pred_fallthru
          _
        %s1017 = sand.u32 %s42, 1
        %s1018 = scalar_lea.sflag [#allocation4], %s1017
        %s1019 = sand.u32 %s436, 1
        %s1020 = smul.addr %s1019, 256
        %s1021 = scalar_lea.vmem [#allocation16], %s1020
        // Predicated region
        $region153: #{clip_model_forward.1} parent=111 // pred_check
          %p1022 = pneg %p449
        $region154: #{clip_model_forward.1} parent=111 // pred_check_branch
          %1024 = sbr.rel (%p1022) target = $region156
        $region155: #{clip_model_forward.1} parent=111 // pred_region
          %1025 = dma.done %s1018, 4096
        $region156: #{clip_model_forward.1} parent=111 // pred_fallthru
          _
        %s1026 = sand.u32 %s42, 1
        %s1027 = scalar_lea.sflag [#allocation4], %s1026
        %s1028 = sand.u32 %s462, 1
        %s1029 = scalar_lea.vmem [#allocation17], %s1028
        // Predicated region
        $region157: #{clip_model_forward.1} parent=111 // pred_check
          %p1030 = pneg %p475
        $region158: #{clip_model_forward.1} parent=111 // pred_check_branch
          %1032 = sbr.rel (%p1030) target = $region160
        $region159: #{clip_model_forward.1} parent=111 // pred_region
          %1033 = dma.done %s1027, 16
        $region160: #{clip_model_forward.1} parent=111 // pred_fallthru
          _
        // Predicated region
        $region161: #{clip_model_forward.1} parent=111 // pred_check
          %p1034 = pneg %p496
        $region162: #{clip_model_forward.1} parent=111 // pred_check_branch
          %1036 = sbr.rel (%p1034) target = $region164
        $region163: #{clip_model_forward.1} parent=111 // pred_region
          %1037 = dma.done [#allocation7], 16
        $region164: #{clip_model_forward.1} parent=111 // pred_fallthru
          _
        // Predicated region
        $region165: #{clip_model_forward.1} parent=111 // pred_check
          %p1038 = pneg %p517
        $region166: #{clip_model_forward.1} parent=111 // pred_check_branch
          %1040 = sbr.rel (%p1038) target = $region168
        $region167: #{clip_model_forward.1} parent=111 // pred_region
          %1041 = dma.done [#allocation20], 16
        $region168: #{clip_model_forward.1} parent=111 // pred_fallthru
          _
        // Predicated region
        $region169: #{clip_model_forward.1} parent=111 // pred_check
          %p1042 = pneg %p538
        $region170: #{clip_model_forward.1} parent=111 // pred_check_branch
          %1044 = sbr.rel (%p1042) target = $region172
        $region171: #{clip_model_forward.1} parent=111 // pred_region
          %1045 = dma.done [#allocation20], 1024
        $region172: #{clip_model_forward.1} parent=111 // pred_fallthru
          _
        // Predicated region
        $region173: #{clip_model_forward.1} parent=111 // pred_check
          %p1046 = pneg %p559
        $region174: #{clip_model_forward.1} parent=111 // pred_check_branch
          %1048 = sbr.rel (%p1046) target = $region176
        $region175: #{clip_model_forward.1} parent=111 // pred_region
          %1049 = dma.done [#allocation23], 2048
        $region176: #{clip_model_forward.1} parent=111 // pred_fallthru
          _
        // Predicated region
        $region177: #{clip_model_forward.1} parent=111 // pred_check
          %p1050 = pneg %p580
        $region178: #{clip_model_forward.1} parent=111 // pred_check_branch
          %1052 = sbr.rel (%p1050) target = $region180
        $region179: #{clip_model_forward.1} parent=111 // pred_region
          %1053 = dma.done [#allocation23], 32
        $region180: #{clip_model_forward.1} parent=111 // pred_fallthru
          _
        %p1054 = pneg %p58
        %p1055 = pneg %p55
        %p1056 = pneg %p79
        %p1057 = pneg %p76
        %p1058 = pneg %p100
        %p1059 = pneg %p97
        %p1060 = pneg %p121
        %p1061 = pneg %p118
        %p1062 = pneg %p142
        %p1063 = pneg %p139
        %p1064 = pneg %p163
        %p1065 = pneg %p160
        %s1066 = sand.u32 %s42, 1
        %s1067 = scalar_lea.sflag [#allocation4], %s1066
        %s1068 = sand.u32 %s176, 1
        %s1069 = scalar_lea.vmem [#allocation8], %s1068
        %p1070 = pneg %p189
        %p1071 = pneg %p186
        %s1072 = sand.u32 %s42, 1
        %s1073 = scalar_lea.sflag [#allocation4], %s1072
        %s1074 = sand.u32 %s202, 1
        %s1075 = scalar_lea.vmem [#allocation9], %s1074
        %p1076 = pneg %p215
        %p1077 = pneg %p212
        %s1078 = sand.u32 %s42, 1
        %s1079 = scalar_lea.sflag [#allocation4], %s1078
        %s1080 = sand.u32 %s228, 1
        %s1081 = smul.addr %s1080, 192
        %s1082 = scalar_lea.vmem [#allocation10], %s1081
        %p1083 = pneg %p241
        %p1084 = pneg %p238
        %s1085 = sand.u32 %s42, 1
        %s1086 = scalar_lea.sflag [#allocation4], %s1085
        %s1087 = sand.u32 %s254, 1
        %s1088 = smul.addr %s1087, 3
        %s1089 = scalar_lea.vmem [#allocation11], %s1088
        %p1090 = pneg %p267
        %p1091 = pneg %p264
        %s1092 = sand.u32 %s42, 1
        %s1093 = scalar_lea.sflag [#allocation4], %s1092
        %s1094 = sand.u32 %s280, 1
        %s1095 = smul.addr %s1094, 64
        %s1096 = scalar_lea.vmem [#allocation12], %s1095
        %p1097 = pneg %p293
        %p1098 = pneg %p290
        %p1099 = scmp.lt.s32.totalorder %s42, 1
        %s1100 = scalar_select %p1099, %s42, 1
        %s1101 = scalar_lea.vmem %s11, %s1100
        %p1102 = pneg %p319
        %p1103 = pneg %p316
        %s1104 = sand.u32 %s42, 1
        %s1105 = scalar_lea.sflag [#allocation4], %s1104
        %s1106 = sand.u32 %s332, 1
        %s1107 = scalar_lea.vmem [#allocation13], %s1106
        %p1108 = pneg %p345
        %p1109 = pneg %p342
        %s1110 = sand.u32 %s42, 1
        %s1111 = scalar_lea.sflag [#allocation4], %s1110
        %s1112 = sand.u32 %s358, 1
        %s1113 = scalar_lea.vmem [#allocation14], %s1112
        %p1114 = pneg %p371
        %p1115 = pneg %p368
        %p1116 = scmp.lt.s32.totalorder %s42, 1
        %s1117 = scalar_select %p1116, %s42, 1
        %s1118 = smul.addr %s1117, 64
        %s1119 = smul.addr %s1118, 4
        %s1120 = scalar_lea.vmem %s14, %s1119
        %p1121 = pneg %p397
        %p1122 = pneg %p394
        %s1123 = sand.u32 %s42, 1
        %s1124 = scalar_lea.sflag [#allocation4], %s1123
        %s1125 = sand.u32 %s410, 1
        %s1126 = smul.addr %s1125, 4
        %s1127 = scalar_lea.vmem [#allocation15], %s1126
        %p1128 = pneg %p423
        %p1129 = pneg %p420
        %s1130 = sand.u32 %s42, 1
        %s1131 = scalar_lea.sflag [#allocation4], %s1130
        %s1132 = sand.u32 %s436, 1
        %s1133 = smul.addr %s1132, 256
        %s1134 = scalar_lea.vmem [#allocation16], %s1133
        %p1135 = pneg %p449
        %p1136 = pneg %p446
        %s1137 = sand.u32 %s42, 1
        %s1138 = scalar_lea.sflag [#allocation4], %s1137
        %s1139 = sand.u32 %s462, 1
        %s1140 = scalar_lea.vmem [#allocation17], %s1139
        %p1141 = pneg %p475
        %p1142 = pneg %p472
        %p1143 = pneg %p496
        %p1144 = pneg %p493
        %p1145 = pneg %p517
        %p1146 = pneg %p514
        %p1147 = pneg %p538
        %p1148 = pneg %p535
        %p1149 = pneg %p559
        %p1150 = pneg %p556
        %p1151 = pneg %p580
        %p1152 = pneg %p577
        %p1153 = pneg %p601
        %p1154 = pneg %p598
        %p1155 = pneg %p622
        %p1156 = pneg %p619
        %p1157 = scmp.lt.s32.totalorder %s42, 1
        %s1158 = scalar_select %p1157, %s42, 1
        %s1159 = scalar_lea.vmem %s11, %s1158
        %p1160 = scmp.lt.s32.totalorder %s42, 1
        %s1161 = scalar_select %p1160, %s42, 1
        %s1162 = smul.addr %s1161, 64
        %s1163 = smul.addr %s1162, 4
        %s1164 = scalar_lea.vmem %s14, %s1163
        %p1166 = scmp.eq.s32.totalorder %s42, 0
        // Predicated region
        $region181: #{clip_model_forward.1} parent=111 // pred_check
          %p1167 = pneg %p1166
        $region182: #{clip_model_forward.1} parent=111 // pred_check_branch
          %1169 = sbr.rel (%p1167) target = $region184
        $region183: #{clip_model_forward.1} parent=111 // pred_region
          %v1170 = vld [vmem:[%s0] sm:$0xff]
          %v1171 = vld [vmem:[%s0 + $0x8] sm:$0xff]
          %v1172 = vld [vmem:[%s1] sm:$0xf]
          %v1173 = vld [vmem:[%s1 + $0x4] sm:$0xf]
          %v1174 = vld [vmem:[%s1 + $0x8] sm:$0xf]
          %v1175 = vld [vmem:[%s1 + $0xc] sm:$0xf]
          %v1176 = vld [vmem:[%s1 + $0x10] sm:$0xf]
          %v1177 = vld [vmem:[%s1 + $0x14] sm:$0xf]
          %v1178 = vld [vmem:[%s1 + $0x18] sm:$0xf]
          %v1179 = vld [vmem:[%s1 + $0x1c] sm:$0xf]
          %v1180 = vld [vmem:[%s1 + $0x20] sm:$0xf]
          %v1181 = vld [vmem:[%s1 + $0x24] sm:$0xf]
          %v1182 = vld [vmem:[%s1 + $0x28] sm:$0xf]
          %v1183 = vld [vmem:[%s1 + $0x2c] sm:$0xf]
          %v1184 = vld [vmem:[%s1 + $0x30] sm:$0xf]
          %v1185 = vld [vmem:[%s1 + $0x34] sm:$0xf]
          %v1186 = vld [vmem:[%s1 + $0x38] sm:$0xf]
          %v1187 = vld [vmem:[%s1 + $0x3c] sm:$0xf]
          %v1188 = vld [vmem:[%s1 + $0x40] sm:$0xf]
          %v1189 = vld [vmem:[%s1 + $0x44] sm:$0xf]
          %v1190 = vld [vmem:[%s1 + $0x48] sm:$0xf]
          %v1191 = vld [vmem:[%s1 + $0x4c] sm:$0xf]
          %v1192 = vld [vmem:[%s1 + $0x50] sm:$0xf]
          %v1193 = vld [vmem:[%s1 + $0x54] sm:$0xf]
          %v1194 = vld [vmem:[%s1 + $0x58] sm:$0xf]
          %v1195 = vld [vmem:[%s1 + $0x5c] sm:$0xf]
          %v1196 = vld [vmem:[%s1 + $0x60] sm:$0xf]
          %v1197 = vld [vmem:[%s1 + $0x64] sm:$0xf]
          %v1198 = vld [vmem:[%s1 + $0x68] sm:$0xf]
          %v1199 = vld [vmem:[%s1 + $0x6c] sm:$0xf]
          %v1200 = vld [vmem:[%s1 + $0x70] sm:$0xf]
          %v1201 = vld [vmem:[%s1 + $0x74] sm:$0xf]
          %v1202 = vld [vmem:[%s1 + $0x78] sm:$0xf]
          %v1203 = vld [vmem:[%s1 + $0x7c] sm:$0xf]
          %v1204 = vld [vmem:[%s2] sm:$0xff]
          %v1205 = vld [vmem:[%s2 + $0x8] sm:$0xff]
          %v1208 = vunpack.c.l.b16 %v1170
          %v1209 = vunpack.c.h.b16 %v1170
          %v1210 = vunpack.c.l.b16 %v1171
          %v1211 = vunpack.c.h.b16 %v1171
          %v1212 = vpack.c.b16 %v1210, %v1208
          %v1213 = vpack.c.b16 %v1211, %v1209
          %v1248 = vunpack.c.l.b16 %v1172
          %v1249 = vunpack.c.l.b16 %v1173
          %v1250 = vunpack.c.l.b16 %v1174
          %v1251 = vunpack.c.l.b16 %v1175
          %v1252 = vunpack.c.l.b16 %v1176
          %v1253 = vunpack.c.l.b16 %v1177
          %v1254 = vunpack.c.l.b16 %v1178
          %v1255 = vunpack.c.l.b16 %v1179
          %v1256 = vunpack.c.l.b16 %v1180
          %v1257 = vunpack.c.l.b16 %v1181
          %v1258 = vunpack.c.l.b16 %v1182
          %v1259 = vunpack.c.l.b16 %v1183
          %v1260 = vunpack.c.l.b16 %v1184
          %v1261 = vunpack.c.l.b16 %v1185
          %v1262 = vunpack.c.l.b16 %v1186
          %v1263 = vunpack.c.l.b16 %v1187
          %v1264 = vunpack.c.l.b16 %v1188
          %v1265 = vunpack.c.l.b16 %v1189
          %v1266 = vunpack.c.l.b16 %v1190
          %v1267 = vunpack.c.l.b16 %v1191
          %v1268 = vunpack.c.l.b16 %v1192
          %v1269 = vunpack.c.l.b16 %v1193
          %v1270 = vunpack.c.l.b16 %v1194
          %v1271 = vunpack.c.l.b16 %v1195
          %v1272 = vunpack.c.l.b16 %v1196
          %v1273 = vunpack.c.l.b16 %v1197
          %v1274 = vunpack.c.l.b16 %v1198
          %v1275 = vunpack.c.l.b16 %v1199
          %v1276 = vunpack.c.l.b16 %v1200
          %v1277 = vunpack.c.l.b16 %v1201
          %v1278 = vunpack.c.l.b16 %v1202
          %v1279 = vunpack.c.l.b16 %v1203
          %v1280 = vpack.c.b16 %v1249, %v1248
          %v1281 = vpack.c.b16 %v1251, %v1250
          %v1282 = vpack.c.b16 %v1253, %v1252
          %v1283 = vpack.c.b16 %v1255, %v1254
          %v1284 = vpack.c.b16 %v1257, %v1256
          %v1285 = vpack.c.b16 %v1259, %v1258
          %v1286 = vpack.c.b16 %v1261, %v1260
          %v1287 = vpack.c.b16 %v1263, %v1262
          %v1288 = vpack.c.b16 %v1265, %v1264
          %v1289 = vpack.c.b16 %v1267, %v1266
          %v1290 = vpack.c.b16 %v1269, %v1268
          %v1291 = vpack.c.b16 %v1271, %v1270
          %v1292 = vpack.c.b16 %v1273, %v1272
          %v1293 = vpack.c.b16 %v1275, %v1274
          %v1294 = vpack.c.b16 %v1277, %v1276
          %v1295 = vpack.c.b16 %v1279, %v1278
          %1312 = vmatprep.subr.bf16.mxu0 0
          %1313 = vmatpush1.bf16.msra.mxu0 %v1280
          %1314 = vmatprep.subr.bf16.mxu0 0
          %1315 = vmatpush1.bf16.msra.mxu0 %v1281
          %1316 = vmatprep.subr.bf16.mxu0 0
          %1317 = vmatpush1.bf16.msra.mxu0 %v1282
          %1318 = vmatprep.subr.bf16.mxu0 0
          %1319 = vmatpush1.bf16.msra.mxu0 %v1283
          %1320 = vmatprep.subr.bf16.mxu0 0
          %1321 = vmatpush1.bf16.msra.mxu0 %v1284
          %1322 = vmatprep.subr.bf16.mxu0 0
          %1323 = vmatpush1.bf16.msra.mxu0 %v1285
          %1324 = vmatprep.subr.bf16.mxu0 0
          %1325 = vmatpush1.bf16.msra.mxu0 %v1286
          %1326 = vmatprep.subr.bf16.mxu0 0
          %1327 = vmatpush1.bf16.msra.mxu0 %v1287
          %1328 = vmatprep.subr.bf16.mxu0 0
          %1329 = vmatpush1.bf16.msra.mxu0 %v1288
          %1330 = vmatprep.subr.bf16.mxu0 0
          %1331 = vmatpush1.bf16.msra.mxu0 %v1289
          %1332 = vmatprep.subr.bf16.mxu0 0
          %1333 = vmatpush1.bf16.msra.mxu0 %v1290
          %1334 = vmatprep.subr.bf16.mxu0 0
          %1335 = vmatpush1.bf16.msra.mxu0 %v1291
          %1336 = vmatprep.subr.bf16.mxu0 0
          %1337 = vmatpush1.bf16.msra.mxu0 %v1292
          %1338 = vmatprep.subr.bf16.mxu0 0
          %1339 = vmatpush1.bf16.msra.mxu0 %v1293
          %1340 = vmatprep.subr.bf16.mxu0 0
          %1341 = vmatpush1.bf16.msra.mxu0 %v1294
          %1342 = vmatprep.subr.bf16.mxu0 0
          %1343 = vmatpush1.bf16.msra.mxu0 %v1295
          %1344 = vmatprep.mubr.bf16.mxu0 %v1213
          %1345 = vmatmul.mubr.bf16.gmra.mrb[0].mxu0 %v1212
          %v1346 = vpop.f32.mrb[0].mxu0
          %v1347 = vadd.f32 %v1204, %v1346
          %v1348 = vpop.f32.mrb[0].mxu0
          %v1349 = vpop.f32.mrb[0].mxu0
          %v1350 = vadd.f32 %v1205, %v1349
          %v1351 = vpop.f32.mrb[0].mxu0
          %1352 = vdwg.mxu0
          %v1353 = vld [vmem:[#allocation3] sm:$0x1]
          %v1354 = vld [vmem:[#allocation6] sm:$0x1]
          %1355 = vadd.xlane.f32.xlu0 %v1347
          %v1356 = vpop.xlane.xlu0 %1355
          %1357 = vadd.xlane.f32.xlu0 %v1350
          %v1358 = vpop.xlane.xlu0 %1357
          %v1359 = vrcp.pop 128.0
          %v1360 = vmul.f32 %v1356, %v1359
          %v1361 = vmul.f32 %v1358, %v1359
          %v1362 = vsub.f32 %v1347, %v1360
          %v1363 = vsub.f32 %v1350, %v1361
          %v1364 = vmul.f32 %v1362, %v1362
          %v1365 = vmul.f32 %v1363, %v1363
          %1366 = vadd.xlane.f32.xlu0 %v1364
          %v1367 = vpop.xlane.xlu0 %1366
          %1368 = vadd.xlane.f32.xlu0 %v1365
          %v1369 = vpop.xlane.xlu0 %1368
          %v1370 = vmul.f32 %v1367, %v1359
          %v1371 = vmul.f32 %v1369, %v1359
          %v1372 = vadd.f32 %v1370, 1e-05
          %v1373 = vadd.f32 %v1371, 1e-05
          %v1374 = vrsqrt.pop %v1372
          %v1375 = vrsqrt.pop %v1373
          %v1376 = vmul.f32 %v1362, %v1374
          %v1377 = vmul.f32 %v1363, %v1375
          %v1379 = vlaneseq
          %v1380 = vshrl.u32 %v1379, 7
          %v1381 = vsub.s32 0, %v1380
          %v1382 = vrot.slane %v1353, %v1381
          %v1384 = vmul.f32 %v1376, %v1382
          %v1385 = vmul.f32 %v1377, %v1382
          %v1387 = vlaneseq
          %v1388 = vshrl.u32 %v1387, 7
          %v1389 = vsub.s32 0, %v1388
          %v1390 = vrot.slane %v1354, %v1389
          %v1392 = vadd.f32 %v1384, %v1390
          %v1393 = vadd.f32 %v1385, %v1390
          %1394 = vst [vmem:[#allocation2] sm:$0xff] %v1392
          %1395 = vst [vmem:[#allocation2 + $0x8] sm:$0xff] %v1393
        $region184: #{clip_model_forward.1} parent=111 // pred_fallthru
          _
        %v1396 = vld [vmem:[#allocation2] sm:$0xff]
        %v1397 = vld [vmem:[#allocation2 + $0x8] sm:$0xff]
        %v1398 = vld [vmem:[%s3] sm:$0xff]
        %v1399 = vld [vmem:[%s3 + $0x8] sm:$0xff]
        %v1400 = vld [vmem:[%s952] sm:$0x1]
        %v1401 = vld [vmem:[%s960] sm:$0x1]
        %1402 = vadd.xlane.f32.xlu0 %v1396
        %v1403 = vpop.xlane.xlu0 %1402
        %1404 = vadd.xlane.f32.xlu0 %v1397
        %v1405 = vpop.xlane.xlu0 %1404
        %v1406 = vrcp.pop 128.0
        %v1407 = vmul.f32 %v1403, %v1406
        %v1408 = vmul.f32 %v1405, %v1406
        %v1409 = vsub.f32 %v1396, %v1407
        %v1410 = vsub.f32 %v1397, %v1408
        %v1411 = vmul.f32 %v1409, %v1409
        %v1412 = vmul.f32 %v1410, %v1410
        %1413 = vadd.xlane.f32.xlu0 %v1411
        %v1414 = vpop.xlane.xlu0 %1413
        %1415 = vadd.xlane.f32.xlu0 %v1412
        %v1416 = vpop.xlane.xlu0 %1415
        %v1417 = vmul.f32 %v1414, %v1406
        %v1418 = vmul.f32 %v1416, %v1406
        %v1419 = vadd.f32 %v1417, 1e-05
        %v1420 = vadd.f32 %v1418, 1e-05
        %v1421 = vrsqrt.pop %v1419
        %v1422 = vrsqrt.pop %v1420
        %v1423 = vmul.f32 %v1409, %v1421
        %v1424 = vmul.f32 %v1410, %v1422
        %v1426 = vlaneseq
        %v1427 = vshrl.u32 %v1426, 7
        %v1428 = vsub.s32 0, %v1427
        %v1429 = vrot.slane %v1400, %v1428
        %v1431 = vmul.f32 %v1423, %v1429
        %v1432 = vmul.f32 %v1424, %v1429
        %v1434 = vlaneseq
        %v1435 = vshrl.u32 %v1434, 7
        %v1436 = vsub.s32 0, %v1435
        %v1437 = vrot.slane %v1401, %v1436
        %v1439 = vadd.f32 %v1431, %v1437
        %v1440 = vadd.f32 %v1432, %v1437
        %v1441 = vld [vmem:[%s969] sm:$0xff]
        %v1442 = vld [vmem:[%s969 + $0x8] sm:$0xf]
        %v1443 = vld [vmem:[%s969 + $0xc] sm:$0xff]
        %v1444 = vld [vmem:[%s969 + $0x14] sm:$0xf]
        %v1445 = vld [vmem:[%s969 + $0x18] sm:$0xff]
        %v1446 = vld [vmem:[%s969 + $0x20] sm:$0xf]
        %v1447 = vld [vmem:[%s969 + $0x24] sm:$0xff]
        %v1448 = vld [vmem:[%s969 + $0x2c] sm:$0xf]
        %v1449 = vld [vmem:[%s969 + $0x30] sm:$0xff]
        %v1450 = vld [vmem:[%s969 + $0x38] sm:$0xf]
        %v1451 = vld [vmem:[%s969 + $0x3c] sm:$0xff]
        %v1452 = vld [vmem:[%s969 + $0x44] sm:$0xf]
        %v1453 = vld [vmem:[%s969 + $0x48] sm:$0xff]
        %v1454 = vld [vmem:[%s969 + $0x50] sm:$0xf]
        %v1455 = vld [vmem:[%s969 + $0x54] sm:$0xff]
        %v1456 = vld [vmem:[%s969 + $0x5c] sm:$0xf]
        %v1457 = vld [vmem:[%s969 + $0x60] sm:$0xff]
        %v1458 = vld [vmem:[%s969 + $0x68] sm:$0xf]
        %v1459 = vld [vmem:[%s969 + $0x6c] sm:$0xff]
        %v1460 = vld [vmem:[%s969 + $0x74] sm:$0xf]
        %v1461 = vld [vmem:[%s969 + $0x78] sm:$0xff]
        %v1462 = vld [vmem:[%s969 + $0x80] sm:$0xf]
        %v1463 = vld [vmem:[%s969 + $0x84] sm:$0xff]
        %v1464 = vld [vmem:[%s969 + $0x8c] sm:$0xf]
        %v1465 = vld [vmem:[%s969 + $0x90] sm:$0xff]
        %v1466 = vld [vmem:[%s969 + $0x98] sm:$0xf]
        %v1467 = vld [vmem:[%s969 + $0x9c] sm:$0xff]
        %v1468 = vld [vmem:[%s969 + $0xa4] sm:$0xf]
        %v1469 = vld [vmem:[%s969 + $0xa8] sm:$0xff]
        %v1470 = vld [vmem:[%s969 + $0xb0] sm:$0xf]
        %v1471 = vld [vmem:[%s969 + $0xb4] sm:$0xff]
        %v1472 = vld [vmem:[%s969 + $0xbc] sm:$0xf]
        %v1473 = vpack.c.bf16 %v1440, %v1439
        %v1474 = vld [vmem:[%s978] sm:$0x7]
        %v1476 = vlaneseq
        %v1477 = vshrl.u32 %v1476, 7
        %v1478 = vsub.s32 0, %v1477
        %v1479 = vrot.slane %v1474, %v1478
        %v1480 = vlaneseq
        %v1481 = vshrl.u32 %v1480, 7
        %v1482 = vsub.s32 1, %v1481
        %v1483 = vrot.slane %v1474, %v1482
        %v1484 = vlaneseq
        %v1485 = vshrl.u32 %v1484, 7
        %v1486 = vsub.s32 2, %v1485
        %v1487 = vrot.slane %v1474, %v1486
        %v1523 = vunpack.c.l.b16 %v1441
        %v1524 = vunpack.c.h.b16 %v1441
        %v1525 = vunpack.c.l.b16 %v1442
        %v1526 = vunpack.c.l.b16 %v1443
        %v1527 = vunpack.c.h.b16 %v1443
        %v1528 = vunpack.c.l.b16 %v1444
        %v1529 = vunpack.c.l.b16 %v1445
        %v1530 = vunpack.c.h.b16 %v1445
        %v1531 = vunpack.c.l.b16 %v1446
        %v1532 = vunpack.c.l.b16 %v1447
        %v1533 = vunpack.c.h.b16 %v1447
        %v1534 = vunpack.c.l.b16 %v1448
        %v1535 = vunpack.c.l.b16 %v1449
        %v1536 = vunpack.c.h.b16 %v1449
        %v1537 = vunpack.c.l.b16 %v1450
        %v1538 = vunpack.c.l.b16 %v1451
        %v1539 = vunpack.c.h.b16 %v1451
        %v1540 = vunpack.c.l.b16 %v1452
        %v1541 = vunpack.c.l.b16 %v1453
        %v1542 = vunpack.c.h.b16 %v1453
        %v1543 = vunpack.c.l.b16 %v1454
        %v1544 = vunpack.c.l.b16 %v1455
        %v1545 = vunpack.c.h.b16 %v1455
        %v1546 = vunpack.c.l.b16 %v1456
        %v1547 = vunpack.c.l.b16 %v1457
        %v1548 = vunpack.c.h.b16 %v1457
        %v1549 = vunpack.c.l.b16 %v1458
        %v1550 = vunpack.c.l.b16 %v1459
        %v1551 = vunpack.c.h.b16 %v1459
        %v1552 = vunpack.c.l.b16 %v1460
        %v1553 = vunpack.c.l.b16 %v1461
        %v1554 = vunpack.c.h.b16 %v1461
        %v1555 = vunpack.c.l.b16 %v1462
        %v1556 = vunpack.c.l.b16 %v1463
        %v1557 = vunpack.c.h.b16 %v1463
        %v1558 = vunpack.c.l.b16 %v1464
        %v1559 = vunpack.c.l.b16 %v1465
        %v1560 = vunpack.c.h.b16 %v1465
        %v1561 = vunpack.c.l.b16 %v1466
        %v1562 = vunpack.c.l.b16 %v1467
        %v1563 = vunpack.c.h.b16 %v1467
        %v1564 = vunpack.c.l.b16 %v1468
        %v1565 = vunpack.c.l.b16 %v1469
        %v1566 = vunpack.c.h.b16 %v1469
        %v1567 = vunpack.c.l.b16 %v1470
        %v1568 = vunpack.c.l.b16 %v1471
        %v1569 = vunpack.c.h.b16 %v1471
        %v1570 = vunpack.c.l.b16 %v1472
        %v1571 = vpack.c.b16 %v1526, %v1523
        %v1572 = vpack.c.b16 %v1527, %v1524
        %v1573 = vpack.c.b16 %v1528, %v1525
        %v1574 = vpack.c.b16 %v1532, %v1529
        %v1575 = vpack.c.b16 %v1533, %v1530
        %v1576 = vpack.c.b16 %v1534, %v1531
        %v1577 = vpack.c.b16 %v1538, %v1535
        %v1578 = vpack.c.b16 %v1539, %v1536
        %v1579 = vpack.c.b16 %v1540, %v1537
        %v1580 = vpack.c.b16 %v1544, %v1541
        %v1581 = vpack.c.b16 %v1545, %v1542
        %v1582 = vpack.c.b16 %v1546, %v1543
        %v1583 = vpack.c.b16 %v1550, %v1547
        %v1584 = vpack.c.b16 %v1551, %v1548
        %v1585 = vpack.c.b16 %v1552, %v1549
        %v1586 = vpack.c.b16 %v1556, %v1553
        %v1587 = vpack.c.b16 %v1557, %v1554
        %v1588 = vpack.c.b16 %v1558, %v1555
        %v1589 = vpack.c.b16 %v1562, %v1559
        %v1590 = vpack.c.b16 %v1563, %v1560
        %v1591 = vpack.c.b16 %v1564, %v1561
        %v1592 = vpack.c.b16 %v1568, %v1565
        %v1593 = vpack.c.b16 %v1569, %v1566
        %v1594 = vpack.c.b16 %v1570, %v1567
        %1619 = vmatprep.subr.bf16.mxu0 %v1572
        %1620 = vmatpush1.bf16.msra.mxu0 %v1571
        %1621 = vmatprep.subr.bf16.mxu0 %v1575
        %1622 = vmatpush1.bf16.msra.mxu0 %v1574
        %1623 = vmatprep.subr.bf16.mxu0 %v1578
        %1624 = vmatpush1.bf16.msra.mxu0 %v1577
        %1625 = vmatprep.subr.bf16.mxu0 %v1581
        %1626 = vmatpush1.bf16.msra.mxu0 %v1580
        %1627 = vmatprep.subr.bf16.mxu0 %v1584
        %1628 = vmatpush1.bf16.msra.mxu0 %v1583
        %1629 = vmatprep.subr.bf16.mxu0 %v1587
        %1630 = vmatpush1.bf16.msra.mxu0 %v1586
        %1631 = vmatprep.subr.bf16.mxu0 %v1590
        %1632 = vmatpush1.bf16.msra.mxu0 %v1589
        %1633 = vmatprep.subr.bf16.mxu0 %v1593
        %1634 = vmatpush1.bf16.msra.mxu0 %v1592
        %1635 = vmatprep.subr.bf16.mxu0 0
        %1636 = vmatpush1.bf16.msra.mxu0 0
        %1637 = vmatprep.subr.bf16.mxu0 0
        %1638 = vmatpush1.bf16.msra.mxu0 0
        %1639 = vmatprep.subr.bf16.mxu0 0
        %1640 = vmatpush1.bf16.msra.mxu0 0
        %1641 = vmatprep.subr.bf16.mxu0 0
        %1642 = vmatpush1.bf16.msra.mxu0 0
        %1643 = vmatprep.subr.bf16.mxu0 0
        %1644 = vmatpush1.bf16.msra.mxu0 0
        %1645 = vmatprep.subr.bf16.mxu0 0
        %1646 = vmatpush1.bf16.msra.mxu0 0
        %1647 = vmatprep.subr.bf16.mxu0 0
        %1648 = vmatpush1.bf16.msra.mxu0 0
        %1649 = vmatprep.subr.bf16.mxu0 0
        %1650 = vmatpush1.bf16.msra.mxu0 0
        %1651 = vmatprep.mubr.bf16.mxu0 0
        %1652 = vmatmul.mubr.bf16.gmra.mrb[0].mxu0 %v1473
        %v1653 = vpop.f32.mrb[0].mxu0
        %v1654 = vadd.f32 %v1479, %v1653
        %v1655 = vpop.f32.mrb[0].mxu0
        %v1656 = vadd.f32 %v1483, %v1655
        %v1657 = vpop.f32.mrb[0].mxu0
        %v1658 = vadd.f32 %v1479, %v1657
        %v1659 = vpop.f32.mrb[0].mxu0
        %v1660 = vadd.f32 %v1483, %v1659
        %1661 = vdwg.mxu0
        %1662 = vmatprep.subr.bf16.mxu0 0
        %1663 = vmatpush1.bf16.msra.mxu0 %v1573
        %1664 = vmatprep.subr.bf16.mxu0 0
        %1665 = vmatpush1.bf16.msra.mxu0 %v1576
        %1666 = vmatprep.subr.bf16.mxu0 0
        %1667 = vmatpush1.bf16.msra.mxu0 %v1579
        %1668 = vmatprep.subr.bf16.mxu0 0
        %1669 = vmatpush1.bf16.msra.mxu0 %v1582
        %1670 = vmatprep.subr.bf16.mxu0 0
        %1671 = vmatpush1.bf16.msra.mxu0 %v1585
        %1672 = vmatprep.subr.bf16.mxu0 0
        %1673 = vmatpush1.bf16.msra.mxu0 %v1588
        %1674 = vmatprep.subr.bf16.mxu0 0
        %1675 = vmatpush1.bf16.msra.mxu0 %v1591
        %1676 = vmatprep.subr.bf16.mxu0 0
        %1677 = vmatpush1.bf16.msra.mxu0 %v1594
        %1678 = vmatprep.subr.bf16.mxu0 0
        %1679 = vmatpush1.bf16.msra.mxu0 0
        %1680 = vmatprep.subr.bf16.mxu0 0
        %1681 = vmatpush1.bf16.msra.mxu0 0
        %1682 = vmatprep.subr.bf16.mxu0 0
        %1683 = vmatpush1.bf16.msra.mxu0 0
        %1684 = vmatprep.subr.bf16.mxu0 0
        %1685 = vmatpush1.bf16.msra.mxu0 0
        %1686 = vmatprep.subr.bf16.mxu0 0
        %1687 = vmatpush1.bf16.msra.mxu0 0
        %1688 = vmatprep.subr.bf16.mxu0 0
        %1689 = vmatpush1.bf16.msra.mxu0 0
        %1690 = vmatprep.subr.bf16.mxu0 0
        %1691 = vmatpush1.bf16.msra.mxu0 0
        %1692 = vmatprep.subr.bf16.mxu0 0
        %1693 = vmatpush1.bf16.msra.mxu0 0
        %1694 = vmatprep.mubr.bf16.mxu0 0
        %1695 = vmatmul.mubr.bf16.gmra.mrb[0].mxu0 %v1473
        %v1696 = vpop.f32.mrb[0].mxu0
        %v1697 = vadd.f32 %v1487, %v1696
        %v1698 = vpop.f32.mrb[0].mxu0
        %v1699 = vpop.f32.mrb[0].mxu0
        %v1700 = vadd.f32 %v1487, %v1699
        %v1701 = vpop.f32.mrb[0].mxu0
        %1702 = vdwg.mxu0
        %v1703 = vpack.c.bf16 %v1654, %v1654
        %v1704 = vpack.c.bf16 %v1658, %v1658
        %v1705 = vpack.c.bf16 %v1656, %v1656
        %v1706 = vpack.c.bf16 %v1660, %v1660
        %vm1707 = vcmask 261120
        %v1709 = vsel %vm1707, %v1703, 0
        %v1712 = vsel %vm1707, %v1705, 0
        %1714 = vmatprep.subr.bf16.mxu0 0
        %1715 = vmatpush1.bf16.xpose.msra.mxu0 %v1712
        %1716 = vmatprep.subr.bf16.mxu0 0
        %1717 = vmatpush1.bf16.xpose.msra.mxu0 0
        %1718 = vmatprep.subr.bf16.mxu0 0
        %1719 = vmatpush1.bf16.xpose.msra.mxu0 0
        %1720 = vmatprep.subr.bf16.mxu0 0
        %1721 = vmatpush1.bf16.xpose.msra.mxu0 0
        %1722 = vmatprep.subr.bf16.mxu0 0
        %1723 = vmatpush1.bf16.xpose.msra.mxu0 0
        %1724 = vmatprep.subr.bf16.mxu0 0
        %1725 = vmatpush1.bf16.xpose.msra.mxu0 0
        %1726 = vmatprep.subr.bf16.mxu0 0
        %1727 = vmatpush1.bf16.xpose.msra.mxu0 0
        %1728 = vmatprep.subr.bf16.mxu0 0
        %1729 = vmatpush1.bf16.xpose.msra.mxu0 0
        %1730 = vmatprep.subr.bf16.mxu0 0
        %1731 = vmatpush1.bf16.xpose.msra.mxu0 0
        %1732 = vmatprep.subr.bf16.mxu0 0
        %1733 = vmatpush1.bf16.xpose.msra.mxu0 0
        %1734 = vmatprep.subr.bf16.mxu0 0
        %1735 = vmatpush1.bf16.xpose.msra.mxu0 0
        %1736 = vmatprep.subr.bf16.mxu0 0
        %1737 = vmatpush1.bf16.xpose.msra.mxu0 0
        %1738 = vmatprep.subr.bf16.mxu0 0
        %1739 = vmatpush1.bf16.xpose.msra.mxu0 0
        %1740 = vmatprep.subr.bf16.mxu0 0
        %1741 = vmatpush1.bf16.xpose.msra.mxu0 0
        %1742 = vmatprep.subr.bf16.mxu0 0
        %1743 = vmatpush1.bf16.xpose.msra.mxu0 0
        %1744 = vmatprep.subr.bf16.mxu0 0
        %1745 = vmatpush1.bf16.xpose.msra.mxu0 0
        %1746 = vmatprep.mubr.bf16.mxu0 0
        %1747 = vmatmul.mubr.bf16.gmra.mrb[0].mxu0 %v1709
        %v1748 = vpop.f32.mrb[0].mxu0
        %v1749 = vadd.f32 0.0, %v1748
        %v1750 = vpop.f32.mrb[0].mxu0
        %v1751 = vpop.f32.mrb[0].mxu0
        %v1752 = vpop.f32.mrb[0].mxu0
        %1753 = vdwg.mxu0
        %v1755 = vsel %vm1707, %v1704, 0
        %v1758 = vsel %vm1707, %v1706, 0
        %1760 = vmatprep.subr.bf16.mxu0 0
        %1761 = vmatpush1.bf16.xpose.msra.mxu0 %v1758
        %1762 = vmatprep.subr.bf16.mxu0 0
        %1763 = vmatpush1.bf16.xpose.msra.mxu0 0
        %1764 = vmatprep.subr.bf16.mxu0 0
        %1765 = vmatpush1.bf16.xpose.msra.mxu0 0
        %1766 = vmatprep.subr.bf16.mxu0 0
        %1767 = vmatpush1.bf16.xpose.msra.mxu0 0
        %1768 = vmatprep.subr.bf16.mxu0 0
        %1769 = vmatpush1.bf16.xpose.msra.mxu0 0
        %1770 = vmatprep.subr.bf16.mxu0 0
        %1771 = vmatpush1.bf16.xpose.msra.mxu0 0
        %1772 = vmatprep.subr.bf16.mxu0 0
        %1773 = vmatpush1.bf16.xpose.msra.mxu0 0
        %1774 = vmatprep.subr.bf16.mxu0 0
        %1775 = vmatpush1.bf16.xpose.msra.mxu0 0
        %1776 = vmatprep.subr.bf16.mxu0 0
        %1777 = vmatpush1.bf16.xpose.msra.mxu0 0
        %1778 = vmatprep.subr.bf16.mxu0 0
        %1779 = vmatpush1.bf16.xpose.msra.mxu0 0
        %1780 = vmatprep.subr.bf16.mxu0 0
        %1781 = vmatpush1.bf16.xpose.msra.mxu0 0
        %1782 = vmatprep.subr.bf16.mxu0 0
        %1783 = vmatpush1.bf16.xpose.msra.mxu0 0
        %1784 = vmatprep.subr.bf16.mxu0 0
        %1785 = vmatpush1.bf16.xpose.msra.mxu0 0
        %1786 = vmatprep.subr.bf16.mxu0 0
        %1787 = vmatpush1.bf16.xpose.msra.mxu0 0
        %1788 = vmatprep.subr.bf16.mxu0 0
        %1789 = vmatpush1.bf16.xpose.msra.mxu0 0
        %1790 = vmatprep.subr.bf16.mxu0 0
        %1791 = vmatpush1.bf16.xpose.msra.mxu0 0
        %1792 = vmatprep.mubr.bf16.mxu0 0
        %1793 = vmatmul.mubr.bf16.gmra.mrb[0].mxu0 %v1755
        %v1794 = vpop.f32.mrb[0].mxu0
        %v1795 = vadd.f32 0.0, %v1794
        %v1796 = vpop.f32.mrb[0].mxu0
        %v1797 = vpop.f32.mrb[0].mxu0
        %v1798 = vpop.f32.mrb[0].mxu0
        %1799 = vdwg.mxu0
        %v1800 = vmul.f32 %v1749, 0.17677669
        %v1801 = vmul.f32 %v1795, 0.17677669
        %v1802 = vadd.f32 %v1800, %v1398
        %v1803 = vadd.f32 %v1801, %v1399
        %vm1804 = vcmask 64512
        %v1805 = vsel %vm1804, %v1802, -inf
        %1806 = vmax.xlane.f32.xlu0 %v1805
        %v1807 = vpop.xlane.xlu0 %1806
        %v1808 = vsel %vm1804, %v1803, -inf
        %1809 = vmax.xlane.f32.xlu0 %v1808
        %v1810 = vpop.xlane.xlu0 %1809
        %v1811 = vsub.f32 %v1802, %v1807
        %v1812 = vsub.f32 %v1803, %v1810
        %v1813 = vmul.f32 %v1811, 1.442695
        %v1814 = vpow.pop %v1813
        %v1815 = vmul.f32 %v1812, 1.442695
        %v1816 = vpow.pop %v1815
        %v1817 = vsel %vm1804, %v1814, 0.0
        %1818 = vadd.xlane.f32.xlu0 %v1817
        %v1819 = vpop.xlane.xlu0 %1818
        %v1820 = vsel %vm1804, %v1816, 0.0
        %1821 = vadd.xlane.f32.xlu0 %v1820
        %v1822 = vpop.xlane.xlu0 %1821
        %v1823 = vrcp.pop %v1819
        %v1824 = vrcp.pop %v1822
        %v1825 = vmul.f32 %v1814, %v1823
        %v1826 = vmul.f32 %v1816, %v1824
        %v1827 = vpack.c.bf16 %v1825, %v1825
        %v1828 = vpack.c.bf16 %v1826, %v1826
        %v1829 = vpack.c.bf16 %v1697, %v1697
        %v1830 = vpack.c.bf16 %v1700, %v1700
        %v1832 = vsel %vm1804, %v1827, 0
        %vm1834 = vcmask 1043456
        %v1836 = vsel %vm1834, %v1829, 0
        %1838 = vmatprep.subr.bf16.mxu0 0
        %1839 = vmatpush1.bf16.msra.mxu0 %v1836
        %1840 = vmatprep.subr.bf16.mxu0 0
        %1841 = vmatpush1.bf16.msra.mxu0 0
        %1842 = vmatprep.subr.bf16.mxu0 0
        %1843 = vmatpush1.bf16.msra.mxu0 0
        %1844 = vmatprep.subr.bf16.mxu0 0
        %1845 = vmatpush1.bf16.msra.mxu0 0
        %1846 = vmatprep.subr.bf16.mxu0 0
        %1847 = vmatpush1.bf16.msra.mxu0 0
        %1848 = vmatprep.subr.bf16.mxu0 0
        %1849 = vmatpush1.bf16.msra.mxu0 0
        %1850 = vmatprep.subr.bf16.mxu0 0
        %1851 = vmatpush1.bf16.msra.mxu0 0
        %1852 = vmatprep.subr.bf16.mxu0 0
        %1853 = vmatpush1.bf16.msra.mxu0 0
        %1854 = vmatprep.subr.bf16.mxu0 0
        %1855 = vmatpush1.bf16.msra.mxu0 0
        %1856 = vmatprep.subr.bf16.mxu0 0
        %1857 = vmatpush1.bf16.msra.mxu0 0
        %1858 = vmatprep.subr.bf16.mxu0 0
        %1859 = vmatpush1.bf16.msra.mxu0 0
        %1860 = vmatprep.subr.bf16.mxu0 0
        %1861 = vmatpush1.bf16.msra.mxu0 0
        %1862 = vmatprep.subr.bf16.mxu0 0
        %1863 = vmatpush1.bf16.msra.mxu0 0
        %1864 = vmatprep.subr.bf16.mxu0 0
        %1865 = vmatpush1.bf16.msra.mxu0 0
        %1866 = vmatprep.subr.bf16.mxu0 0
        %1867 = vmatpush1.bf16.msra.mxu0 0
        %1868 = vmatprep.subr.bf16.mxu0 0
        %1869 = vmatpush1.bf16.msra.mxu0 0
        %1870 = vmatprep.mubr.bf16.mxu0 0
        %1871 = vmatmul.mubr.bf16.gmra.mrb[0].mxu0 %v1832
        %v1872 = vpop.f32.mrb[0].mxu0
        %v1873 = vadd.f32 0.0, %v1872
        %v1874 = vpop.f32.mrb[0].mxu0
        %v1875 = vpop.f32.mrb[0].mxu0
        %v1876 = vpop.f32.mrb[0].mxu0
        %1877 = vdwg.mxu0
        %v1879 = vsel %vm1804, %v1828, 0
        %v1882 = vsel %vm1834, %v1830, 0
        %1884 = vmatprep.subr.bf16.mxu0 0
        %1885 = vmatpush1.bf16.msra.mxu0 %v1882
        %1886 = vmatprep.subr.bf16.mxu0 0
        %1887 = vmatpush1.bf16.msra.mxu0 0
        %1888 = vmatprep.subr.bf16.mxu0 0
        %1889 = vmatpush1.bf16.msra.mxu0 0
        %1890 = vmatprep.subr.bf16.mxu0 0
        %1891 = vmatpush1.bf16.msra.mxu0 0
        %1892 = vmatprep.subr.bf16.mxu0 0
        %1893 = vmatpush1.bf16.msra.mxu0 0
        %1894 = vmatprep.subr.bf16.mxu0 0
        %1895 = vmatpush1.bf16.msra.mxu0 0
        %1896 = vmatprep.subr.bf16.mxu0 0
        %1897 = vmatpush1.bf16.msra.mxu0 0
        %1898 = vmatprep.subr.bf16.mxu0 0
        %1899 = vmatpush1.bf16.msra.mxu0 0
        %1900 = vmatprep.subr.bf16.mxu0 0
        %1901 = vmatpush1.bf16.msra.mxu0 0
        %1902 = vmatprep.subr.bf16.mxu0 0
        %1903 = vmatpush1.bf16.msra.mxu0 0
        %1904 = vmatprep.subr.bf16.mxu0 0
        %1905 = vmatpush1.bf16.msra.mxu0 0
        %1906 = vmatprep.subr.bf16.mxu0 0
        %1907 = vmatpush1.bf16.msra.mxu0 0
        %1908 = vmatprep.subr.bf16.mxu0 0
        %1909 = vmatpush1.bf16.msra.mxu0 0
        %1910 = vmatprep.subr.bf16.mxu0 0
        %1911 = vmatpush1.bf16.msra.mxu0 0
        %1912 = vmatprep.subr.bf16.mxu0 0
        %1913 = vmatpush1.bf16.msra.mxu0 0
        %1914 = vmatprep.subr.bf16.mxu0 0
        %1915 = vmatpush1.bf16.msra.mxu0 0
        %1916 = vmatprep.mubr.bf16.mxu0 0
        %1917 = vmatmul.mubr.bf16.gmra.mrb[0].mxu0 %v1879
        %v1918 = vpop.f32.mrb[0].mxu0
        %v1919 = vadd.f32 0.0, %v1918
        %v1920 = vpop.f32.mrb[0].mxu0
        %v1921 = vpop.f32.mrb[0].mxu0
        %v1922 = vpop.f32.mrb[0].mxu0
        %1923 = vdwg.mxu0
        %1925 = vrot.lane.b32.xlu0 %v1703, 96
        %v1926 = vpop.permute.xlu0 %1925
        %1928 = vrot.lane.b32.xlu0 %v1705, 96
        %v1929 = vpop.permute.xlu0 %1928
        %v1931 = vsel %vm1707, %v1926, 0
        %v1934 = vsel %vm1707, %v1929, 0
        %1936 = vmatprep.subr.bf16.mxu0 0
        %1937 = vmatpush1.bf16.xpose.msra.mxu0 %v1934
        %1938 = vmatprep.subr.bf16.mxu0 0
        %1939 = vmatpush1.bf16.xpose.msra.mxu0 0
        %1940 = vmatprep.subr.bf16.mxu0 0
        %1941 = vmatpush1.bf16.xpose.msra.mxu0 0
        %1942 = vmatprep.subr.bf16.mxu0 0
        %1943 = vmatpush1.bf16.xpose.msra.mxu0 0
        %1944 = vmatprep.subr.bf16.mxu0 0
        %1945 = vmatpush1.bf16.xpose.msra.mxu0 0
        %1946 = vmatprep.subr.bf16.mxu0 0
        %1947 = vmatpush1.bf16.xpose.msra.mxu0 0
        %1948 = vmatprep.subr.bf16.mxu0 0
        %1949 = vmatpush1.bf16.xpose.msra.mxu0 0
        %1950 = vmatprep.subr.bf16.mxu0 0
        %1951 = vmatpush1.bf16.xpose.msra.mxu0 0
        %1952 = vmatprep.subr.bf16.mxu0 0
        %1953 = vmatpush1.bf16.xpose.msra.mxu0 0
        %1954 = vmatprep.subr.bf16.mxu0 0
        %1955 = vmatpush1.bf16.xpose.msra.mxu0 0
        %1956 = vmatprep.subr.bf16.mxu0 0
        %1957 = vmatpush1.bf16.xpose.msra.mxu0 0
        %1958 = vmatprep.subr.bf16.mxu0 0
        %1959 = vmatpush1.bf16.xpose.msra.mxu0 0
        %1960 = vmatprep.subr.bf16.mxu0 0
        %1961 = vmatpush1.bf16.xpose.msra.mxu0 0
        %1962 = vmatprep.subr.bf16.mxu0 0
        %1963 = vmatpush1.bf16.xpose.msra.mxu0 0
        %1964 = vmatprep.subr.bf16.mxu0 0
        %1965 = vmatpush1.bf16.xpose.msra.mxu0 0
        %1966 = vmatprep.subr.bf16.mxu0 0
        %1967 = vmatpush1.bf16.xpose.msra.mxu0 0
        %1968 = vmatprep.mubr.bf16.mxu0 0
        %1969 = vmatmul.mubr.bf16.gmra.mrb[0].mxu0 %v1931
        %v1970 = vpop.f32.mrb[0].mxu0
        %v1971 = vadd.f32 0.0, %v1970
        %v1972 = vpop.f32.mrb[0].mxu0
        %v1973 = vpop.f32.mrb[0].mxu0
        %v1974 = vpop.f32.mrb[0].mxu0
        %1975 = vdwg.mxu0
        %1977 = vrot.lane.b32.xlu0 %v1704, 96
        %v1978 = vpop.permute.xlu0 %1977
        %1980 = vrot.lane.b32.xlu0 %v1706, 96
        %v1981 = vpop.permute.xlu0 %1980
        %v1983 = vsel %vm1707, %v1978, 0
        %v1986 = vsel %vm1707, %v1981, 0
        %1988 = vmatprep.subr.bf16.mxu0 0
        %1989 = vmatpush1.bf16.xpose.msra.mxu0 %v1986
        %1990 = vmatprep.subr.bf16.mxu0 0
        %1991 = vmatpush1.bf16.xpose.msra.mxu0 0
        %1992 = vmatprep.subr.bf16.mxu0 0
        %1993 = vmatpush1.bf16.xpose.msra.mxu0 0
        %1994 = vmatprep.subr.bf16.mxu0 0
        %1995 = vmatpush1.bf16.xpose.msra.mxu0 0
        %1996 = vmatprep.subr.bf16.mxu0 0
        %1997 = vmatpush1.bf16.xpose.msra.mxu0 0
        %1998 = vmatprep.subr.bf16.mxu0 0
        %1999 = vmatpush1.bf16.xpose.msra.mxu0 0
        %2000 = vmatprep.subr.bf16.mxu0 0
        %2001 = vmatpush1.bf16.xpose.msra.mxu0 0
        %2002 = vmatprep.subr.bf16.mxu0 0
        %2003 = vmatpush1.bf16.xpose.msra.mxu0 0
        %2004 = vmatprep.subr.bf16.mxu0 0
        %2005 = vmatpush1.bf16.xpose.msra.mxu0 0
        %2006 = vmatprep.subr.bf16.mxu0 0
        %2007 = vmatpush1.bf16.xpose.msra.mxu0 0
        %2008 = vmatprep.subr.bf16.mxu0 0
        %2009 = vmatpush1.bf16.xpose.msra.mxu0 0
        %2010 = vmatprep.subr.bf16.mxu0 0
        %2011 = vmatpush1.bf16.xpose.msra.mxu0 0
        %2012 = vmatprep.subr.bf16.mxu0 0
        %2013 = vmatpush1.bf16.xpose.msra.mxu0 0
        %2014 = vmatprep.subr.bf16.mxu0 0
        %2015 = vmatpush1.bf16.xpose.msra.mxu0 0
        %2016 = vmatprep.subr.bf16.mxu0 0
        %2017 = vmatpush1.bf16.xpose.msra.mxu0 0
        %2018 = vmatprep.subr.bf16.mxu0 0
        %2019 = vmatpush1.bf16.xpose.msra.mxu0 0
        %2020 = vmatprep.mubr.bf16.mxu0 0
        %2021 = vmatmul.mubr.bf16.gmra.mrb[0].mxu0 %v1983
        %v2022 = vpop.f32.mrb[0].mxu0
        %v2023 = vadd.f32 0.0, %v2022
        %v2024 = vpop.f32.mrb[0].mxu0
        %v2025 = vpop.f32.mrb[0].mxu0
        %v2026 = vpop.f32.mrb[0].mxu0
        %2027 = vdwg.mxu0
        %v2028 = vmul.f32 %v1971, 0.17677669
        %v2029 = vmul.f32 %v2023, 0.17677669
        %v2030 = vadd.f32 %v2028, %v1398
        %v2031 = vadd.f32 %v2029, %v1399
        %v2032 = vsel %vm1804, %v2030, -inf
        %2033 = vmax.xlane.f32.xlu0 %v2032
        %v2034 = vpop.xlane.xlu0 %2033
        %v2035 = vsel %vm1804, %v2031, -inf
        %2036 = vmax.xlane.f32.xlu0 %v2035
        %v2037 = vpop.xlane.xlu0 %2036
        %v2038 = vsub.f32 %v2030, %v2034
        %v2039 = vsub.f32 %v2031, %v2037
        %v2040 = vmul.f32 %v2038, 1.442695
        %v2041 = vpow.pop %v2040
        %v2042 = vmul.f32 %v2039, 1.442695
        %v2043 = vpow.pop %v2042
        %v2044 = vsel %vm1804, %v2041, 0.0
        %2045 = vadd.xlane.f32.xlu0 %v2044
        %v2046 = vpop.xlane.xlu0 %2045
        %v2047 = vsel %vm1804, %v2043, 0.0
        %2048 = vadd.xlane.f32.xlu0 %v2047
        %v2049 = vpop.xlane.xlu0 %2048
        %v2050 = vrcp.pop %v2046
        %v2051 = vrcp.pop %v2049
        %v2052 = vmul.f32 %v2041, %v2050
        %v2053 = vmul.f32 %v2043, %v2051
        %v2054 = vpack.c.bf16 %v2052, %v2052
        %v2055 = vpack.c.bf16 %v2053, %v2053
        %2057 = vrot.lane.b32.xlu0 %v1829, 96
        %v2058 = vpop.permute.xlu0 %2057
        %v2060 = vsel %vm1804, %v2054, 0
        %v2063 = vsel %vm1834, %v2058, 0
        %2065 = vmatprep.subr.bf16.mxu0 0
        %2066 = vmatpush1.bf16.msra.mxu0 %v2063
        %2067 = vmatprep.subr.bf16.mxu0 0
        %2068 = vmatpush1.bf16.msra.mxu0 0
        %2069 = vmatprep.subr.bf16.mxu0 0
        %2070 = vmatpush1.bf16.msra.mxu0 0
        %2071 = vmatprep.subr.bf16.mxu0 0
        %2072 = vmatpush1.bf16.msra.mxu0 0
        %2073 = vmatprep.subr.bf16.mxu0 0
        %2074 = vmatpush1.bf16.msra.mxu0 0
        %2075 = vmatprep.subr.bf16.mxu0 0
        %2076 = vmatpush1.bf16.msra.mxu0 0
        %2077 = vmatprep.subr.bf16.mxu0 0
        %2078 = vmatpush1.bf16.msra.mxu0 0
        %2079 = vmatprep.subr.bf16.mxu0 0
        %2080 = vmatpush1.bf16.msra.mxu0 0
        %2081 = vmatprep.subr.bf16.mxu0 0
        %2082 = vmatpush1.bf16.msra.mxu0 0
        %2083 = vmatprep.subr.bf16.mxu0 0
        %2084 = vmatpush1.bf16.msra.mxu0 0
        %2085 = vmatprep.subr.bf16.mxu0 0
        %2086 = vmatpush1.bf16.msra.mxu0 0
        %2087 = vmatprep.subr.bf16.mxu0 0
        %2088 = vmatpush1.bf16.msra.mxu0 0
        %2089 = vmatprep.subr.bf16.mxu0 0
        %2090 = vmatpush1.bf16.msra.mxu0 0
        %2091 = vmatprep.subr.bf16.mxu0 0
        %2092 = vmatpush1.bf16.msra.mxu0 0
        %2093 = vmatprep.subr.bf16.mxu0 0
        %2094 = vmatpush1.bf16.msra.mxu0 0
        %2095 = vmatprep.subr.bf16.mxu0 0
        %2096 = vmatpush1.bf16.msra.mxu0 0
        %2097 = vmatprep.mubr.bf16.mxu0 0
        %2098 = vmatmul.mubr.bf16.gmra.mrb[0].mxu0 %v2060
        %v2099 = vpop.f32.mrb[0].mxu0
        %v2100 = vadd.f32 0.0, %v2099
        %v2101 = vpop.f32.mrb[0].mxu0
        %v2102 = vpop.f32.mrb[0].mxu0
        %v2103 = vpop.f32.mrb[0].mxu0
        %2104 = vdwg.mxu0
        %2106 = vrot.lane.b32.xlu0 %v1830, 96
        %v2107 = vpop.permute.xlu0 %2106
        %v2109 = vsel %vm1804, %v2055, 0
        %v2112 = vsel %vm1834, %v2107, 0
        %2114 = vmatprep.subr.bf16.mxu0 0
        %2115 = vmatpush1.bf16.msra.mxu0 %v2112
        %2116 = vmatprep.subr.bf16.mxu0 0
        %2117 = vmatpush1.bf16.msra.mxu0 0
        %2118 = vmatprep.subr.bf16.mxu0 0
        %2119 = vmatpush1.bf16.msra.mxu0 0
        %2120 = vmatprep.subr.bf16.mxu0 0
        %2121 = vmatpush1.bf16.msra.mxu0 0
        %2122 = vmatprep.subr.bf16.mxu0 0
        %2123 = vmatpush1.bf16.msra.mxu0 0
        %2124 = vmatprep.subr.bf16.mxu0 0
        %2125 = vmatpush1.bf16.msra.mxu0 0
        %2126 = vmatprep.subr.bf16.mxu0 0
        %2127 = vmatpush1.bf16.msra.mxu0 0
        %2128 = vmatprep.subr.bf16.mxu0 0
        %2129 = vmatpush1.bf16.msra.mxu0 0
        %2130 = vmatprep.subr.bf16.mxu0 0
        %2131 = vmatpush1.bf16.msra.mxu0 0
        %2132 = vmatprep.subr.bf16.mxu0 0
        %2133 = vmatpush1.bf16.msra.mxu0 0
        %2134 = vmatprep.subr.bf16.mxu0 0
        %2135 = vmatpush1.bf16.msra.mxu0 0
        %2136 = vmatprep.subr.bf16.mxu0 0
        %2137 = vmatpush1.bf16.msra.mxu0 0
        %2138 = vmatprep.subr.bf16.mxu0 0
        %2139 = vmatpush1.bf16.msra.mxu0 0
        %2140 = vmatprep.subr.bf16.mxu0 0
        %2141 = vmatpush1.bf16.msra.mxu0 0
        %2142 = vmatprep.subr.bf16.mxu0 0
        %2143 = vmatpush1.bf16.msra.mxu0 0
        %2144 = vmatprep.subr.bf16.mxu0 0
        %2145 = vmatpush1.bf16.msra.mxu0 0
        %2146 = vmatprep.mubr.bf16.mxu0 0
        %2147 = vmatmul.mubr.bf16.gmra.mrb[0].mxu0 %v2109
        %v2148 = vpop.f32.mrb[0].mxu0
        %v2149 = vadd.f32 0.0, %v2148
        %v2150 = vpop.f32.mrb[0].mxu0
        %v2151 = vpop.f32.mrb[0].mxu0
        %v2152 = vpop.f32.mrb[0].mxu0
        %2153 = vdwg.mxu0
        %2154 = vrot.lane.b32.xlu0 %v1703, 64
        %v2155 = vpop.permute.xlu0 %2154
        %2156 = vrot.lane.b32.xlu0 %v1705, 64
        %v2157 = vpop.permute.xlu0 %2156
        %v2159 = vsel %vm1707, %v2155, 0
        %v2162 = vsel %vm1707, %v2157, 0
        %2164 = vmatprep.subr.bf16.mxu0 0
        %2165 = vmatpush1.bf16.xpose.msra.mxu0 %v2162
        %2166 = vmatprep.subr.bf16.mxu0 0
        %2167 = vmatpush1.bf16.xpose.msra.mxu0 0
        %2168 = vmatprep.subr.bf16.mxu0 0
        %2169 = vmatpush1.bf16.xpose.msra.mxu0 0
        %2170 = vmatprep.subr.bf16.mxu0 0
        %2171 = vmatpush1.bf16.xpose.msra.mxu0 0
        %2172 = vmatprep.subr.bf16.mxu0 0
        %2173 = vmatpush1.bf16.xpose.msra.mxu0 0
        %2174 = vmatprep.subr.bf16.mxu0 0
        %2175 = vmatpush1.bf16.xpose.msra.mxu0 0
        %2176 = vmatprep.subr.bf16.mxu0 0
        %2177 = vmatpush1.bf16.xpose.msra.mxu0 0
        %2178 = vmatprep.subr.bf16.mxu0 0
        %2179 = vmatpush1.bf16.xpose.msra.mxu0 0
        %2180 = vmatprep.subr.bf16.mxu0 0
        %2181 = vmatpush1.bf16.xpose.msra.mxu0 0
        %2182 = vmatprep.subr.bf16.mxu0 0
        %2183 = vmatpush1.bf16.xpose.msra.mxu0 0
        %2184 = vmatprep.subr.bf16.mxu0 0
        %2185 = vmatpush1.bf16.xpose.msra.mxu0 0
        %2186 = vmatprep.subr.bf16.mxu0 0
        %2187 = vmatpush1.bf16.xpose.msra.mxu0 0
        %2188 = vmatprep.subr.bf16.mxu0 0
        %2189 = vmatpush1.bf16.xpose.msra.mxu0 0
        %2190 = vmatprep.subr.bf16.mxu0 0
        %2191 = vmatpush1.bf16.xpose.msra.mxu0 0
        %2192 = vmatprep.subr.bf16.mxu0 0
        %2193 = vmatpush1.bf16.xpose.msra.mxu0 0
        %2194 = vmatprep.subr.bf16.mxu0 0
        %2195 = vmatpush1.bf16.xpose.msra.mxu0 0
        %2196 = vmatprep.mubr.bf16.mxu0 0
        %2197 = vmatmul.mubr.bf16.gmra.mrb[0].mxu0 %v2159
        %v2198 = vpop.f32.mrb[0].mxu0
        %v2199 = vadd.f32 0.0, %v2198
        %v2200 = vpop.f32.mrb[0].mxu0
        %v2201 = vpop.f32.mrb[0].mxu0
        %v2202 = vpop.f32.mrb[0].mxu0
        %2203 = vdwg.mxu0
        %2204 = vrot.lane.b32.xlu0 %v1704, 64
        %v2205 = vpop.permute.xlu0 %2204
        %2206 = vrot.lane.b32.xlu0 %v1706, 64
        %v2207 = vpop.permute.xlu0 %2206
        %v2209 = vsel %vm1707, %v2205, 0
        %v2212 = vsel %vm1707, %v2207, 0
        %2214 = vmatprep.subr.bf16.mxu0 0
        %2215 = vmatpush1.bf16.xpose.msra.mxu0 %v2212
        %2216 = vmatprep.subr.bf16.mxu0 0
        %2217 = vmatpush1.bf16.xpose.msra.mxu0 0
        %2218 = vmatprep.subr.bf16.mxu0 0
        %2219 = vmatpush1.bf16.xpose.msra.mxu0 0
        %2220 = vmatprep.subr.bf16.mxu0 0
        %2221 = vmatpush1.bf16.xpose.msra.mxu0 0
        %2222 = vmatprep.subr.bf16.mxu0 0
        %2223 = vmatpush1.bf16.xpose.msra.mxu0 0
        %2224 = vmatprep.subr.bf16.mxu0 0
        %2225 = vmatpush1.bf16.xpose.msra.mxu0 0
        %2226 = vmatprep.subr.bf16.mxu0 0
        %2227 = vmatpush1.bf16.xpose.msra.mxu0 0
        %2228 = vmatprep.subr.bf16.mxu0 0
        %2229 = vmatpush1.bf16.xpose.msra.mxu0 0
        %2230 = vmatprep.subr.bf16.mxu0 0
        %2231 = vmatpush1.bf16.xpose.msra.mxu0 0
        %2232 = vmatprep.subr.bf16.mxu0 0
        %2233 = vmatpush1.bf16.xpose.msra.mxu0 0
        %2234 = vmatprep.subr.bf16.mxu0 0
        %2235 = vmatpush1.bf16.xpose.msra.mxu0 0
        %2236 = vmatprep.subr.bf16.mxu0 0
        %2237 = vmatpush1.bf16.xpose.msra.mxu0 0
        %2238 = vmatprep.subr.bf16.mxu0 0
        %2239 = vmatpush1.bf16.xpose.msra.mxu0 0
        %2240 = vmatprep.subr.bf16.mxu0 0
        %2241 = vmatpush1.bf16.xpose.msra.mxu0 0
        %2242 = vmatprep.subr.bf16.mxu0 0
        %2243 = vmatpush1.bf16.xpose.msra.mxu0 0
        %2244 = vmatprep.subr.bf16.mxu0 0
        %2245 = vmatpush1.bf16.xpose.msra.mxu0 0
        %2246 = vmatprep.mubr.bf16.mxu0 0
        %2247 = vmatmul.mubr.bf16.gmra.mrb[0].mxu0 %v2209
        %v2248 = vpop.f32.mrb[0].mxu0
        %v2249 = vadd.f32 0.0, %v2248
        %v2250 = vpop.f32.mrb[0].mxu0
        %v2251 = vpop.f32.mrb[0].mxu0
        %v2252 = vpop.f32.mrb[0].mxu0
        %2253 = vdwg.mxu0
        %v2254 = vmul.f32 %v2199, 0.17677669
        %v2255 = vmul.f32 %v2249, 0.17677669
        %v2256 = vadd.f32 %v2254, %v1398
        %v2257 = vadd.f32 %v2255, %v1399
        %v2258 = vsel %vm1804, %v2256, -inf
        %2259 = vmax.xlane.f32.xlu0 %v2258
        %v2260 = vpop.xlane.xlu0 %2259
        %v2261 = vsel %vm1804, %v2257, -inf
        %2262 = vmax.xlane.f32.xlu0 %v2261
        %v2263 = vpop.xlane.xlu0 %2262
        %v2264 = vsub.f32 %v2256, %v2260
        %v2265 = vsub.f32 %v2257, %v2263
        %v2266 = vmul.f32 %v2264, 1.442695
        %v2267 = vpow.pop %v2266
        %v2268 = vmul.f32 %v2265, 1.442695
        %v2269 = vpow.pop %v2268
        %v2270 = vsel %vm1804, %v2267, 0.0
        %2271 = vadd.xlane.f32.xlu0 %v2270
        %v2272 = vpop.xlane.xlu0 %2271
        %v2273 = vsel %vm1804, %v2269, 0.0
        %2274 = vadd.xlane.f32.xlu0 %v2273
        %v2275 = vpop.xlane.xlu0 %2274
        %v2276 = vrcp.pop %v2272
        %v2277 = vrcp.pop %v2275
        %v2278 = vmul.f32 %v2267, %v2276
        %v2279 = vmul.f32 %v2269, %v2277
        %v2280 = vpack.c.bf16 %v2278, %v2278
        %v2281 = vpack.c.bf16 %v2279, %v2279
        %2282 = vrot.lane.b32.xlu0 %v1829, 64
        %v2283 = vpop.permute.xlu0 %2282
        %v2285 = vsel %vm1804, %v2280, 0
        %v2288 = vsel %vm1834, %v2283, 0
        %2290 = vmatprep.subr.bf16.mxu0 0
        %2291 = vmatpush1.bf16.msra.mxu0 %v2288
        %2292 = vmatprep.subr.bf16.mxu0 0
        %2293 = vmatpush1.bf16.msra.mxu0 0
        %2294 = vmatprep.subr.bf16.mxu0 0
        %2295 = vmatpush1.bf16.msra.mxu0 0
        %2296 = vmatprep.subr.bf16.mxu0 0
        %2297 = vmatpush1.bf16.msra.mxu0 0
        %2298 = vmatprep.subr.bf16.mxu0 0
        %2299 = vmatpush1.bf16.msra.mxu0 0
        %2300 = vmatprep.subr.bf16.mxu0 0
        %2301 = vmatpush1.bf16.msra.mxu0 0
        %2302 = vmatprep.subr.bf16.mxu0 0
        %2303 = vmatpush1.bf16.msra.mxu0 0
        %2304 = vmatprep.subr.bf16.mxu0 0
        %2305 = vmatpush1.bf16.msra.mxu0 0
        %2306 = vmatprep.subr.bf16.mxu0 0
        %2307 = vmatpush1.bf16.msra.mxu0 0
        %2308 = vmatprep.subr.bf16.mxu0 0
        %2309 = vmatpush1.bf16.msra.mxu0 0
        %2310 = vmatprep.subr.bf16.mxu0 0
        %2311 = vmatpush1.bf16.msra.mxu0 0
        %2312 = vmatprep.subr.bf16.mxu0 0
        %2313 = vmatpush1.bf16.msra.mxu0 0
        %2314 = vmatprep.subr.bf16.mxu0 0
        %2315 = vmatpush1.bf16.msra.mxu0 0
        %2316 = vmatprep.subr.bf16.mxu0 0
        %2317 = vmatpush1.bf16.msra.mxu0 0
        %2318 = vmatprep.subr.bf16.mxu0 0
        %2319 = vmatpush1.bf16.msra.mxu0 0
        %2320 = vmatprep.subr.bf16.mxu0 0
        %2321 = vmatpush1.bf16.msra.mxu0 0
        %2322 = vmatprep.mubr.bf16.mxu0 0
        %2323 = vmatmul.mubr.bf16.gmra.mrb[0].mxu0 %v2285
        %v2324 = vpop.f32.mrb[0].mxu0
        %v2325 = vadd.f32 0.0, %v2324
        %v2326 = vpop.f32.mrb[0].mxu0
        %v2327 = vpop.f32.mrb[0].mxu0
        %v2328 = vpop.f32.mrb[0].mxu0
        %2329 = vdwg.mxu0
        %2330 = vrot.lane.b32.xlu0 %v1830, 64
        %v2331 = vpop.permute.xlu0 %2330
        %v2333 = vsel %vm1804, %v2281, 0
        %v2336 = vsel %vm1834, %v2331, 0
        %2338 = vmatprep.subr.bf16.mxu0 0
        %2339 = vmatpush1.bf16.msra.mxu0 %v2336
        %2340 = vmatprep.subr.bf16.mxu0 0
        %2341 = vmatpush1.bf16.msra.mxu0 0
        %2342 = vmatprep.subr.bf16.mxu0 0
        %2343 = vmatpush1.bf16.msra.mxu0 0
        %2344 = vmatprep.subr.bf16.mxu0 0
        %2345 = vmatpush1.bf16.msra.mxu0 0
        %2346 = vmatprep.subr.bf16.mxu0 0
        %2347 = vmatpush1.bf16.msra.mxu0 0
        %2348 = vmatprep.subr.bf16.mxu0 0
        %2349 = vmatpush1.bf16.msra.mxu0 0
        %2350 = vmatprep.subr.bf16.mxu0 0
        %2351 = vmatpush1.bf16.msra.mxu0 0
        %2352 = vmatprep.subr.bf16.mxu0 0
        %2353 = vmatpush1.bf16.msra.mxu0 0
        %2354 = vmatprep.subr.bf16.mxu0 0
        %2355 = vmatpush1.bf16.msra.mxu0 0
        %2356 = vmatprep.subr.bf16.mxu0 0
        %2357 = vmatpush1.bf16.msra.mxu0 0
        %2358 = vmatprep.subr.bf16.mxu0 0
        %2359 = vmatpush1.bf16.msra.mxu0 0
        %2360 = vmatprep.subr.bf16.mxu0 0
        %2361 = vmatpush1.bf16.msra.mxu0 0
        %2362 = vmatprep.subr.bf16.mxu0 0
        %2363 = vmatpush1.bf16.msra.mxu0 0
        %2364 = vmatprep.subr.bf16.mxu0 0
        %2365 = vmatpush1.bf16.msra.mxu0 0
        %2366 = vmatprep.subr.bf16.mxu0 0
        %2367 = vmatpush1.bf16.msra.mxu0 0
        %2368 = vmatprep.subr.bf16.mxu0 0
        %2369 = vmatpush1.bf16.msra.mxu0 0
        %2370 = vmatprep.mubr.bf16.mxu0 0
        %2371 = vmatmul.mubr.bf16.gmra.mrb[0].mxu0 %v2333
        %v2372 = vpop.f32.mrb[0].mxu0
        %v2373 = vadd.f32 0.0, %v2372
        %v2374 = vpop.f32.mrb[0].mxu0
        %v2375 = vpop.f32.mrb[0].mxu0
        %v2376 = vpop.f32.mrb[0].mxu0
        %2377 = vdwg.mxu0
        %2378 = vrot.lane.b32.xlu0 %v1703, 32
        %v2379 = vpop.permute.xlu0 %2378
        %2380 = vrot.lane.b32.xlu0 %v1705, 32
        %v2381 = vpop.permute.xlu0 %2380
        %v2383 = vsel %vm1707, %v2379, 0
        %v2386 = vsel %vm1707, %v2381, 0
        %2388 = vmatprep.subr.bf16.mxu0 0
        %2389 = vmatpush1.bf16.xpose.msra.mxu0 %v2386
        %2390 = vmatprep.subr.bf16.mxu0 0
        %2391 = vmatpush1.bf16.xpose.msra.mxu0 0
        %2392 = vmatprep.subr.bf16.mxu0 0
        %2393 = vmatpush1.bf16.xpose.msra.mxu0 0
        %2394 = vmatprep.subr.bf16.mxu0 0
        %2395 = vmatpush1.bf16.xpose.msra.mxu0 0
        %2396 = vmatprep.subr.bf16.mxu0 0
        %2397 = vmatpush1.bf16.xpose.msra.mxu0 0
        %2398 = vmatprep.subr.bf16.mxu0 0
        %2399 = vmatpush1.bf16.xpose.msra.mxu0 0
        %2400 = vmatprep.subr.bf16.mxu0 0
        %2401 = vmatpush1.bf16.xpose.msra.mxu0 0
        %2402 = vmatprep.subr.bf16.mxu0 0
        %2403 = vmatpush1.bf16.xpose.msra.mxu0 0
        %2404 = vmatprep.subr.bf16.mxu0 0
        %2405 = vmatpush1.bf16.xpose.msra.mxu0 0
        %2406 = vmatprep.subr.bf16.mxu0 0
        %2407 = vmatpush1.bf16.xpose.msra.mxu0 0
        %2408 = vmatprep.subr.bf16.mxu0 0
        %2409 = vmatpush1.bf16.xpose.msra.mxu0 0
        %2410 = vmatprep.subr.bf16.mxu0 0
        %2411 = vmatpush1.bf16.xpose.msra.mxu0 0
        %2412 = vmatprep.subr.bf16.mxu0 0
        %2413 = vmatpush1.bf16.xpose.msra.mxu0 0
        %2414 = vmatprep.subr.bf16.mxu0 0
        %2415 = vmatpush1.bf16.xpose.msra.mxu0 0
        %2416 = vmatprep.subr.bf16.mxu0 0
        %2417 = vmatpush1.bf16.xpose.msra.mxu0 0
        %2418 = vmatprep.subr.bf16.mxu0 0
        %2419 = vmatpush1.bf16.xpose.msra.mxu0 0
        %2420 = vmatprep.mubr.bf16.mxu0 0
        %2421 = vmatmul.mubr.bf16.gmra.mrb[0].mxu0 %v2383
        %v2422 = vpop.f32.mrb[0].mxu0
        %v2423 = vadd.f32 0.0, %v2422
        %v2424 = vpop.f32.mrb[0].mxu0
        %v2425 = vpop.f32.mrb[0].mxu0
        %v2426 = vpop.f32.mrb[0].mxu0
        %2427 = vdwg.mxu0
        %2428 = vrot.lane.b32.xlu0 %v1704, 32
        %v2429 = vpop.permute.xlu0 %2428
        %2430 = vrot.lane.b32.xlu0 %v1706, 32
        %v2431 = vpop.permute.xlu0 %2430
        %v2433 = vsel %vm1707, %v2429, 0
        %v2436 = vsel %vm1707, %v2431, 0
        %2438 = vmatprep.subr.bf16.mxu0 0
        %2439 = vmatpush1.bf16.xpose.msra.mxu0 %v2436
        %2440 = vmatprep.subr.bf16.mxu0 0
        %2441 = vmatpush1.bf16.xpose.msra.mxu0 0
        %2442 = vmatprep.subr.bf16.mxu0 0
        %2443 = vmatpush1.bf16.xpose.msra.mxu0 0
        %2444 = vmatprep.subr.bf16.mxu0 0
        %2445 = vmatpush1.bf16.xpose.msra.mxu0 0
        %2446 = vmatprep.subr.bf16.mxu0 0
        %2447 = vmatpush1.bf16.xpose.msra.mxu0 0
        %2448 = vmatprep.subr.bf16.mxu0 0
        %2449 = vmatpush1.bf16.xpose.msra.mxu0 0
        %2450 = vmatprep.subr.bf16.mxu0 0
        %2451 = vmatpush1.bf16.xpose.msra.mxu0 0
        %2452 = vmatprep.subr.bf16.mxu0 0
        %2453 = vmatpush1.bf16.xpose.msra.mxu0 0
        %2454 = vmatprep.subr.bf16.mxu0 0
        %2455 = vmatpush1.bf16.xpose.msra.mxu0 0
        %2456 = vmatprep.subr.bf16.mxu0 0
        %2457 = vmatpush1.bf16.xpose.msra.mxu0 0
        %2458 = vmatprep.subr.bf16.mxu0 0
        %2459 = vmatpush1.bf16.xpose.msra.mxu0 0
        %2460 = vmatprep.subr.bf16.mxu0 0
        %2461 = vmatpush1.bf16.xpose.msra.mxu0 0
        %2462 = vmatprep.subr.bf16.mxu0 0
        %2463 = vmatpush1.bf16.xpose.msra.mxu0 0
        %2464 = vmatprep.subr.bf16.mxu0 0
        %2465 = vmatpush1.bf16.xpose.msra.mxu0 0
        %2466 = vmatprep.subr.bf16.mxu0 0
        %2467 = vmatpush1.bf16.xpose.msra.mxu0 0
        %2468 = vmatprep.subr.bf16.mxu0 0
        %2469 = vmatpush1.bf16.xpose.msra.mxu0 0
        %2470 = vmatprep.mubr.bf16.mxu0 0
        %2471 = vmatmul.mubr.bf16.gmra.mrb[0].mxu0 %v2433
        %v2472 = vpop.f32.mrb[0].mxu0
        %v2473 = vadd.f32 0.0, %v2472
        %v2474 = vpop.f32.mrb[0].mxu0
        %v2475 = vpop.f32.mrb[0].mxu0
        %v2476 = vpop.f32.mrb[0].mxu0
        %2477 = vdwg.mxu0
        %v2478 = vmul.f32 %v2423, 0.17677669
        %v2479 = vmul.f32 %v2473, 0.17677669
        %v2480 = vadd.f32 %v2478, %v1398
        %v2481 = vadd.f32 %v2479, %v1399
        %v2482 = vsel %vm1804, %v2480, -inf
        %2483 = vmax.xlane.f32.xlu0 %v2482
        %v2484 = vpop.xlane.xlu0 %2483
        %v2485 = vsel %vm1804, %v2481, -inf
        %2486 = vmax.xlane.f32.xlu0 %v2485
        %v2487 = vpop.xlane.xlu0 %2486
        %v2488 = vsub.f32 %v2480, %v2484
        %v2489 = vsub.f32 %v2481, %v2487
        %v2490 = vmul.f32 %v2488, 1.442695
        %v2491 = vpow.pop %v2490
        %v2492 = vmul.f32 %v2489, 1.442695
        %v2493 = vpow.pop %v2492
        %v2494 = vsel %vm1804, %v2491, 0.0
        %2495 = vadd.xlane.f32.xlu0 %v2494
        %v2496 = vpop.xlane.xlu0 %2495
        %v2497 = vsel %vm1804, %v2493, 0.0
        %2498 = vadd.xlane.f32.xlu0 %v2497
        %v2499 = vpop.xlane.xlu0 %2498
        %v2500 = vrcp.pop %v2496
        %v2501 = vrcp.pop %v2499
        %v2502 = vmul.f32 %v2491, %v2500
        %v2503 = vmul.f32 %v2493, %v2501
        %v2504 = vpack.c.bf16 %v2502, %v2502
        %v2505 = vpack.c.bf16 %v2503, %v2503
        %2506 = vrot.lane.b32.xlu0 %v1829, 32
        %v2507 = vpop.permute.xlu0 %2506
        %v2509 = vsel %vm1804, %v2504, 0
        %v2512 = vsel %vm1834, %v2507, 0
        %2514 = vmatprep.subr.bf16.mxu0 0
        %2515 = vmatpush1.bf16.msra.mxu0 %v2512
        %2516 = vmatprep.subr.bf16.mxu0 0
        %2517 = vmatpush1.bf16.msra.mxu0 0
        %2518 = vmatprep.subr.bf16.mxu0 0
        %2519 = vmatpush1.bf16.msra.mxu0 0
        %2520 = vmatprep.subr.bf16.mxu0 0
        %2521 = vmatpush1.bf16.msra.mxu0 0
        %2522 = vmatprep.subr.bf16.mxu0 0
        %2523 = vmatpush1.bf16.msra.mxu0 0
        %2524 = vmatprep.subr.bf16.mxu0 0
        %2525 = vmatpush1.bf16.msra.mxu0 0
        %2526 = vmatprep.subr.bf16.mxu0 0
        %2527 = vmatpush1.bf16.msra.mxu0 0
        %2528 = vmatprep.subr.bf16.mxu0 0
        %2529 = vmatpush1.bf16.msra.mxu0 0
        %2530 = vmatprep.subr.bf16.mxu0 0
        %2531 = vmatpush1.bf16.msra.mxu0 0
        %2532 = vmatprep.subr.bf16.mxu0 0
        %2533 = vmatpush1.bf16.msra.mxu0 0
        %2534 = vmatprep.subr.bf16.mxu0 0
        %2535 = vmatpush1.bf16.msra.mxu0 0
        %2536 = vmatprep.subr.bf16.mxu0 0
        %2537 = vmatpush1.bf16.msra.mxu0 0
        %2538 = vmatprep.subr.bf16.mxu0 0
        %2539 = vmatpush1.bf16.msra.mxu0 0
        %2540 = vmatprep.subr.bf16.mxu0 0
        %2541 = vmatpush1.bf16.msra.mxu0 0
        %2542 = vmatprep.subr.bf16.mxu0 0
        %2543 = vmatpush1.bf16.msra.mxu0 0
        %2544 = vmatprep.subr.bf16.mxu0 0
        %2545 = vmatpush1.bf16.msra.mxu0 0
        %2546 = vmatprep.mubr.bf16.mxu0 0
        %2547 = vmatmul.mubr.bf16.gmra.mrb[0].mxu0 %v2509
        %v2548 = vpop.f32.mrb[0].mxu0
        %v2549 = vadd.f32 0.0, %v2548
        %v2550 = vpop.f32.mrb[0].mxu0
        %v2551 = vpop.f32.mrb[0].mxu0
        %v2552 = vpop.f32.mrb[0].mxu0
        %2553 = vdwg.mxu0
        %2554 = vrot.lane.b32.xlu0 %v1830, 32
        %v2555 = vpop.permute.xlu0 %2554
        %v2557 = vsel %vm1804, %v2505, 0
        %v2560 = vsel %vm1834, %v2555, 0
        %2562 = vmatprep.subr.bf16.mxu0 0
        %2563 = vmatpush1.bf16.msra.mxu0 %v2560
        %2564 = vmatprep.subr.bf16.mxu0 0
        %2565 = vmatpush1.bf16.msra.mxu0 0
        %2566 = vmatprep.subr.bf16.mxu0 0
        %2567 = vmatpush1.bf16.msra.mxu0 0
        %2568 = vmatprep.subr.bf16.mxu0 0
        %2569 = vmatpush1.bf16.msra.mxu0 0
        %2570 = vmatprep.subr.bf16.mxu0 0
        %2571 = vmatpush1.bf16.msra.mxu0 0
        %2572 = vmatprep.subr.bf16.mxu0 0
        %2573 = vmatpush1.bf16.msra.mxu0 0
        %2574 = vmatprep.subr.bf16.mxu0 0
        %2575 = vmatpush1.bf16.msra.mxu0 0
        %2576 = vmatprep.subr.bf16.mxu0 0
        %2577 = vmatpush1.bf16.msra.mxu0 0
        %2578 = vmatprep.subr.bf16.mxu0 0
        %2579 = vmatpush1.bf16.msra.mxu0 0
        %2580 = vmatprep.subr.bf16.mxu0 0
        %2581 = vmatpush1.bf16.msra.mxu0 0
        %2582 = vmatprep.subr.bf16.mxu0 0
        %2583 = vmatpush1.bf16.msra.mxu0 0
        %2584 = vmatprep.subr.bf16.mxu0 0
        %2585 = vmatpush1.bf16.msra.mxu0 0
        %2586 = vmatprep.subr.bf16.mxu0 0
        %2587 = vmatpush1.bf16.msra.mxu0 0
        %2588 = vmatprep.subr.bf16.mxu0 0
        %2589 = vmatpush1.bf16.msra.mxu0 0
        %2590 = vmatprep.subr.bf16.mxu0 0
        %2591 = vmatpush1.bf16.msra.mxu0 0
        %2592 = vmatprep.subr.bf16.mxu0 0
        %2593 = vmatpush1.bf16.msra.mxu0 0
        %2594 = vmatprep.mubr.bf16.mxu0 0
        %2595 = vmatmul.mubr.bf16.gmra.mrb[0].mxu0 %v2557
        %v2596 = vpop.f32.mrb[0].mxu0
        %v2597 = vadd.f32 0.0, %v2596
        %v2598 = vpop.f32.mrb[0].mxu0
        %v2599 = vpop.f32.mrb[0].mxu0
        %v2600 = vpop.f32.mrb[0].mxu0
        %2601 = vdwg.mxu0
        %2604 = vrot.lane.b32.xlu0 %v2100, 32
        %v2605 = vpop.permute.xlu0 %2604
        %2606 = vrot.lane.b32.xlu0 %v2149, 32
        %v2607 = vpop.permute.xlu0 %2606
        %2612 = vrot.lane.b32.xlu0 %v2325, 64
        %v2613 = vpop.permute.xlu0 %2612
        %2614 = vrot.lane.b32.xlu0 %v2373, 64
        %v2615 = vpop.permute.xlu0 %2614
        %2620 = vrot.lane.b32.xlu0 %v2549, 96
        %v2621 = vpop.permute.xlu0 %2620
        %2622 = vrot.lane.b32.xlu0 %v2597, 96
        %v2623 = vpop.permute.xlu0 %2622
        %v2626 = vsel %vm1707, %v1873, %v2605
        %v2627 = vsel %vm1707, %v1919, %v2607
        %vm2628 = vcmask 523264
        %v2629 = vsel %vm2628, %v2626, %v2613
        %v2630 = vsel %vm2628, %v2627, %v2615
        %vm2631 = vcmask 785408
        %v2632 = vsel %vm2631, %v2629, %v2621
        %v2633 = vsel %vm2631, %v2630, %v2623
        %v2634 = vld [vmem:[%s987] sm:$0xf]
        %v2635 = vld [vmem:[%s987 + $0x4] sm:$0xf]
        %v2636 = vld [vmem:[%s987 + $0x8] sm:$0xf]
        %v2637 = vld [vmem:[%s987 + $0xc] sm:$0xf]
        %v2638 = vld [vmem:[%s987 + $0x10] sm:$0xf]
        %v2639 = vld [vmem:[%s987 + $0x14] sm:$0xf]
        %v2640 = vld [vmem:[%s987 + $0x18] sm:$0xf]
        %v2641 = vld [vmem:[%s987 + $0x1c] sm:$0xf]
        %v2642 = vld [vmem:[%s987 + $0x20] sm:$0xf]
        %v2643 = vld [vmem:[%s987 + $0x24] sm:$0xf]
        %v2644 = vld [vmem:[%s987 + $0x28] sm:$0xf]
        %v2645 = vld [vmem:[%s987 + $0x2c] sm:$0xf]
        %v2646 = vld [vmem:[%s987 + $0x30] sm:$0xf]
        %v2647 = vld [vmem:[%s987 + $0x34] sm:$0xf]
        %v2648 = vld [vmem:[%s987 + $0x38] sm:$0xf]
        %v2649 = vld [vmem:[%s987 + $0x3c] sm:$0xf]
        %v2650 = vpack.c.bf16 %v2633, %v2632
        %v2667 = vunpack.c.l.b16 %v2634
        %v2668 = vunpack.c.l.b16 %v2635
        %v2669 = vunpack.c.l.b16 %v2636
        %v2670 = vunpack.c.l.b16 %v2637
        %v2671 = vunpack.c.l.b16 %v2638
        %v2672 = vunpack.c.l.b16 %v2639
        %v2673 = vunpack.c.l.b16 %v2640
        %v2674 = vunpack.c.l.b16 %v2641
        %v2675 = vunpack.c.l.b16 %v2642
        %v2676 = vunpack.c.l.b16 %v2643
        %v2677 = vunpack.c.l.b16 %v2644
        %v2678 = vunpack.c.l.b16 %v2645
        %v2679 = vunpack.c.l.b16 %v2646
        %v2680 = vunpack.c.l.b16 %v2647
        %v2681 = vunpack.c.l.b16 %v2648
        %v2682 = vunpack.c.l.b16 %v2649
        %v2683 = vpack.c.b16 %v2668, %v2667
        %v2684 = vpack.c.b16 %v2670, %v2669
        %v2685 = vpack.c.b16 %v2672, %v2671
        %v2686 = vpack.c.b16 %v2674, %v2673
        %v2687 = vpack.c.b16 %v2676, %v2675
        %v2688 = vpack.c.b16 %v2678, %v2677
        %v2689 = vpack.c.b16 %v2680, %v2679
        %v2690 = vpack.c.b16 %v2682, %v2681
        %2699 = vmatprep.subr.bf16.mxu0 0
        %2700 = vmatpush1.bf16.msra.mxu0 %v2683
        %2701 = vmatprep.subr.bf16.mxu0 0
        %2702 = vmatpush1.bf16.msra.mxu0 %v2684
        %2703 = vmatprep.subr.bf16.mxu0 0
        %2704 = vmatpush1.bf16.msra.mxu0 %v2685
        %2705 = vmatprep.subr.bf16.mxu0 0
        %2706 = vmatpush1.bf16.msra.mxu0 %v2686
        %2707 = vmatprep.subr.bf16.mxu0 0
        %2708 = vmatpush1.bf16.msra.mxu0 %v2687
        %2709 = vmatprep.subr.bf16.mxu0 0
        %2710 = vmatpush1.bf16.msra.mxu0 %v2688
        %2711 = vmatprep.subr.bf16.mxu0 0
        %2712 = vmatpush1.bf16.msra.mxu0 %v2689
        %2713 = vmatprep.subr.bf16.mxu0 0
        %2714 = vmatpush1.bf16.msra.mxu0 %v2690
        %2715 = vmatprep.subr.bf16.mxu0 0
        %2716 = vmatpush1.bf16.msra.mxu0 0
        %2717 = vmatprep.subr.bf16.mxu0 0
        %2718 = vmatpush1.bf16.msra.mxu0 0
        %2719 = vmatprep.subr.bf16.mxu0 0
        %2720 = vmatpush1.bf16.msra.mxu0 0
        %2721 = vmatprep.subr.bf16.mxu0 0
        %2722 = vmatpush1.bf16.msra.mxu0 0
        %2723 = vmatprep.subr.bf16.mxu0 0
        %2724 = vmatpush1.bf16.msra.mxu0 0
        %2725 = vmatprep.subr.bf16.mxu0 0
        %2726 = vmatpush1.bf16.msra.mxu0 0
        %2727 = vmatprep.subr.bf16.mxu0 0
        %2728 = vmatpush1.bf16.msra.mxu0 0
        %2729 = vmatprep.subr.bf16.mxu0 0
        %2730 = vmatpush1.bf16.msra.mxu0 0
        %2731 = vmatprep.mubr.bf16.mxu0 0
        %2732 = vmatmul.mubr.bf16.gmra.mrb[0].mxu0 %v2650
        %v2733 = vpop.f32.mrb[0].mxu0
        %v2734 = vadd.f32 0.0, %v2733
        %v2735 = vpop.f32.mrb[0].mxu0
        %v2736 = vpop.f32.mrb[0].mxu0
        %v2737 = vadd.f32 0.0, %v2736
        %v2738 = vpop.f32.mrb[0].mxu0
        %2739 = vdwg.mxu0
        %v2740 = vadd.f32 %v1396, %v2734
        %v2741 = vadd.f32 %v1397, %v2737
        %v2742 = vld [vmem:[%s1159] sm:$0x1]
        %v2744 = vlaneseq
        %v2745 = vshrl.u32 %v2744, 7
        %v2746 = vsub.s32 0, %v2745
        %v2747 = vrot.slane %v2742, %v2746
        %v2749 = vadd.f32 %v2740, %v2747
        %v2750 = vadd.f32 %v2741, %v2747
        %v2751 = vld [vmem:[%s995] sm:$0x1]
        %v2752 = vld [vmem:[%s1003] sm:$0x1]
        %2753 = vadd.xlane.f32.xlu0 %v2749
        %v2754 = vpop.xlane.xlu0 %2753
        %2755 = vadd.xlane.f32.xlu0 %v2750
        %v2756 = vpop.xlane.xlu0 %2755
        %v2757 = vmul.f32 %v2754, %v1406
        %v2758 = vmul.f32 %v2756, %v1406
        %v2759 = vsub.f32 %v2749, %v2757
        %v2760 = vsub.f32 %v2750, %v2758
        %v2761 = vmul.f32 %v2759, %v2759
        %v2762 = vmul.f32 %v2760, %v2760
        %2763 = vadd.xlane.f32.xlu0 %v2761
        %v2764 = vpop.xlane.xlu0 %2763
        %2765 = vadd.xlane.f32.xlu0 %v2762
        %v2766 = vpop.xlane.xlu0 %2765
        %v2767 = vmul.f32 %v2764, %v1406
        %v2768 = vmul.f32 %v2766, %v1406
        %v2769 = vadd.f32 %v2767, 1e-05
        %v2770 = vadd.f32 %v2768, 1e-05
        %v2771 = vrsqrt.pop %v2769
        %v2772 = vrsqrt.pop %v2770
        %v2773 = vmul.f32 %v2759, %v2771
        %v2774 = vmul.f32 %v2760, %v2772
        %v2776 = vlaneseq
        %v2777 = vshrl.u32 %v2776, 7
        %v2778 = vsub.s32 0, %v2777
        %v2779 = vrot.slane %v2751, %v2778
        %v2781 = vmul.f32 %v2773, %v2779
        %v2782 = vmul.f32 %v2774, %v2779
        %v2784 = vlaneseq
        %v2785 = vshrl.u32 %v2784, 7
        %v2786 = vsub.s32 0, %v2785
        %v2787 = vrot.slane %v2752, %v2786
        %v2789 = vadd.f32 %v2781, %v2787
        %v2790 = vadd.f32 %v2782, %v2787
        %v2791 = vld [vmem:[%s1164] sm:$0xff]
        %v2792 = vld [vmem:[%s1164 + $0x8] sm:$0xff]
        %v2793 = vld [vmem:[%s1164 + $0x10] sm:$0xff]
        %v2794 = vld [vmem:[%s1164 + $0x18] sm:$0xff]
        %v2795 = vld [vmem:[%s1164 + $0x20] sm:$0xff]
        %v2796 = vld [vmem:[%s1164 + $0x28] sm:$0xff]
        %v2797 = vld [vmem:[%s1164 + $0x30] sm:$0xff]
        %v2798 = vld [vmem:[%s1164 + $0x38] sm:$0xff]
        %v2799 = vld [vmem:[%s1164 + $0x40] sm:$0xff]
        %v2800 = vld [vmem:[%s1164 + $0x48] sm:$0xff]
        %v2801 = vld [vmem:[%s1164 + $0x50] sm:$0xff]
        %v2802 = vld [vmem:[%s1164 + $0x58] sm:$0xff]
        %v2803 = vld [vmem:[%s1164 + $0x60] sm:$0xff]
        %v2804 = vld [vmem:[%s1164 + $0x68] sm:$0xff]
        %v2805 = vld [vmem:[%s1164 + $0x70] sm:$0xff]
        %v2806 = vld [vmem:[%s1164 + $0x78] sm:$0xff]
        %v2807 = vld [vmem:[%s1164 + $0x80] sm:$0xff]
        %v2808 = vld [vmem:[%s1164 + $0x88] sm:$0xff]
        %v2809 = vld [vmem:[%s1164 + $0x90] sm:$0xff]
        %v2810 = vld [vmem:[%s1164 + $0x98] sm:$0xff]
        %v2811 = vld [vmem:[%s1164 + $0xa0] sm:$0xff]
        %v2812 = vld [vmem:[%s1164 + $0xa8] sm:$0xff]
        %v2813 = vld [vmem:[%s1164 + $0xb0] sm:$0xff]
        %v2814 = vld [vmem:[%s1164 + $0xb8] sm:$0xff]
        %v2815 = vld [vmem:[%s1164 + $0xc0] sm:$0xff]
        %v2816 = vld [vmem:[%s1164 + $0xc8] sm:$0xff]
        %v2817 = vld [vmem:[%s1164 + $0xd0] sm:$0xff]
        %v2818 = vld [vmem:[%s1164 + $0xd8] sm:$0xff]
        %v2819 = vld [vmem:[%s1164 + $0xe0] sm:$0xff]
        %v2820 = vld [vmem:[%s1164 + $0xe8] sm:$0xff]
        %v2821 = vld [vmem:[%s1164 + $0xf0] sm:$0xff]
        %v2822 = vld [vmem:[%s1164 + $0xf8] sm:$0xff]
        %v2823 = vpack.c.bf16 %v2790, %v2789
        %v2824 = vld [vmem:[%s1012] sm:$0xf]
        %v2826 = vlaneseq
        %v2827 = vshrl.u32 %v2826, 7
        %v2828 = vsub.s32 0, %v2827
        %v2829 = vrot.slane %v2824, %v2828
        %v2830 = vlaneseq
        %v2831 = vshrl.u32 %v2830, 7
        %v2832 = vsub.s32 1, %v2831
        %v2833 = vrot.slane %v2824, %v2832
        %v2834 = vlaneseq
        %v2835 = vshrl.u32 %v2834, 7
        %v2836 = vsub.s32 2, %v2835
        %v2837 = vrot.slane %v2824, %v2836
        %v2838 = vlaneseq
        %v2839 = vshrl.u32 %v2838, 7
        %v2840 = vsub.s32 3, %v2839
        %v2841 = vrot.slane %v2824, %v2840
        %v2878 = vunpack.c.l.b16 %v2791
        %v2879 = vunpack.c.h.b16 %v2791
        %v2880 = vunpack.c.l.b16 %v2792
        %v2881 = vunpack.c.h.b16 %v2792
        %v2882 = vunpack.c.l.b16 %v2793
        %v2883 = vunpack.c.h.b16 %v2793
        %v2884 = vunpack.c.l.b16 %v2794
        %v2885 = vunpack.c.h.b16 %v2794
        %v2886 = vunpack.c.l.b16 %v2795
        %v2887 = vunpack.c.h.b16 %v2795
        %v2888 = vunpack.c.l.b16 %v2796
        %v2889 = vunpack.c.h.b16 %v2796
        %v2890 = vunpack.c.l.b16 %v2797
        %v2891 = vunpack.c.h.b16 %v2797
        %v2892 = vunpack.c.l.b16 %v2798
        %v2893 = vunpack.c.h.b16 %v2798
        %v2894 = vunpack.c.l.b16 %v2799
        %v2895 = vunpack.c.h.b16 %v2799
        %v2896 = vunpack.c.l.b16 %v2800
        %v2897 = vunpack.c.h.b16 %v2800
        %v2898 = vunpack.c.l.b16 %v2801
        %v2899 = vunpack.c.h.b16 %v2801
        %v2900 = vunpack.c.l.b16 %v2802
        %v2901 = vunpack.c.h.b16 %v2802
        %v2902 = vunpack.c.l.b16 %v2803
        %v2903 = vunpack.c.h.b16 %v2803
        %v2904 = vunpack.c.l.b16 %v2804
        %v2905 = vunpack.c.h.b16 %v2804
        %v2906 = vunpack.c.l.b16 %v2805
        %v2907 = vunpack.c.h.b16 %v2805
        %v2908 = vunpack.c.l.b16 %v2806
        %v2909 = vunpack.c.h.b16 %v2806
        %v2910 = vunpack.c.l.b16 %v2807
        %v2911 = vunpack.c.h.b16 %v2807
        %v2912 = vunpack.c.l.b16 %v2808
        %v2913 = vunpack.c.h.b16 %v2808
        %v2914 = vunpack.c.l.b16 %v2809
        %v2915 = vunpack.c.h.b16 %v2809
        %v2916 = vunpack.c.l.b16 %v2810
        %v2917 = vunpack.c.h.b16 %v2810
        %v2918 = vunpack.c.l.b16 %v2811
        %v2919 = vunpack.c.h.b16 %v2811
        %v2920 = vunpack.c.l.b16 %v2812
        %v2921 = vunpack.c.h.b16 %v2812
        %v2922 = vunpack.c.l.b16 %v2813
        %v2923 = vunpack.c.h.b16 %v2813
        %v2924 = vunpack.c.l.b16 %v2814
        %v2925 = vunpack.c.h.b16 %v2814
        %v2926 = vunpack.c.l.b16 %v2815
        %v2927 = vunpack.c.h.b16 %v2815
        %v2928 = vunpack.c.l.b16 %v2816
        %v2929 = vunpack.c.h.b16 %v2816
        %v2930 = vunpack.c.l.b16 %v2817
        %v2931 = vunpack.c.h.b16 %v2817
        %v2932 = vunpack.c.l.b16 %v2818
        %v2933 = vunpack.c.h.b16 %v2818
        %v2934 = vunpack.c.l.b16 %v2819
        %v2935 = vunpack.c.h.b16 %v2819
        %v2936 = vunpack.c.l.b16 %v2820
        %v2937 = vunpack.c.h.b16 %v2820
        %v2938 = vunpack.c.l.b16 %v2821
        %v2939 = vunpack.c.h.b16 %v2821
        %v2940 = vunpack.c.l.b16 %v2822
        %v2941 = vunpack.c.h.b16 %v2822
        %v2942 = vpack.c.b16 %v2882, %v2878
        %v2943 = vpack.c.b16 %v2883, %v2879
        %v2944 = vpack.c.b16 %v2884, %v2880
        %v2945 = vpack.c.b16 %v2885, %v2881
        %v2946 = vpack.c.b16 %v2890, %v2886
        %v2947 = vpack.c.b16 %v2891, %v2887
        %v2948 = vpack.c.b16 %v2892, %v2888
        %v2949 = vpack.c.b16 %v2893, %v2889
        %v2950 = vpack.c.b16 %v2898, %v2894
        %v2951 = vpack.c.b16 %v2899, %v2895
        %v2952 = vpack.c.b16 %v2900, %v2896
        %v2953 = vpack.c.b16 %v2901, %v2897
        %v2954 = vpack.c.b16 %v2906, %v2902
        %v2955 = vpack.c.b16 %v2907, %v2903
        %v2956 = vpack.c.b16 %v2908, %v2904
        %v2957 = vpack.c.b16 %v2909, %v2905
        %v2958 = vpack.c.b16 %v2914, %v2910
        %v2959 = vpack.c.b16 %v2915, %v2911
        %v2960 = vpack.c.b16 %v2916, %v2912
        %v2961 = vpack.c.b16 %v2917, %v2913
        %v2962 = vpack.c.b16 %v2922, %v2918
        %v2963 = vpack.c.b16 %v2923, %v2919
        %v2964 = vpack.c.b16 %v2924, %v2920
        %v2965 = vpack.c.b16 %v2925, %v2921
        %v2966 = vpack.c.b16 %v2930, %v2926
        %v2967 = vpack.c.b16 %v2931, %v2927
        %v2968 = vpack.c.b16 %v2932, %v2928
        %v2969 = vpack.c.b16 %v2933, %v2929
        %v2970 = vpack.c.b16 %v2938, %v2934
        %v2971 = vpack.c.b16 %v2939, %v2935
        %v2972 = vpack.c.b16 %v2940, %v2936
        %v2973 = vpack.c.b16 %v2941, %v2937
        %3006 = vmatprep.subr.bf16.mxu0 %v2943
        %3007 = vmatpush1.bf16.msra.mxu0 %v2942
        %3008 = vmatprep.subr.bf16.mxu0 %v2947
        %3009 = vmatpush1.bf16.msra.mxu0 %v2946
        %3010 = vmatprep.subr.bf16.mxu0 %v2951
        %3011 = vmatpush1.bf16.msra.mxu0 %v2950
        %3012 = vmatprep.subr.bf16.mxu0 %v2955
        %3013 = vmatpush1.bf16.msra.mxu0 %v2954
        %3014 = vmatprep.subr.bf16.mxu0 %v2959
        %3015 = vmatpush1.bf16.msra.mxu0 %v2958
        %3016 = vmatprep.subr.bf16.mxu0 %v2963
        %3017 = vmatpush1.bf16.msra.mxu0 %v2962
        %3018 = vmatprep.subr.bf16.mxu0 %v2967
        %3019 = vmatpush1.bf16.msra.mxu0 %v2966
        %3020 = vmatprep.subr.bf16.mxu0 %v2971
        %3021 = vmatpush1.bf16.msra.mxu0 %v2970
        %3022 = vmatprep.subr.bf16.mxu0 0
        %3023 = vmatpush1.bf16.msra.mxu0 0
        %3024 = vmatprep.subr.bf16.mxu0 0
        %3025 = vmatpush1.bf16.msra.mxu0 0
        %3026 = vmatprep.subr.bf16.mxu0 0
        %3027 = vmatpush1.bf16.msra.mxu0 0
        %3028 = vmatprep.subr.bf16.mxu0 0
        %3029 = vmatpush1.bf16.msra.mxu0 0
        %3030 = vmatprep.subr.bf16.mxu0 0
        %3031 = vmatpush1.bf16.msra.mxu0 0
        %3032 = vmatprep.subr.bf16.mxu0 0
        %3033 = vmatpush1.bf16.msra.mxu0 0
        %3034 = vmatprep.subr.bf16.mxu0 0
        %3035 = vmatpush1.bf16.msra.mxu0 0
        %3036 = vmatprep.subr.bf16.mxu0 0
        %3037 = vmatpush1.bf16.msra.mxu0 0
        %3038 = vmatprep.mubr.bf16.mxu0 0
        %3039 = vmatmul.mubr.bf16.gmra.mrb[0].mxu0 %v2823
        %v3040 = vpop.f32.mrb[0].mxu0
        %v3041 = vadd.f32 %v2829, %v3040
        %v3042 = vpop.f32.mrb[0].mxu0
        %v3043 = vadd.f32 %v2833, %v3042
        %v3044 = vpop.f32.mrb[0].mxu0
        %v3045 = vadd.f32 %v2829, %v3044
        %v3046 = vpop.f32.mrb[0].mxu0
        %v3047 = vadd.f32 %v2833, %v3046
        %3048 = vdwg.mxu0
        %3049 = vmatprep.subr.bf16.mxu0 %v2945
        %3050 = vmatpush1.bf16.msra.mxu0 %v2944
        %3051 = vmatprep.subr.bf16.mxu0 %v2949
        %3052 = vmatpush1.bf16.msra.mxu0 %v2948
        %3053 = vmatprep.subr.bf16.mxu0 %v2953
        %3054 = vmatpush1.bf16.msra.mxu0 %v2952
        %3055 = vmatprep.subr.bf16.mxu0 %v2957
        %3056 = vmatpush1.bf16.msra.mxu0 %v2956
        %3057 = vmatprep.subr.bf16.mxu0 %v2961
        %3058 = vmatpush1.bf16.msra.mxu0 %v2960
        %3059 = vmatprep.subr.bf16.mxu0 %v2965
        %3060 = vmatpush1.bf16.msra.mxu0 %v2964
        %3061 = vmatprep.subr.bf16.mxu0 %v2969
        %3062 = vmatpush1.bf16.msra.mxu0 %v2968
        %3063 = vmatprep.subr.bf16.mxu0 %v2973
        %3064 = vmatpush1.bf16.msra.mxu0 %v2972
        %3065 = vmatprep.subr.bf16.mxu0 0
        %3066 = vmatpush1.bf16.msra.mxu0 0
        %3067 = vmatprep.subr.bf16.mxu0 0
        %3068 = vmatpush1.bf16.msra.mxu0 0
        %3069 = vmatprep.subr.bf16.mxu0 0
        %3070 = vmatpush1.bf16.msra.mxu0 0
        %3071 = vmatprep.subr.bf16.mxu0 0
        %3072 = vmatpush1.bf16.msra.mxu0 0
        %3073 = vmatprep.subr.bf16.mxu0 0
        %3074 = vmatpush1.bf16.msra.mxu0 0
        %3075 = vmatprep.subr.bf16.mxu0 0
        %3076 = vmatpush1.bf16.msra.mxu0 0
        %3077 = vmatprep.subr.bf16.mxu0 0
        %3078 = vmatpush1.bf16.msra.mxu0 0
        %3079 = vmatprep.subr.bf16.mxu0 0
        %3080 = vmatpush1.bf16.msra.mxu0 0
        %3081 = vmatprep.mubr.bf16.mxu0 0
        %3082 = vmatmul.mubr.bf16.gmra.mrb[0].mxu0 %v2823
        %v3083 = vpop.f32.mrb[0].mxu0
        %v3084 = vadd.f32 %v2837, %v3083
        %v3085 = vpop.f32.mrb[0].mxu0
        %v3086 = vadd.f32 %v2841, %v3085
        %v3087 = vpop.f32.mrb[0].mxu0
        %v3088 = vadd.f32 %v2837, %v3087
        %v3089 = vpop.f32.mrb[0].mxu0
        %v3090 = vadd.f32 %v2841, %v3089
        %3091 = vdwg.mxu0
        %v3092 = vmul.f32 %v3041, 1.702
        %v3093 = vmul.f32 %v3043, 1.702
        %v3094 = vmul.f32 %v3084, 1.702
        %v3095 = vmul.f32 %v3086, 1.702
        %v3096 = vmul.f32 %v3045, 1.702
        %v3097 = vmul.f32 %v3047, 1.702
        %v3098 = vmul.f32 %v3088, 1.702
        %v3099 = vmul.f32 %v3090, 1.702
        %v3100 = vxor.u32 %v3092, 2147483648
        %v3101 = vxor.u32 %v3093, 2147483648
        %v3102 = vxor.u32 %v3094, 2147483648
        %v3103 = vxor.u32 %v3095, 2147483648
        %v3104 = vxor.u32 %v3096, 2147483648
        %v3105 = vxor.u32 %v3097, 2147483648
        %v3106 = vxor.u32 %v3098, 2147483648
        %v3107 = vxor.u32 %v3099, 2147483648
        %v3108 = vmul.f32 %v3100, 1.442695
        %v3109 = vpow.pop %v3108
        %v3110 = vmul.f32 %v3101, 1.442695
        %v3111 = vpow.pop %v3110
        %v3112 = vmul.f32 %v3102, 1.442695
        %v3113 = vpow.pop %v3112
        %v3114 = vmul.f32 %v3103, 1.442695
        %v3115 = vpow.pop %v3114
        %v3116 = vmul.f32 %v3104, 1.442695
        %v3117 = vpow.pop %v3116
        %v3118 = vmul.f32 %v3105, 1.442695
        %v3119 = vpow.pop %v3118
        %v3120 = vmul.f32 %v3106, 1.442695
        %v3121 = vpow.pop %v3120
        %v3122 = vmul.f32 %v3107, 1.442695
        %v3123 = vpow.pop %v3122
        %v3124 = vadd.f32 %v3109, 1.0
        %v3125 = vadd.f32 %v3111, 1.0
        %v3126 = vadd.f32 %v3113, 1.0
        %v3127 = vadd.f32 %v3115, 1.0
        %v3128 = vadd.f32 %v3117, 1.0
        %v3129 = vadd.f32 %v3119, 1.0
        %v3130 = vadd.f32 %v3121, 1.0
        %v3131 = vadd.f32 %v3123, 1.0
        %v3132 = vrcp.pop %v3124
        %v3133 = vmul.f32 1.0, %v3132
        %v3134 = vrcp.pop %v3125
        %v3135 = vmul.f32 1.0, %v3134
        %v3136 = vrcp.pop %v3126
        %v3137 = vmul.f32 1.0, %v3136
        %v3138 = vrcp.pop %v3127
        %v3139 = vmul.f32 1.0, %v3138
        %v3140 = vrcp.pop %v3128
        %v3141 = vmul.f32 1.0, %v3140
        %v3142 = vrcp.pop %v3129
        %v3143 = vmul.f32 1.0, %v3142
        %v3144 = vrcp.pop %v3130
        %v3145 = vmul.f32 1.0, %v3144
        %v3146 = vrcp.pop %v3131
        %v3147 = vmul.f32 1.0, %v3146
        %v3148 = vmul.f32 %v3041, %v3133
        %v3149 = vmul.f32 %v3043, %v3135
        %v3150 = vmul.f32 %v3084, %v3137
        %v3151 = vmul.f32 %v3086, %v3139
        %v3152 = vmul.f32 %v3045, %v3141
        %v3153 = vmul.f32 %v3047, %v3143
        %v3154 = vmul.f32 %v3088, %v3145
        %v3155 = vmul.f32 %v3090, %v3147
        %v3156 = vld [vmem:[%s1021] sm:$0xf]
        %v3157 = vld [vmem:[%s1021 + $0x4] sm:$0xf]
        %v3158 = vld [vmem:[%s1021 + $0x8] sm:$0xf]
        %v3159 = vld [vmem:[%s1021 + $0xc] sm:$0xf]
        %v3160 = vld [vmem:[%s1021 + $0x10] sm:$0xf]
        %v3161 = vld [vmem:[%s1021 + $0x14] sm:$0xf]
        %v3162 = vld [vmem:[%s1021 + $0x18] sm:$0xf]
        %v3163 = vld [vmem:[%s1021 + $0x1c] sm:$0xf]
        %v3164 = vld [vmem:[%s1021 + $0x20] sm:$0xf]
        %v3165 = vld [vmem:[%s1021 + $0x24] sm:$0xf]
        %v3166 = vld [vmem:[%s1021 + $0x28] sm:$0xf]
        %v3167 = vld [vmem:[%s1021 + $0x2c] sm:$0xf]
        %v3168 = vld [vmem:[%s1021 + $0x30] sm:$0xf]
        %v3169 = vld [vmem:[%s1021 + $0x34] sm:$0xf]
        %v3170 = vld [vmem:[%s1021 + $0x38] sm:$0xf]
        %v3171 = vld [vmem:[%s1021 + $0x3c] sm:$0xf]
        %v3172 = vld [vmem:[%s1021 + $0x40] sm:$0xf]
        %v3173 = vld [vmem:[%s1021 + $0x44] sm:$0xf]
        %v3174 = vld [vmem:[%s1021 + $0x48] sm:$0xf]
        %v3175 = vld [vmem:[%s1021 + $0x4c] sm:$0xf]
        %v3176 = vld [vmem:[%s1021 + $0x50] sm:$0xf]
        %v3177 = vld [vmem:[%s1021 + $0x54] sm:$0xf]
        %v3178 = vld [vmem:[%s1021 + $0x58] sm:$0xf]
        %v3179 = vld [vmem:[%s1021 + $0x5c] sm:$0xf]
        %v3180 = vld [vmem:[%s1021 + $0x60] sm:$0xf]
        %v3181 = vld [vmem:[%s1021 + $0x64] sm:$0xf]
        %v3182 = vld [vmem:[%s1021 + $0x68] sm:$0xf]
        %v3183 = vld [vmem:[%s1021 + $0x6c] sm:$0xf]
        %v3184 = vld [vmem:[%s1021 + $0x70] sm:$0xf]
        %v3185 = vld [vmem:[%s1021 + $0x74] sm:$0xf]
        %v3186 = vld [vmem:[%s1021 + $0x78] sm:$0xf]
        %v3187 = vld [vmem:[%s1021 + $0x7c] sm:$0xf]
        %v3188 = vld [vmem:[%s1021 + $0x80] sm:$0xf]
        %v3189 = vld [vmem:[%s1021 + $0x84] sm:$0xf]
        %v3190 = vld [vmem:[%s1021 + $0x88] sm:$0xf]
        %v3191 = vld [vmem:[%s1021 + $0x8c] sm:$0xf]
        %v3192 = vld [vmem:[%s1021 + $0x90] sm:$0xf]
        %v3193 = vld [vmem:[%s1021 + $0x94] sm:$0xf]
        %v3194 = vld [vmem:[%s1021 + $0x98] sm:$0xf]
        %v3195 = vld [vmem:[%s1021 + $0x9c] sm:$0xf]
        %v3196 = vld [vmem:[%s1021 + $0xa0] sm:$0xf]
        %v3197 = vld [vmem:[%s1021 + $0xa4] sm:$0xf]
        %v3198 = vld [vmem:[%s1021 + $0xa8] sm:$0xf]
        %v3199 = vld [vmem:[%s1021 + $0xac] sm:$0xf]
        %v3200 = vld [vmem:[%s1021 + $0xb0] sm:$0xf]
        %v3201 = vld [vmem:[%s1021 + $0xb4] sm:$0xf]
        %v3202 = vld [vmem:[%s1021 + $0xb8] sm:$0xf]
        %v3203 = vld [vmem:[%s1021 + $0xbc] sm:$0xf]
        %v3204 = vld [vmem:[%s1021 + $0xc0] sm:$0xf]
        %v3205 = vld [vmem:[%s1021 + $0xc4] sm:$0xf]
        %v3206 = vld [vmem:[%s1021 + $0xc8] sm:$0xf]
        %v3207 = vld [vmem:[%s1021 + $0xcc] sm:$0xf]
        %v3208 = vld [vmem:[%s1021 + $0xd0] sm:$0xf]
        %v3209 = vld [vmem:[%s1021 + $0xd4] sm:$0xf]
        %v3210 = vld [vmem:[%s1021 + $0xd8] sm:$0xf]
        %v3211 = vld [vmem:[%s1021 + $0xdc] sm:$0xf]
        %v3212 = vld [vmem:[%s1021 + $0xe0] sm:$0xf]
        %v3213 = vld [vmem:[%s1021 + $0xe4] sm:$0xf]
        %v3214 = vld [vmem:[%s1021 + $0xe8] sm:$0xf]
        %v3215 = vld [vmem:[%s1021 + $0xec] sm:$0xf]
        %v3216 = vld [vmem:[%s1021 + $0xf0] sm:$0xf]
        %v3217 = vld [vmem:[%s1021 + $0xf4] sm:$0xf]
        %v3218 = vld [vmem:[%s1021 + $0xf8] sm:$0xf]
        %v3219 = vld [vmem:[%s1021 + $0xfc] sm:$0xf]
        %v3220 = vpack.c.bf16 %v3152, %v3148
        %v3221 = vpack.c.bf16 %v3153, %v3149
        %v3222 = vpack.c.bf16 %v3154, %v3150
        %v3223 = vpack.c.bf16 %v3155, %v3151
        %v3288 = vunpack.c.l.b16 %v3156
        %v3289 = vunpack.c.l.b16 %v3157
        %v3290 = vunpack.c.l.b16 %v3158
        %v3291 = vunpack.c.l.b16 %v3159
        %v3292 = vunpack.c.l.b16 %v3160
        %v3293 = vunpack.c.l.b16 %v3161
        %v3294 = vunpack.c.l.b16 %v3162
        %v3295 = vunpack.c.l.b16 %v3163
        %v3296 = vunpack.c.l.b16 %v3164
        %v3297 = vunpack.c.l.b16 %v3165
        %v3298 = vunpack.c.l.b16 %v3166
        %v3299 = vunpack.c.l.b16 %v3167
        %v3300 = vunpack.c.l.b16 %v3168
        %v3301 = vunpack.c.l.b16 %v3169
        %v3302 = vunpack.c.l.b16 %v3170
        %v3303 = vunpack.c.l.b16 %v3171
        %v3304 = vunpack.c.l.b16 %v3172
        %v3305 = vunpack.c.l.b16 %v3173
        %v3306 = vunpack.c.l.b16 %v3174
        %v3307 = vunpack.c.l.b16 %v3175
        %v3308 = vunpack.c.l.b16 %v3176
        %v3309 = vunpack.c.l.b16 %v3177
        %v3310 = vunpack.c.l.b16 %v3178
        %v3311 = vunpack.c.l.b16 %v3179
        %v3312 = vunpack.c.l.b16 %v3180
        %v3313 = vunpack.c.l.b16 %v3181
        %v3314 = vunpack.c.l.b16 %v3182
        %v3315 = vunpack.c.l.b16 %v3183
        %v3316 = vunpack.c.l.b16 %v3184
        %v3317 = vunpack.c.l.b16 %v3185
        %v3318 = vunpack.c.l.b16 %v3186
        %v3319 = vunpack.c.l.b16 %v3187
        %v3320 = vunpack.c.l.b16 %v3188
        %v3321 = vunpack.c.l.b16 %v3189
        %v3322 = vunpack.c.l.b16 %v3190
        %v3323 = vunpack.c.l.b16 %v3191
        %v3324 = vunpack.c.l.b16 %v3192
        %v3325 = vunpack.c.l.b16 %v3193
        %v3326 = vunpack.c.l.b16 %v3194
        %v3327 = vunpack.c.l.b16 %v3195
        %v3328 = vunpack.c.l.b16 %v3196
        %v3329 = vunpack.c.l.b16 %v3197
        %v3330 = vunpack.c.l.b16 %v3198
        %v3331 = vunpack.c.l.b16 %v3199
        %v3332 = vunpack.c.l.b16 %v3200
        %v3333 = vunpack.c.l.b16 %v3201
        %v3334 = vunpack.c.l.b16 %v3202
        %v3335 = vunpack.c.l.b16 %v3203
        %v3336 = vunpack.c.l.b16 %v3204
        %v3337 = vunpack.c.l.b16 %v3205
        %v3338 = vunpack.c.l.b16 %v3206
        %v3339 = vunpack.c.l.b16 %v3207
        %v3340 = vunpack.c.l.b16 %v3208
        %v3341 = vunpack.c.l.b16 %v3209
        %v3342 = vunpack.c.l.b16 %v3210
        %v3343 = vunpack.c.l.b16 %v3211
        %v3344 = vunpack.c.l.b16 %v3212
        %v3345 = vunpack.c.l.b16 %v3213
        %v3346 = vunpack.c.l.b16 %v3214
        %v3347 = vunpack.c.l.b16 %v3215
        %v3348 = vunpack.c.l.b16 %v3216
        %v3349 = vunpack.c.l.b16 %v3217
        %v3350 = vunpack.c.l.b16 %v3218
        %v3351 = vunpack.c.l.b16 %v3219
        %v3352 = vpack.c.b16 %v3289, %v3288
        %v3353 = vpack.c.b16 %v3291, %v3290
        %v3354 = vpack.c.b16 %v3293, %v3292
        %v3355 = vpack.c.b16 %v3295, %v3294
        %v3356 = vpack.c.b16 %v3297, %v3296
        %v3357 = vpack.c.b16 %v3299, %v3298
        %v3358 = vpack.c.b16 %v3301, %v3300
        %v3359 = vpack.c.b16 %v3303, %v3302
        %v3360 = vpack.c.b16 %v3305, %v3304
        %v3361 = vpack.c.b16 %v3307, %v3306
        %v3362 = vpack.c.b16 %v3309, %v3308
        %v3363 = vpack.c.b16 %v3311, %v3310
        %v3364 = vpack.c.b16 %v3313, %v3312
        %v3365 = vpack.c.b16 %v3315, %v3314
        %v3366 = vpack.c.b16 %v3317, %v3316
        %v3367 = vpack.c.b16 %v3319, %v3318
        %v3368 = vpack.c.b16 %v3321, %v3320
        %v3369 = vpack.c.b16 %v3323, %v3322
        %v3370 = vpack.c.b16 %v3325, %v3324
        %v3371 = vpack.c.b16 %v3327, %v3326
        %v3372 = vpack.c.b16 %v3329, %v3328
        %v3373 = vpack.c.b16 %v3331, %v3330
        %v3374 = vpack.c.b16 %v3333, %v3332
        %v3375 = vpack.c.b16 %v3335, %v3334
        %v3376 = vpack.c.b16 %v3337, %v3336
        %v3377 = vpack.c.b16 %v3339, %v3338
        %v3378 = vpack.c.b16 %v3341, %v3340
        %v3379 = vpack.c.b16 %v3343, %v3342
        %v3380 = vpack.c.b16 %v3345, %v3344
        %v3381 = vpack.c.b16 %v3347, %v3346
        %v3382 = vpack.c.b16 %v3349, %v3348
        %v3383 = vpack.c.b16 %v3351, %v3350
        %3416 = vmatprep.subr.bf16.mxu0 0
        %3417 = vmatpush1.bf16.msra.mxu0 %v3352
        %3418 = vmatprep.subr.bf16.mxu0 0
        %3419 = vmatpush1.bf16.msra.mxu0 %v3353
        %3420 = vmatprep.subr.bf16.mxu0 0
        %3421 = vmatpush1.bf16.msra.mxu0 %v3354
        %3422 = vmatprep.subr.bf16.mxu0 0
        %3423 = vmatpush1.bf16.msra.mxu0 %v3355
        %3424 = vmatprep.subr.bf16.mxu0 0
        %3425 = vmatpush1.bf16.msra.mxu0 %v3356
        %3426 = vmatprep.subr.bf16.mxu0 0
        %3427 = vmatpush1.bf16.msra.mxu0 %v3357
        %3428 = vmatprep.subr.bf16.mxu0 0
        %3429 = vmatpush1.bf16.msra.mxu0 %v3358
        %3430 = vmatprep.subr.bf16.mxu0 0
        %3431 = vmatpush1.bf16.msra.mxu0 %v3359
        %3432 = vmatprep.subr.bf16.mxu0 0
        %3433 = vmatpush1.bf16.msra.mxu0 %v3360
        %3434 = vmatprep.subr.bf16.mxu0 0
        %3435 = vmatpush1.bf16.msra.mxu0 %v3361
        %3436 = vmatprep.subr.bf16.mxu0 0
        %3437 = vmatpush1.bf16.msra.mxu0 %v3362
        %3438 = vmatprep.subr.bf16.mxu0 0
        %3439 = vmatpush1.bf16.msra.mxu0 %v3363
        %3440 = vmatprep.subr.bf16.mxu0 0
        %3441 = vmatpush1.bf16.msra.mxu0 %v3364
        %3442 = vmatprep.subr.bf16.mxu0 0
        %3443 = vmatpush1.bf16.msra.mxu0 %v3365
        %3444 = vmatprep.subr.bf16.mxu0 0
        %3445 = vmatpush1.bf16.msra.mxu0 %v3366
        %3446 = vmatprep.subr.bf16.mxu0 0
        %3447 = vmatpush1.bf16.msra.mxu0 %v3367
        %3448 = vmatprep.mubr.bf16.mxu0 %v3221
        %3449 = vmatmul.mubr.bf16.gmra.mrb[0].mxu0 %v3220
        %v3450 = vpop.f32.mrb[0].mxu0
        %v3451 = vadd.f32 0.0, %v3450
        %v3452 = vpop.f32.mrb[0].mxu0
        %v3453 = vpop.f32.mrb[0].mxu0
        %v3454 = vadd.f32 0.0, %v3453
        %v3455 = vpop.f32.mrb[0].mxu0
        %3456 = vdwg.mxu0
        %3457 = vmatprep.subr.bf16.mxu0 0
        %3458 = vmatpush1.bf16.msra.mxu0 %v3368
        %3459 = vmatprep.subr.bf16.mxu0 0
        %3460 = vmatpush1.bf16.msra.mxu0 %v3369
        %3461 = vmatprep.subr.bf16.mxu0 0
        %3462 = vmatpush1.bf16.msra.mxu0 %v3370
        %3463 = vmatprep.subr.bf16.mxu0 0
        %3464 = vmatpush1.bf16.msra.mxu0 %v3371
        %3465 = vmatprep.subr.bf16.mxu0 0
        %3466 = vmatpush1.bf16.msra.mxu0 %v3372
        %3467 = vmatprep.subr.bf16.mxu0 0
        %3468 = vmatpush1.bf16.msra.mxu0 %v3373
        %3469 = vmatprep.subr.bf16.mxu0 0
        %3470 = vmatpush1.bf16.msra.mxu0 %v3374
        %3471 = vmatprep.subr.bf16.mxu0 0
        %3472 = vmatpush1.bf16.msra.mxu0 %v3375
        %3473 = vmatprep.subr.bf16.mxu0 0
        %3474 = vmatpush1.bf16.msra.mxu0 %v3376
        %3475 = vmatprep.subr.bf16.mxu0 0
        %3476 = vmatpush1.bf16.msra.mxu0 %v3377
        %3477 = vmatprep.subr.bf16.mxu0 0
        %3478 = vmatpush1.bf16.msra.mxu0 %v3378
        %3479 = vmatprep.subr.bf16.mxu0 0
        %3480 = vmatpush1.bf16.msra.mxu0 %v3379
        %3481 = vmatprep.subr.bf16.mxu0 0
        %3482 = vmatpush1.bf16.msra.mxu0 %v3380
        %3483 = vmatprep.subr.bf16.mxu0 0
        %3484 = vmatpush1.bf16.msra.mxu0 %v3381
        %3485 = vmatprep.subr.bf16.mxu0 0
        %3486 = vmatpush1.bf16.msra.mxu0 %v3382
        %3487 = vmatprep.subr.bf16.mxu0 0
        %3488 = vmatpush1.bf16.msra.mxu0 %v3383
        %3489 = vmatprep.mubr.bf16.mxu0 %v3223
        %3490 = vmatmul.mubr.bf16.gmra.mrb[0].mxu0 %v3222
        %v3491 = vpop.f32.mrb[0].mxu0
        %v3492 = vadd.f32 %v3451, %v3491
        %v3493 = vpop.f32.mrb[0].mxu0
        %v3494 = vpop.f32.mrb[0].mxu0
        %v3495 = vadd.f32 %v3454, %v3494
        %v3496 = vpop.f32.mrb[0].mxu0
        %3497 = vdwg.mxu0
        %v3498 = vadd.f32 %v2749, %v3492
        %v3499 = vadd.f32 %v2750, %v3495
        %v3500 = vld [vmem:[%s1029] sm:$0x1]
        %v3502 = vlaneseq
        %v3503 = vshrl.u32 %v3502, 7
        %v3504 = vsub.s32 0, %v3503
        %v3505 = vrot.slane %v3500, %v3504
        %v3507 = vadd.f32 %v3498, %v3505
        %v3508 = vadd.f32 %v3499, %v3505
        %3509 = vst [vmem:[#allocation2] sm:$0xff] %v3507
        %3510 = vst [vmem:[#allocation2 + $0x8] sm:$0xff] %v3508
        %p3511 = scmp.eq.s32.totalorder %s42, 1
        // Predicated region
        $region185: #{clip_model_forward.1} parent=111 // pred_check
          %p3512 = pneg %p3511
        $region186: #{clip_model_forward.1} parent=111 // pred_check_branch
          %3514 = sbr.rel (%p3512) target = $region188
        $region187: #{clip_model_forward.1} parent=111 // pred_region
          %v3515 = vld [vmem:[#allocation2] ss:$8 sm:$0x3]
          %v3516 = vld [vmem:[#allocation18] sm:$0x1]
          %v3517 = vld [vmem:[#allocation19] sm:$0x1]
          %vm3518 = vcmask 1041408
          %v3519 = vsel %vm3518, %v3515, 0.0
          %3520 = vadd.xlane.f32.xlu0 %v3519
          %v3521 = vpop.xlane.xlu0 %3520
          %v3522 = vmul.f32 %v3521, %v1406
          %v3523 = vsub.f32 %v3515, %v3522
          %v3524 = vmul.f32 %v3523, %v3523
          %v3525 = vsel %vm3518, %v3524, 0.0
          %3526 = vadd.xlane.f32.xlu0 %v3525
          %v3527 = vpop.xlane.xlu0 %3526
          %v3528 = vmul.f32 %v3527, %v1406
          %v3529 = vadd.f32 %v3528, 1e-05
          %v3530 = vrsqrt.pop %v3529
          %v3531 = vmul.f32 %v3523, %v3530
          %v3533 = vlaneseq
          %v3534 = vshrl.u32 %v3533, 7
          %v3535 = vsub.s32 0, %v3534
          %v3536 = vrot.slane %v3516, %v3535
          %v3538 = vmul.f32 %v3531, %v3536
          %v3540 = vlaneseq
          %v3541 = vshrl.u32 %v3540, 7
          %v3542 = vsub.s32 0, %v3541
          %v3543 = vrot.slane %v3517, %v3542
          %v3545 = vadd.f32 %v3538, %v3543
          %v3546 = vld [vmem:[#allocation21] sm:$0xf]
          %v3547 = vld [vmem:[#allocation21 + $0x4] sm:$0xf]
          %v3548 = vld [vmem:[#allocation21 + $0x8] sm:$0xf]
          %v3549 = vld [vmem:[#allocation21 + $0xc] sm:$0xf]
          %v3550 = vld [vmem:[#allocation21 + $0x10] sm:$0xf]
          %v3551 = vld [vmem:[#allocation21 + $0x14] sm:$0xf]
          %v3552 = vld [vmem:[#allocation21 + $0x18] sm:$0xf]
          %v3553 = vld [vmem:[#allocation21 + $0x1c] sm:$0xf]
          %v3554 = vld [vmem:[#allocation21 + $0x20] sm:$0xf]
          %v3555 = vld [vmem:[#allocation21 + $0x24] sm:$0xf]
          %v3556 = vld [vmem:[#allocation21 + $0x28] sm:$0xf]
          %v3557 = vld [vmem:[#allocation21 + $0x2c] sm:$0xf]
          %v3558 = vld [vmem:[#allocation21 + $0x30] sm:$0xf]
          %v3559 = vld [vmem:[#allocation21 + $0x34] sm:$0xf]
          %v3560 = vld [vmem:[#allocation21 + $0x38] sm:$0xf]
          %v3561 = vld [vmem:[#allocation21 + $0x3c] sm:$0xf]
          %v3562 = vpack.c.bf16 %v3545, %v3545
          %v3579 = vunpack.c.l.b16 %v3546
          %v3580 = vunpack.c.l.b16 %v3547
          %v3581 = vunpack.c.l.b16 %v3548
          %v3582 = vunpack.c.l.b16 %v3549
          %v3583 = vunpack.c.l.b16 %v3550
          %v3584 = vunpack.c.l.b16 %v3551
          %v3585 = vunpack.c.l.b16 %v3552
          %v3586 = vunpack.c.l.b16 %v3553
          %v3587 = vunpack.c.l.b16 %v3554
          %v3588 = vunpack.c.l.b16 %v3555
          %v3589 = vunpack.c.l.b16 %v3556
          %v3590 = vunpack.c.l.b16 %v3557
          %v3591 = vunpack.c.l.b16 %v3558
          %v3592 = vunpack.c.l.b16 %v3559
          %v3593 = vunpack.c.l.b16 %v3560
          %v3594 = vunpack.c.l.b16 %v3561
          %v3595 = vpack.c.b16 %v3580, %v3579
          %v3596 = vpack.c.b16 %v3582, %v3581
          %v3597 = vpack.c.b16 %v3584, %v3583
          %v3598 = vpack.c.b16 %v3586, %v3585
          %v3599 = vpack.c.b16 %v3588, %v3587
          %v3600 = vpack.c.b16 %v3590, %v3589
          %v3601 = vpack.c.b16 %v3592, %v3591
          %v3602 = vpack.c.b16 %v3594, %v3593
          %3611 = vmatprep.subr.bf16.mxu0 0
          %3612 = vmatpush1.bf16.msra.mxu0 %v3595
          %3613 = vmatprep.subr.bf16.mxu0 0
          %3614 = vmatpush1.bf16.msra.mxu0 %v3596
          %3615 = vmatprep.subr.bf16.mxu0 0
          %3616 = vmatpush1.bf16.msra.mxu0 %v3597
          %3617 = vmatprep.subr.bf16.mxu0 0
          %3618 = vmatpush1.bf16.msra.mxu0 %v3598
          %3619 = vmatprep.subr.bf16.mxu0 0
          %3620 = vmatpush1.bf16.msra.mxu0 %v3599
          %3621 = vmatprep.subr.bf16.mxu0 0
          %3622 = vmatpush1.bf16.msra.mxu0 %v3600
          %3623 = vmatprep.subr.bf16.mxu0 0
          %3624 = vmatpush1.bf16.msra.mxu0 %v3601
          %3625 = vmatprep.subr.bf16.mxu0 0
          %3626 = vmatpush1.bf16.msra.mxu0 %v3602
          %3627 = vmatprep.subr.bf16.mxu0 0
          %3628 = vmatpush1.bf16.msra.mxu0 0
          %3629 = vmatprep.subr.bf16.mxu0 0
          %3630 = vmatpush1.bf16.msra.mxu0 0
          %3631 = vmatprep.subr.bf16.mxu0 0
          %3632 = vmatpush1.bf16.msra.mxu0 0
          %3633 = vmatprep.subr.bf16.mxu0 0
          %3634 = vmatpush1.bf16.msra.mxu0 0
          %3635 = vmatprep.subr.bf16.mxu0 0
          %3636 = vmatpush1.bf16.msra.mxu0 0
          %3637 = vmatprep.subr.bf16.mxu0 0
          %3638 = vmatpush1.bf16.msra.mxu0 0
          %3639 = vmatprep.subr.bf16.mxu0 0
          %3640 = vmatpush1.bf16.msra.mxu0 0
          %3641 = vmatprep.subr.bf16.mxu0 0
          %3642 = vmatpush1.bf16.msra.mxu0 0
          %3643 = vmatprep.mubr.bf16.mxu0 0
          %3644 = vmatmul.mubr.bf16.gmra.mrb[0].mxu0 %v3562
          %v3645 = vpop.f32.mrb[0].mxu0
          %v3646 = vadd.f32 0.0, %v3645
          %v3647 = vpop.f32.mrb[0].mxu0
          %v3648 = vpop.f32.mrb[0].mxu0
          %v3649 = vpop.f32.mrb[0].mxu0
          %3650 = vdwg.mxu0
          %3651 = vst [vmem:[#allocation25] sm:$0x3] %v3646
          %v3652 = vld [vmem:[#allocation22] sm:$0xff]
          %v3653 = vld [vmem:[#allocation22 + $0x8] sm:$0xff]
          %v3654 = vld [vmem:[#allocation22 + $0x10] sm:$0xff]
          %v3655 = vld [vmem:[#allocation22 + $0x18] sm:$0xff]
          %v3656 = vld [vmem:[#allocation22 + $0x20] sm:$0xff]
          %v3657 = vld [vmem:[#allocation22 + $0x28] sm:$0xff]
          %v3658 = vld [vmem:[#allocation22 + $0x30] sm:$0xff]
          %v3659 = vld [vmem:[#allocation22 + $0x38] sm:$0xff]
          %v3660 = vld [vmem:[#allocation22 + $0x40] sm:$0xff]
          %v3661 = vld [vmem:[#allocation22 + $0x48] sm:$0xff]
          %v3662 = vld [vmem:[#allocation22 + $0x50] sm:$0xff]
          %v3663 = vld [vmem:[#allocation22 + $0x58] sm:$0xff]
          %v3664 = vld [vmem:[#allocation22 + $0x60] sm:$0xff]
          %v3665 = vld [vmem:[#allocation22 + $0x68] sm:$0xff]
          %v3666 = vld [vmem:[#allocation22 + $0x70] sm:$0xff]
          %v3667 = vld [vmem:[#allocation22 + $0x78] sm:$0xff]
          %v3668 = vpack.c.bf16 %v3646, %v3646
          %v3669 = vld [vmem:[#allocation24] sm:$0x3]
          %v3671 = vlaneseq
          %v3672 = vshrl.u32 %v3671, 7
          %v3673 = vsub.s32 0, %v3672
          %v3674 = vrot.slane %v3669, %v3673
          %v3675 = vlaneseq
          %v3676 = vshrl.u32 %v3675, 7
          %v3677 = vsub.s32 1, %v3676
          %v3678 = vrot.slane %v3669, %v3677
          %v3697 = vunpack.c.l.b16 %v3652
          %v3698 = vunpack.c.h.b16 %v3652
          %v3699 = vunpack.c.l.b16 %v3653
          %v3700 = vunpack.c.h.b16 %v3653
          %v3701 = vunpack.c.l.b16 %v3654
          %v3702 = vunpack.c.h.b16 %v3654
          %v3703 = vunpack.c.l.b16 %v3655
          %v3704 = vunpack.c.h.b16 %v3655
          %v3705 = vunpack.c.l.b16 %v3656
          %v3706 = vunpack.c.h.b16 %v3656
          %v3707 = vunpack.c.l.b16 %v3657
          %v3708 = vunpack.c.h.b16 %v3657
          %v3709 = vunpack.c.l.b16 %v3658
          %v3710 = vunpack.c.h.b16 %v3658
          %v3711 = vunpack.c.l.b16 %v3659
          %v3712 = vunpack.c.h.b16 %v3659
          %v3713 = vunpack.c.l.b16 %v3660
          %v3714 = vunpack.c.h.b16 %v3660
          %v3715 = vunpack.c.l.b16 %v3661
          %v3716 = vunpack.c.h.b16 %v3661
          %v3717 = vunpack.c.l.b16 %v3662
          %v3718 = vunpack.c.h.b16 %v3662
          %v3719 = vunpack.c.l.b16 %v3663
          %v3720 = vunpack.c.h.b16 %v3663
          %v3721 = vunpack.c.l.b16 %v3664
          %v3722 = vunpack.c.h.b16 %v3664
          %v3723 = vunpack.c.l.b16 %v3665
          %v3724 = vunpack.c.h.b16 %v3665
          %v3725 = vunpack.c.l.b16 %v3666
          %v3726 = vunpack.c.h.b16 %v3666
          %v3727 = vunpack.c.l.b16 %v3667
          %v3728 = vunpack.c.h.b16 %v3667
          %v3729 = vpack.c.b16 %v3699, %v3697
          %v3730 = vpack.c.b16 %v3700, %v3698
          %v3731 = vpack.c.b16 %v3703, %v3701
          %v3732 = vpack.c.b16 %v3704, %v3702
          %v3733 = vpack.c.b16 %v3707, %v3705
          %v3734 = vpack.c.b16 %v3708, %v3706
          %v3735 = vpack.c.b16 %v3711, %v3709
          %v3736 = vpack.c.b16 %v3712, %v3710
          %v3737 = vpack.c.b16 %v3715, %v3713
          %v3738 = vpack.c.b16 %v3716, %v3714
          %v3739 = vpack.c.b16 %v3719, %v3717
          %v3740 = vpack.c.b16 %v3720, %v3718
          %v3741 = vpack.c.b16 %v3723, %v3721
          %v3742 = vpack.c.b16 %v3724, %v3722
          %v3743 = vpack.c.b16 %v3727, %v3725
          %v3744 = vpack.c.b16 %v3728, %v3726
          %3761 = vmatprep.subr.bf16.mxu0 %v3730
          %3762 = vmatpush1.bf16.msra.mxu0 %v3729
          %3763 = vmatprep.subr.bf16.mxu0 %v3732
          %3764 = vmatpush1.bf16.msra.mxu0 %v3731
          %3765 = vmatprep.subr.bf16.mxu0 %v3734
          %3766 = vmatpush1.bf16.msra.mxu0 %v3733
          %3767 = vmatprep.subr.bf16.mxu0 %v3736
          %3768 = vmatpush1.bf16.msra.mxu0 %v3735
          %3769 = vmatprep.subr.bf16.mxu0 %v3738
          %3770 = vmatpush1.bf16.msra.mxu0 %v3737
          %3771 = vmatprep.subr.bf16.mxu0 %v3740
          %3772 = vmatpush1.bf16.msra.mxu0 %v3739
          %3773 = vmatprep.subr.bf16.mxu0 %v3742
          %3774 = vmatpush1.bf16.msra.mxu0 %v3741
          %3775 = vmatprep.subr.bf16.mxu0 %v3744
          %3776 = vmatpush1.bf16.msra.mxu0 %v3743
          %3777 = vmatprep.subr.bf16.mxu0 0
          %3778 = vmatpush1.bf16.msra.mxu0 0
          %3779 = vmatprep.subr.bf16.mxu0 0
          %3780 = vmatpush1.bf16.msra.mxu0 0
          %3781 = vmatprep.subr.bf16.mxu0 0
          %3782 = vmatpush1.bf16.msra.mxu0 0
          %3783 = vmatprep.subr.bf16.mxu0 0
          %3784 = vmatpush1.bf16.msra.mxu0 0
          %3785 = vmatprep.subr.bf16.mxu0 0
          %3786 = vmatpush1.bf16.msra.mxu0 0
          %3787 = vmatprep.subr.bf16.mxu0 0
          %3788 = vmatpush1.bf16.msra.mxu0 0
          %3789 = vmatprep.subr.bf16.mxu0 0
          %3790 = vmatpush1.bf16.msra.mxu0 0
          %3791 = vmatprep.subr.bf16.mxu0 0
          %3792 = vmatpush1.bf16.msra.mxu0 0
          %3793 = vmatprep.mubr.bf16.mxu0 0
          %3794 = vmatmul.mubr.bf16.gmra.mrb[0].mxu0 %v3668
          %v3795 = vpop.f32.mrb[0].mxu0
          %v3796 = vadd.f32 %v3674, %v3795
          %v3797 = vpop.f32.mrb[0].mxu0
          %v3798 = vadd.f32 %v3678, %v3797
          %v3799 = vpop.f32.mrb[0].mxu0
          %v3800 = vpop.f32.mrb[0].mxu0
          %3801 = vdwg.mxu0
          %v3804 = vcombine.low %v3796, %v3798
          %v3806 = vunpack.c.l.s4 1983009808
          %v3807 = vunpack.c.0.s8 %v3806
          %v3808 = vlaneseq
          %v3809 = vshrl.u32 %v3808, 7
          %v3810 = vsub.s32 %v3807, %v3809
          %v3811 = vrot.slane %v3804, %v3810
          %3813 = vst [vmem:[#allocation26] sm:$0xf] %v3811
        $region188: #{clip_model_forward.1} parent=111 // pred_fallthru
          _
        // Predicated region
        $region189: #{clip_model_forward.1} parent=111 // pred_check
          %p3814 = pneg %p598
        $region190: #{clip_model_forward.1} parent=111 // pred_check_branch
          %3816 = sbr.rel (%p3814) target = $region192
        $region191: #{clip_model_forward.1} parent=111 // pred_region
          %s3818 = ssub.s32 32, 32
          %3819 = vsyncadd [#allocation5], %s3818
          %s3821 = sshll.u32 [#allocation25], 4
          %s3822 = int_to_ptr.vmem [resolvable:$true] %s3821
          %3824 = dma.vmem_to_hbm [thread:$0]  %s3822, 32, %s23, [#allocation5]
        $region192: #{clip_model_forward.1} parent=111 // pred_fallthru
          _
        // Predicated region
        $region193: #{clip_model_forward.1} parent=111 // pred_check
          %p3825 = pneg %p619
        $region194: #{clip_model_forward.1} parent=111 // pred_check_branch
          %3827 = sbr.rel (%p3825) target = $region196
        $region195: #{clip_model_forward.1} parent=111 // pred_region
          %s3829 = ssub.s32 64, 64
          %3830 = vsyncadd [#allocation27], %s3829
          %s3832 = sshll.u32 [#allocation26], 4
          %s3833 = int_to_ptr.vmem [resolvable:$true] %s3832
          %3835 = dma.vmem_to_hbm [thread:$0]  %s3833, 64, %s24, [#allocation27]
        $region196: #{clip_model_forward.1} parent=111 // pred_fallthru
          _
        // Predicated region
        $region197: #{clip_model_forward.1} parent=111 // pred_check
          %p3836 = pneg %p598
        $region198: #{clip_model_forward.1} parent=111 // pred_check_branch
          %3838 = sbr.rel (%p3836) target = $region200
        $region199: #{clip_model_forward.1} parent=111 // pred_region
          %3839 = dma.done [#allocation5], 32
        $region200: #{clip_model_forward.1} parent=111 // pred_fallthru
          _
        // Predicated region
        $region201: #{clip_model_forward.1} parent=111 // pred_check
          %p3840 = pneg %p619
        $region202: #{clip_model_forward.1} parent=111 // pred_check_branch
          %3842 = sbr.rel (%p3840) target = $region204
        $region203: #{clip_model_forward.1} parent=111 // pred_region
          %3843 = dma.done [#allocation27], 64
        $region204: #{clip_model_forward.1} parent=111 // pred_fallthru
          _
      $region112: #{clip_model_forward.1} parent=5 // pred_fallthru
        _
      %p3844 = scmp.le.s32.totalorder 2, %s37
      // Predicated region
      $region205: #{clip_model_forward.1} parent=5 // pred_check
        %p3845 = pneg %p3844
      $region206: #{clip_model_forward.1} parent=5 // pred_check_branch
        %3847 = sbr.rel (%p3845) target = $region208
      $region207: #{clip_model_forward.1} parent=5 // pred_region
        %s3848 = ssub.s32 %s37, 2
      $region208: #{clip_model_forward.1} parent=5 // pred_fallthru
        _
    $region6: #{clip_model_forward.1} parent=1 // loop_footer
      %s41 = sadd.s32 1, %s37
    $region7: #{clip_model_forward.1} parent=1 // loop_footer_branch
      %36 = sbr.rel target = $region3
    $region8: #{clip_model_forward.1} parent=1 // loop_exit
      _
    %3849 = vsyncpa [#allocation4], 1
    %s3850 = scalar_lea.sflag [#allocation4], 1
    %3851 = vsyncpa %s3850, 1
    %3852 = vsyncpa [#allocation7], 1
    %3853 = vsyncpa [#allocation20], 1
    %3854 = vsyncpa [#allocation23], 1
    %3855 = vsyncpa [#allocation5], 1
    %s3856 = scalar_lea.sflag [#allocation5], 1
    %3857 = vsyncpa %s3856, 1
    %3858 = vsyncpa [#allocation27], 1

</llo_original>
